<compile_context>
chip_gen: v5e
topology: v5e:2x2
jax: 0.10.0
libtpu: 0.0.40
codegen_flags: <defaults>
</compile_context>

<pallas_src>
import functools
import math

import jax
import jax.numpy as jnp
from jax.experimental import pallas as pl
from jax.experimental.pallas import tpu as pltpu

F32_EPS = 1.1920929e-07           # torch.finfo(float32).eps, F.rms_norm default
VMEM_LIMIT = 64 * 1024 * 1024     # explicit scoped-VMEM cap (v5e default is 16MiB)


# ----------------------------------------------------------------------------
# tiling helper
# ----------------------------------------------------------------------------
def _divisor_tile(n, pref, align):
    """Largest aligned tile <= pref that divides n; else the full dim.

    Never returns a tile that is neither a multiple of `align` nor the full
    dimension (avoids masked partial stores / lowering failures).
    """
    if n <= pref:
        return n
    t = (min(pref, n) // align) * align
    while t >= align:
        if n % t == 0:
            return t
        t -= align
    return n


# ----------------------------------------------------------------------------
# rms_norm (standalone, for the post-embedding norm)
# ----------------------------------------------------------------------------
def _rmsnorm_kernel(x_ref, o_ref, *, eps):
    x = x_ref[...].astype(jnp.float32)
    ms = jnp.mean(x * x, axis=-1, keepdims=True)
    o_ref[...] = (x * jax.lax.rsqrt(ms + eps)).astype(o_ref.dtype)


def rmsnorm(x2d, tm_pref=256):
    M, D = x2d.shape
    tm = _divisor_tile(M, tm_pref, 8)
    return pl.pallas_call(
        functools.partial(_rmsnorm_kernel, eps=F32_EPS),
        out_shape=jax.ShapeDtypeStruct((M, D), jnp.float32),
        grid=(M // tm,),
        in_specs=[pl.BlockSpec((tm, D), lambda i: (i, 0))],
        out_specs=pl.BlockSpec((tm, D), lambda i: (i, 0)),
        compiler_params=pltpu.CompilerParams(dimension_semantics=("parallel",)),
    )(x2d)


# ----------------------------------------------------------------------------
# fused (scale * rms_norm(x)) @ W    — two variants
# ----------------------------------------------------------------------------
def _rmsnorm_matmul_cached_kernel(x_ref, w_ref, o_ref, h_ref, *, eps, scale):
    # normalized bf16 hidden is computed once per row tile (j==0) and cached
    # in VMEM scratch; reused for every N tile (j is "arbitrary" -> same core).
    @pl.when(pl.program_id(1) == 0)
    def _():
        x = x_ref[...].astype(jnp.float32)
        ms = jnp.mean(x * x, axis=-1, keepdims=True)
        h_ref[...] = ((scale * x) * jax.lax.rsqrt(ms + eps)).astype(jnp.bfloat16)

    o_ref[...] = jnp.dot(h_ref[...], w_ref[...],
                         preferred_element_type=jnp.float32).astype(o_ref.dtype)


def _rmsnorm_matmul_kernel(x_ref, w_ref, o_ref, *, eps, scale):
    # un-cached variant: both grid axes parallel (used for the thin lm_head,
    # which is pure HBM weight streaming — norm on 2 rows is noise).
    x = x_ref[...].astype(jnp.float32)
    ms = jnp.mean(x * x, axis=-1, keepdims=True)
    h = ((scale * x) * jax.lax.rsqrt(ms + eps)).astype(jnp.bfloat16)
    o_ref[...] = jnp.dot(h, w_ref[...],
                         preferred_element_type=jnp.float32).astype(o_ref.dtype)


def rmsnorm_matmul(x2d, w, scale=1.0, *, out_dtype=jnp.float32, cache_norm=True,
                   tm_pref=256, tn_pref=512):
    M, K = x2d.shape
    K2, N = w.shape
    assert K == K2
    tm = _divisor_tile(M, tm_pref, 8)
    tn = _divisor_tile(N, tn_pref, 128)
    cost = pl.CostEstimate(flops=2 * M * K * N, transcendentals=0,
                           bytes_accessed=4 * M * K + 2 * K * N + 2 * M * N)
    if cache_norm:
        return pl.pallas_call(
            functools.partial(_rmsnorm_matmul_cached_kernel,
                              eps=F32_EPS, scale=float(scale)),
            out_shape=jax.ShapeDtypeStruct((M, N), out_dtype),
            grid=(M // tm, N // tn),
            in_specs=[pl.BlockSpec((tm, K), lambda i, j: (i, 0)),
                      pl.BlockSpec((K, tn), lambda i, j: (0, j))],
            out_specs=pl.BlockSpec((tm, tn), lambda i, j: (i, j)),
            scratch_shapes=[pltpu.VMEM((tm, K), jnp.bfloat16)],
            compiler_params=pltpu.CompilerParams(
                dimension_semantics=("parallel", "arbitrary"),
                vmem_limit_bytes=VMEM_LIMIT),
            cost_estimate=cost,
        )(x2d, w)
    return pl.pallas_call(
        functools.partial(_rmsnorm_matmul_kernel, eps=F32_EPS, scale=float(scale)),
        out_shape=jax.ShapeDtypeStruct((M, N), out_dtype),
        grid=(M // tm, N // tn),
        in_specs=[pl.BlockSpec((tm, K), lambda i, j: (i, 0)),
                  pl.BlockSpec((K, tn), lambda i, j: (0, j))],
        out_specs=pl.BlockSpec((tm, tn), lambda i, j: (i, j)),
        compiler_params=pltpu.CompilerParams(
            dimension_semantics=("parallel", "parallel"),
            vmem_limit_bytes=VMEM_LIMIT),
        cost_estimate=cost,
    )(x2d, w)


# ----------------------------------------------------------------------------
# dual attention: softmax branch + linear branch, grid = (B, heads, q-tiles)
# ----------------------------------------------------------------------------
def _dual_attn_kernel(kv_ref, q_ref, ya_ref, yl_ref):
    # kv_ref: (1, 1, 4, L, hd) bf16  -> [k, v, kl, vl]
    # q_ref : (1, 1, 2, tq, hd) bf16 -> [q, ql]
    L, hd = kv_ref.shape[3], kv_ref.shape[4]
    tq = q_ref.shape[3]
    iq = pl.program_id(2)

    k = kv_ref[0, 0, 0]
    v = kv_ref[0, 0, 1]
    kl = kv_ref[0, 0, 2]
    vl = kv_ref[0, 0, 3]
    q = q_ref[0, 0, 0]
    ql = q_ref[0, 0, 1]

    row = iq * tq + jax.lax.broadcasted_iota(jnp.int32, (tq, L), 0)
    col = jax.lax.broadcasted_iota(jnp.int32, (tq, L), 1)
    causal = col <= row

    dn = (((1,), (1,)), ((), ()))   # contract hd of q with hd of k (no .T)

    # --- causal softmax attention (MixerAttention branch; RoPE omitted) ---
    s = jax.lax.dot_general(q, k, dn, preferred_element_type=jnp.float32)
    s = s * (1.0 / math.sqrt(hd))
    s = jnp.where(causal, s, -1e30)
    m = jnp.max(s, axis=-1, keepdims=True)
    p = jnp.exp(s - m)
    denom = jnp.sum(p, axis=-1, keepdims=True)        # >= 1 (diag unmasked)
    ya = jnp.dot(p.astype(jnp.bfloat16), v,
                 preferred_element_type=jnp.float32) / denom
    ya_ref[0, 0] = ya.astype(ya_ref.dtype)

    # --- causal linear attention (simplified MixerMamba2 branch) ---
    sl = jax.lax.dot_general(ql, kl, dn, preferred_element_type=jnp.float32)
    plin = jnp.where(causal, sl * (1.0 / L), 0.0)
    yl = jnp.dot(plin.astype(jnp.bfloat16), vl, preferred_element_type=jnp.float32)
    yl_ref[0, 0] = yl.astype(yl_ref.dtype)


def dual_attention(kv_t, q_t, tq_pref=256):
    """kv_t: (B, H, 4, L, hd) bf16 [k,v,kl,vl]; q_t: (B, H, 2, L, hd) bf16 [q,ql].
    Returns per-head y_attn, y_lin as (B, H, L, hd) bf16."""
    B, H, four, L, hd = kv_t.shape
    assert four == 4 and q_t.shape == (B, H, 2, L, hd)
    tq = _divisor_tile(L, tq_pref, 8)
    out_sds = jax.ShapeDtypeStruct((B, H, L, hd), jnp.bfloat16)
    return pl.pallas_call(
        _dual_attn_kernel,
        out_shape=(out_sds, out_sds),
        grid=(B, H, L // tq),
        in_specs=[
            # K/V block index is constant across iq (innermost) -> stays resident
            pl.BlockSpec((1, 1, 4, L, hd), lambda b, h, iq: (b, h, 0, 0, 0)),
            pl.BlockSpec((1, 1, 2, tq, hd), lambda b, h, iq: (b, h, 0, iq, 0)),
        ],
        out_specs=(pl.BlockSpec((1, 1, tq, hd), lambda b, h, iq: (b, h, iq, 0)),
                   pl.BlockSpec((1, 1, tq, hd), lambda b, h, iq: (b, h, iq, 0))),
        compiler_params=pltpu.CompilerParams(
            dimension_semantics=("parallel", "parallel", "parallel"),
            vmem_limit_bytes=VMEM_LIMIT),
    )(kv_t, q_t)


# ----------------------------------------------------------------------------
# fused epilogue: x + out_proj((rms_norm(y_attn)*attn_norm + y_lin) / 2)
# ----------------------------------------------------------------------------
def _attn_out_kernel(x_ref, ya_ref, yl_ref, norm_ref, w_ref, o_ref, *, eps):
    H, T, hd = ya_ref.shape[1], ya_ref.shape[2], ya_ref.shape[3]
    Ed = H * hd

    # mean of squares over the full expanded dim (all heads) per query row
    ssq = jnp.zeros((T, 1), jnp.float32)
    for h in range(H):
        yah = ya_ref[0, h].astype(jnp.float32)
        ssq = ssq + jnp.sum(yah * yah, axis=-1, keepdims=True)
    inv = jax.lax.rsqrt(ssq * (1.0 / Ed) + eps)        # (T, 1)

    acc = x_ref[0].astype(jnp.float32)                 # (T, td) residual
    for h in range(H):                                 # aligned per-head slabs
        nrm = norm_ref[h:h + 1, :]                     # (1, hd)
        yh = (ya_ref[0, h].astype(jnp.float32) * inv * nrm
              + yl_ref[0, h].astype(jnp.float32))
        acc = acc + jnp.dot((0.5 * yh).astype(jnp.bfloat16), w_ref[h],
                            preferred_element_type=jnp.float32)
    o_ref[0] = acc.astype(o_ref.dtype)


def attn_out_residual(x3, ya, yl, attn_norm, w_out, tq_pref=256, td_pref=512):
    """x3: (B, L, d) f32; ya/yl: (B, H, L, hd) bf16; attn_norm: (H, hd) f32;
    w_out: (H, hd, d) bf16.  Returns updated residual (B, L, d) f32."""
    B, L, d = x3.shape
    _, H, _, hd = ya.shape
    tq = _divisor_tile(L, tq_pref, 8)
    td = _divisor_tile(d, td_pref, 128)
    return pl.pallas_call(
        functools.partial(_attn_out_kernel, eps=F32_EPS),
        out_shape=jax.ShapeDtypeStruct((B, L, d), jnp.float32),
        grid=(B, L // tq, d // td),
        in_specs=[
            pl.BlockSpec((1, tq, td), lambda b, i, j: (b, i, j)),
            pl.BlockSpec((1, H, tq, hd), lambda b, i, j: (b, 0, i, 0)),
            pl.BlockSpec((1, H, tq, hd), lambda b, i, j: (b, 0, i, 0)),
            pl.BlockSpec((H, hd), lambda b, i, j: (0, 0)),
            pl.BlockSpec((H, hd, td), lambda b, i, j: (0, 0, j)),
        ],
        out_specs=pl.BlockSpec((1, tq, td), lambda b, i, j: (b, i, j)),
        input_output_aliases={0: 0},                   # residual updated in place
        compiler_params=pltpu.CompilerParams(
            dimension_semantics=("parallel", "parallel", "parallel"),
            vmem_limit_bytes=VMEM_LIMIT),
    )(x3, ya, yl, attn_norm, w_out)


# ----------------------------------------------------------------------------
# fused rmsnorm + MLP + residual (hidden dim = reduction grid axis)
# ----------------------------------------------------------------------------
def _rmsnorm_mlp_kernel(x_ref, w1_ref, w2_ref, o_ref, h_ref, acc_ref, *, eps, scale):
    @pl.when(pl.program_id(1) == 0)
    def _():
        x = x_ref[...].astype(jnp.float32)
        ms = jnp.mean(x * x, axis=-1, keepdims=True)
        h_ref[...] = ((scale * x) * jax.lax.rsqrt(ms + eps)).astype(jnp.bfloat16)
        acc_ref[...] = jnp.zeros_like(acc_ref)

    a = jnp.dot(h_ref[...], w1_ref[...], preferred_element_type=jnp.float32)
    a = jnp.maximum(a, 0.0)
    a = a * a                                          # squared-ReLU (TODO: MLP spec)
    acc_ref[...] += jnp.dot(a.astype(jnp.bfloat16), w2_ref[...],
                            preferred_element_type=jnp.float32)

    @pl.when(pl.program_id(1) == pl.num_programs(1) - 1)
    def _():
        o_ref[...] = (x_ref[...].astype(jnp.float32) + acc_ref[...]).astype(o_ref.dtype)


def rmsnorm_mlp(x2d, w1, w2, scale, tm_pref=256, th_pref=512):
    M, D = x2d.shape
    D2, Hm = w1.shape
    Hm2, D3 = w2.shape
    assert D == D2 == D3 and Hm == Hm2
    tm = _divisor_tile(M, tm_pref, 8)
    th = _divisor_tile(Hm, th_pref, 128)
    return pl.pallas_call(
        functools.partial(_rmsnorm_mlp_kernel, eps=F32_EPS, scale=float(scale)),
        out_shape=jax.ShapeDtypeStruct((M, D), jnp.float32),
        grid=(M // tm, Hm // th),
        in_specs=[pl.BlockSpec((tm, D), lambda i, k: (i, 0)),
                  pl.BlockSpec((D, th), lambda i, k: (0, k)),
                  pl.BlockSpec((th, D), lambda i, k: (k, 0))],
        out_specs=pl.BlockSpec((tm, D), lambda i, k: (i, 0)),
        scratch_shapes=[pltpu.VMEM((tm, D), jnp.bfloat16),   # cached normalized h
                        pltpu.VMEM((tm, D), jnp.float32)],   # f32 accumulator
        input_output_aliases={0: 0},
        compiler_params=pltpu.CompilerParams(
            dimension_semantics=("parallel", "arbitrary"),
            vmem_limit_bytes=VMEM_LIMIT),
        cost_estimate=pl.CostEstimate(flops=4 * M * D * Hm, transcendentals=0,
                                      bytes_accessed=8 * M * D + 4 * D * Hm),
    )(x2d, w1, w2)


# ----------------------------------------------------------------------------
# Block / Dragon wiring (embedding gather + layout transposes are XLA glue)
# ----------------------------------------------------------------------------
def block_forward(xf, p, lns, n_heads, B, L):
    M, d = xf.shape
    _, hd = p["attn_norm"].shape
    Ed = n_heads * hd

    # fused: hidden = lns * rms_norm(x); qkv = hidden @ [Wk|Wv|Wkl|Wvl|Wq|Wql]
    qkv = rmsnorm_matmul(xf, p["w_qkv"], scale=lns,
                         out_dtype=jnp.bfloat16, cache_norm=True)   # (M, 6*Ed) bf16

    # layout plumbing (XLA glue): head-major views so the attention kernel gets
    # contiguous, aligned (L, hd) per-head tiles with heads on the grid.
    qkv5 = qkv.reshape(B, L, 6, n_heads, hd)
    kv_t = jnp.transpose(qkv5[:, :, 0:4], (0, 3, 2, 1, 4))   # (B,H,4,L,hd) k,v,kl,vl
    q_t = jnp.transpose(qkv5[:, :, 4:6], (0, 3, 2, 1, 4))    # (B,H,2,L,hd) q,ql

    ya, yl = dual_attention(kv_t, q_t)                        # (B,H,L,hd) bf16 each

    # x = x + out_proj((rms_norm(y_attn, attn_norm) + y_lin) / 2)   (fused)
    x3 = attn_out_residual(xf.reshape(B, L, d), ya, yl,
                           p["attn_norm"], p["out_proj"])
    xf = x3.reshape(M, d)

    # x = x + MLP(lns * rms_norm(x))
    xf = rmsnorm_mlp(xf, p["mlp_w1"], p["mlp_w2"], scale=lns)
    return xf


def dragon_forward(idx, params, n_heads):
    B, L = idx.shape
    x = params["wte"][idx]                      # embedding gather (XLA glue)
    d = x.shape[-1]
    M = B * L

    xf = rmsnorm(x.reshape(M, d))               # post-embedding rms_norm
    for i, bp in enumerate(params["blocks"]):
        lns = 1.0 / math.sqrt(i + 1)            # layer_norm_scaling
        xf = block_forward(xf, bp, lns, n_heads, B, L)

    # final rms_norm fused into the lm_head matmul, applied only to the
    # last-token rows; vocab streamed with lane-dense tiles (pure HBM bound).
    last = xf.reshape(B, L, d)[:, -1, :]        # (B, d)
    logits = rmsnorm_matmul(last, params["lm_head"], scale=1.0,
                            out_dtype=jnp.float32, cache_norm=False,
                            tm_pref=256, tn_pref=1024)
    return logits[:, None, :]                   # (B, 1, vocab) f32


# ----------------------------------------------------------------------------
# Deterministic parameter construction (weights bf16, residual stream f32)
# ----------------------------------------------------------------------------
def make_params(key, *, vocab, d_model, expand, n_heads, n_layers, mlp_mult=4):
    Ed = expand * d_model
    hd = Ed // n_heads
    keys = jax.random.split(key, 2 + n_layers)

    def w(k, shape, scale=0.02):
        return (scale * jax.random.normal(k, shape)).astype(jnp.float32)

    blocks = []
    for i in range(n_layers):
        ks = jax.random.split(keys[2 + i], 9)
        # six fused projections; column order [Wk|Wv|Wkl|Wvl|Wq|Wql] is an
        # implementation detail (six independent Linear(d_model, Ed) weights).
        w_qkv = jnp.concatenate([w(ks[j], (d_model, Ed)) for j in range(6)], axis=1)
        blocks.append(dict(
            w_qkv=w_qkv.astype(jnp.bfloat16),
            attn_norm=jnp.ones((n_heads, hd), jnp.float32),
            # NOTE: reference zero-inits out_proj; non-zero here so the attention
            # path is actually exercised.  Stored per-head: (n_heads, hd, d_model).
            out_proj=w(ks[6], (n_heads, hd, d_model)).astype(jnp.bfloat16),
            mlp_w1=w(ks[7], (d_model, mlp_mult * d_model)).astype(jnp.bfloat16),
            mlp_w2=w(ks[8], (mlp_mult * d_model, d_model)).astype(jnp.bfloat16),
        ))
    return dict(
        wte=w(keys[0], (vocab, d_model)),
        lm_head=w(keys[1], (d_model, vocab)).astype(jnp.bfloat16),
        blocks=blocks,
    )


if __name__ == "__main__":
    B, L = 2, 16
    vocab, d_model, expand, n_heads, n_layers = 128, 32, 2, 2, 2

    key = jax.random.PRNGKey(0)
    k_param, k_idx = jax.random.split(key)
    params = make_params(k_param, vocab=vocab, d_model=d_model,
                         expand=expand, n_heads=n_heads, n_layers=n_layers)
    idx = jax.random.randint(k_idx, (B, L), 0, vocab, dtype=jnp.int32)

    fwd = jax.jit(dragon_forward, static_argnums=(2,))
    logits = jax.block_until_ready(fwd(idx, params, n_heads))

    assert logits.shape == (B, 1, vocab) and logits.dtype == jnp.float32
    assert bool(jnp.all(jnp.isfinite(logits)))
    print("KERNEL_OK")
</pallas_src>

<mosaic_0001>
module attributes {stable_mosaic.version = 11 : i64} {
  func.func @_rmsnorm_matmul_cached_kernel(%arg0: i32, %arg1: i32, %arg2: memref<32x32xf32, #tpu.memory_space<vmem>>, %arg3: memref<32x384xbf16, #tpu.memory_space<vmem>>, %arg4: memref<32x384xbf16, #tpu.memory_space<vmem>>, %arg5: memref<32x32xbf16, #tpu.memory_space<vmem>>) attributes {dimension_semantics = [#tpu.dimension_semantics<parallel>, #tpu.dimension_semantics<arbitrary>], iteration_bounds = array<i64: 1, 1>, scalar_prefetch = 0 : i64, scratch_operands = 1 : i64, tpu.core_type = #tpu.core_type<tc>, window_params = [{transform_indices = @transform_0, window_bounds = array<i64: 32, 32>}, {transform_indices = @transform_1, window_bounds = array<i64: 32, 384>}, {transform_indices = @transform_2, window_bounds = array<i64: 32, 384>}]} {
    %c0_i32 = arith.constant 0 : i32
    %0 = arith.cmpi eq, %arg1, %c0_i32 : i32
    %1 = arith.extui %0 : i1 to i32
    %c0_i32_0 = arith.constant 0 : i32
    %2 = arith.cmpi ne, %1, %c0_i32_0 : i32
    scf.if %2 {
      %c0_6 = arith.constant 0 : index
      %c0_7 = arith.constant 0 : index
      %8 = vector.load %arg2[%c0_6, %c0_7] : memref<32x32xf32, #tpu.memory_space<vmem>>, vector<32x32xf32>
      %9 = arith.mulf %8, %8 : vector<32x32xf32>
      %cst_8 = arith.constant dense<0.000000e+00> : vector<32xf32>
      %10 = vector.multi_reduction <add>, %9, %cst_8 [1] : vector<32x32xf32> to vector<32xf32>
      %11 = vector.shape_cast %10 : vector<32xf32> to vector<32x1xf32>
      %cst_9 = arith.constant 3.200000e+01 : f32
      %12 = vector.broadcast %cst_9 : f32 to vector<32x1xf32>
      %13 = arith.divf %11, %12 : vector<32x1xf32>
      %cst_10 = arith.constant 1.000000e+00 : f32
      %14 = vector.broadcast %cst_10 : f32 to vector<32x32xf32>
      %15 = arith.mulf %14, %8 : vector<32x32xf32>
      %cst_11 = arith.constant 1.1920929E-7 : f32
      %16 = vector.broadcast %cst_11 : f32 to vector<32x1xf32>
      %17 = arith.addf %13, %16 : vector<32x1xf32>
      %18 = math.rsqrt %17 : vector<32x1xf32>
      %19 = vector.broadcast %18 : vector<32x1xf32> to vector<32x32xf32>
      %20 = arith.mulf %15, %19 : vector<32x32xf32>
      %21 = arith.truncf %20 : vector<32x32xf32> to vector<32x32xbf16>
      %c0_12 = arith.constant 0 : index
      %c0_13 = arith.constant 0 : index
      %22 = vector.load %arg5[%c0_12, %c0_13] : memref<32x32xbf16, #tpu.memory_space<vmem>>, vector<32x32xbf16>
      tpu.vector_store %arg5[%c0_12, %c0_13], %21 {strides = array<i32>} : memref<32x32xbf16, #tpu.memory_space<vmem>>, vector<32x32xbf16>,
    } else {
    }
    %c0 = arith.constant 0 : index
    %c0_1 = arith.constant 0 : index
    %3 = vector.load %arg5[%c0, %c0_1] : memref<32x32xbf16, #tpu.memory_space<vmem>>, vector<32x32xbf16>
    %c0_2 = arith.constant 0 : index
    %c0_3 = arith.constant 0 : index
    %4 = vector.load %arg3[%c0_2, %c0_3] : memref<32x384xbf16, #tpu.memory_space<vmem>>, vector<32x384xbf16>
    %cst = arith.constant dense<0.000000e+00> : vector<32x384xf32>
    %5 = tpu.matmul %3, %4, %cst {dimension_numbers = #tpu.dot_dimension_numbers<[1], [0], [0], [1], [0, 0, 1, 1], [], []>} : vector<32x32xbf16>, vector<32x384xbf16>, vector<32x384xf32> -> vector<32x384xf32>
    %6 = arith.truncf %5 : vector<32x384xf32> to vector<32x384xbf16>
    %c0_4 = arith.constant 0 : index
    %c0_5 = arith.constant 0 : index
    %7 = vector.load %arg4[%c0_4, %c0_5] : memref<32x384xbf16, #tpu.memory_space<vmem>>, vector<32x384xbf16>
    tpu.vector_store %arg4[%c0_4, %c0_5], %6 {strides = array<i32>} : memref<32x384xbf16, #tpu.memory_space<vmem>>, vector<32x384xbf16>,
    return
  }
  func.func @transform_0(%arg0: i32, %arg1: i32) -> (i32, i32) {
    %c0_i32 = arith.constant 0 : i32
    %c0_i32_0 = arith.constant 0 : i32
    return %arg0, %c0_i32 : i32, i32
  }
  func.func @transform_1(%arg0: i32, %arg1: i32) -> (i32, i32) {
    %c0_i32 = arith.constant 0 : i32
    %c0_i32_0 = arith.constant 0 : i32
    return %c0_i32, %arg1 : i32, i32
  }
  func.func @transform_2(%arg0: i32, %arg1: i32) -> (i32, i32) {
    %c0_i32 = arith.constant 0 : i32
    return %arg0, %arg1 : i32, i32
  }
}

module attributes {stable_mosaic.version = 11 : i64} {
  func.func @_rmsnorm_kernel(%arg0: i32, %arg1: memref<32x32xf32, #tpu.memory_space<vmem>>, %arg2: memref<32x32xf32, #tpu.memory_space<vmem>>) attributes {dimension_semantics = [#tpu.dimension_semantics<parallel>], iteration_bounds = array<i64: 1>, scalar_prefetch = 0 : i64, scratch_operands = 0 : i64, tpu.core_type = #tpu.core_type<tc>, window_params = [{transform_indices = @transform_0, window_bounds = array<i64: 32, 32>}, {transform_indices = @transform_1, window_bounds = array<i64: 32, 32>}]} {
    %c0 = arith.constant 0 : index
    %c0_0 = arith.constant 0 : index
    %0 = vector.load %arg1[%c0, %c0_0] : memref<32x32xf32, #tpu.memory_space<vmem>>, vector<32x32xf32>
    %1 = arith.mulf %0, %0 : vector<32x32xf32>
    %cst = arith.constant dense<0.000000e+00> : vector<32xf32>
    %2 = vector.multi_reduction <add>, %1, %cst [1] : vector<32x32xf32> to vector<32xf32>
    %3 = vector.shape_cast %2 : vector<32xf32> to vector<32x1xf32>
    %cst_1 = arith.constant 3.200000e+01 : f32
    %4 = vector.broadcast %cst_1 : f32 to vector<32x1xf32>
    %5 = arith.divf %3, %4 : vector<32x1xf32>
    %cst_2 = arith.constant 1.1920929E-7 : f32
    %6 = vector.broadcast %cst_2 : f32 to vector<32x1xf32>
    %7 = arith.addf %5, %6 : vector<32x1xf32>
    %8 = math.rsqrt %7 : vector<32x1xf32>
    %9 = vector.broadcast %8 : vector<32x1xf32> to vector<32x32xf32>
    %10 = arith.mulf %0, %9 : vector<32x32xf32>
    %c0_3 = arith.constant 0 : index
    %c0_4 = arith.constant 0 : index
    %11 = vector.load %arg2[%c0_3, %c0_4] : memref<32x32xf32, #tpu.memory_space<vmem>>, vector<32x32xf32>
    tpu.vector_store %arg2[%c0_3, %c0_4], %10 {strides = array<i32>} : memref<32x32xf32, #tpu.memory_space<vmem>>, vector<32x32xf32>,
    return
  }
  func.func @transform_0(%arg0: i32) -> (i32, i32) {
    %c0_i32 = arith.constant 0 : i32
    %c0_i32_0 = arith.constant 0 : i32
    return %arg0, %c0_i32 : i32, i32
  }
  func.func @transform_1(%arg0: i32) -> (i32, i32) {
    %c0_i32 = arith.constant 0 : i32
    %c0_i32_0 = arith.constant 0 : i32
    return %arg0, %c0_i32 : i32, i32
  }
}

module attributes {stable_mosaic.version = 11 : i64} {
  func.func @_attn_out_kernel(%arg0: i32, %arg1: i32, %arg2: i32, %arg3: memref<1x16x32xf32, #tpu.memory_space<vmem>>, %arg4: memref<1x2x16x32xbf16, #tpu.memory_space<vmem>>, %arg5: memref<1x2x16x32xbf16, #tpu.memory_space<vmem>>, %arg6: memref<2x32xf32, #tpu.memory_space<vmem>>, %arg7: memref<2x32x32xbf16, #tpu.memory_space<vmem>>, %arg8: memref<1x16x32xf32, #tpu.memory_space<vmem>>) attributes {dimension_semantics = [#tpu.dimension_semantics<parallel>, #tpu.dimension_semantics<parallel>, #tpu.dimension_semantics<parallel>], iteration_bounds = array<i64: 2, 1, 1>, scalar_prefetch = 0 : i64, scratch_operands = 0 : i64, tpu.core_type = #tpu.core_type<tc>, window_params = [{transform_indices = @transform_0, window_bounds = array<i64: 1, 16, 32>}, {transform_indices = @transform_1, window_bounds = array<i64: 1, 2, 16, 32>}, {transform_indices = @transform_2, window_bounds = array<i64: 1, 2, 16, 32>}, {pipeline_mode = #tpu.pipeline_mode<synchronous>, transform_indices = @transform_3, window_bounds = array<i64: 2, 32>}, {transform_indices = @transform_4, window_bounds = array<i64: 2, 32, 32>}, {transform_indices = @transform_5, window_bounds = array<i64: 1, 16, 32>}]} {
    %cst = arith.constant 0.000000e+00 : f32
    %0 = vector.broadcast %cst : f32 to vector<16x1xf32>
    %c0 = arith.constant 0 : index
    %c0_0 = arith.constant 0 : index
    %c0_1 = arith.constant 0 : index
    %c0_2 = arith.constant 0 : index
    %1 = vector.load %arg4[%c0, %c0_0, %c0_1, %c0_2] : memref<1x2x16x32xbf16, #tpu.memory_space<vmem>>, vector<1x1x16x32xbf16>
    %2 = vector.shape_cast %1 : vector<1x1x16x32xbf16> to vector<16x32xbf16>
    %3 = arith.extf %2 : vector<16x32xbf16> to vector<16x32xf32>
    %4 = arith.mulf %3, %3 : vector<16x32xf32>
    %cst_3 = arith.constant dense<0.000000e+00> : vector<16xf32>
    %5 = vector.multi_reduction <add>, %4, %cst_3 [1] : vector<16x32xf32> to vector<16xf32>
    %6 = vector.shape_cast %5 : vector<16xf32> to vector<16x1xf32>
    %7 = arith.addf %0, %6 : vector<16x1xf32>
    %c0_4 = arith.constant 0 : index
    %c1 = arith.constant 1 : index
    %c0_5 = arith.constant 0 : index
    %c0_6 = arith.constant 0 : index
    %8 = vector.load %arg4[%c0_4, %c1, %c0_5, %c0_6] : memref<1x2x16x32xbf16, #tpu.memory_space<vmem>>, vector<1x1x16x32xbf16>
    %9 = vector.shape_cast %8 : vector<1x1x16x32xbf16> to vector<16x32xbf16>
    %10 = arith.extf %9 : vector<16x32xbf16> to vector<16x32xf32>
    %11 = arith.mulf %10, %10 : vector<16x32xf32>
    %cst_7 = arith.constant dense<0.000000e+00> : vector<16xf32>
    %12 = vector.multi_reduction <add>, %11, %cst_7 [1] : vector<16x32xf32> to vector<16xf32>
    %13 = vector.shape_cast %12 : vector<16xf32> to vector<16x1xf32>
    %14 = arith.addf %7, %13 : vector<16x1xf32>
    %cst_8 = arith.constant 1.562500e-02 : f32
    %15 = vector.broadcast %cst_8 : f32 to vector<16x1xf32>
    %16 = arith.mulf %14, %15 : vector<16x1xf32>
    %cst_9 = arith.constant 1.1920929E-7 : f32
    %17 = vector.broadcast %cst_9 : f32 to vector<16x1xf32>
    %18 = arith.addf %16, %17 : vector<16x1xf32>
    %19 = math.rsqrt %18 : vector<16x1xf32>
    %c0_10 = arith.constant 0 : index
    %c0_11 = arith.constant 0 : index
    %c0_12 = arith.constant 0 : index
    %20 = vector.load %arg3[%c0_10, %c0_11, %c0_12] : memref<1x16x32xf32, #tpu.memory_space<vmem>>, vector<1x16x32xf32>
    %21 = vector.shape_cast %20 : vector<1x16x32xf32> to vector<16x32xf32>
    %c0_13 = arith.constant 0 : index
    %c0_14 = arith.constant 0 : index
    %22 = vector.load %arg6[%c0_13, %c0_14] : memref<2x32xf32, #tpu.memory_space<vmem>>, vector<1x32xf32>
    %c0_15 = arith.constant 0 : index
    %c0_16 = arith.constant 0 : index
    %c0_17 = arith.constant 0 : index
    %c0_18 = arith.constant 0 : index
    %23 = vector.load %arg4[%c0_15, %c0_16, %c0_17, %c0_18] : memref<1x2x16x32xbf16, #tpu.memory_space<vmem>>, vector<1x1x16x32xbf16>
    %24 = vector.shape_cast %23 : vector<1x1x16x32xbf16> to vector<16x32xbf16>
    %25 = arith.extf %24 : vector<16x32xbf16> to vector<16x32xf32>
    %26 = vector.broadcast %19 : vector<16x1xf32> to vector<16x32xf32>
    %27 = arith.mulf %25, %26 : vector<16x32xf32>
    %28 = vector.broadcast %22 : vector<1x32xf32> to vector<16x32xf32>
    %29 = arith.mulf %27, %28 : vector<16x32xf32>
    %c0_19 = arith.constant 0 : index
    %c0_20 = arith.constant 0 : index
    %c0_21 = arith.constant 0 : index
    %c0_22 = arith.constant 0 : index
    %30 = vector.load %arg5[%c0_19, %c0_20, %c0_21, %c0_22] : memref<1x2x16x32xbf16, #tpu.memory_space<vmem>>, vector<1x1x16x32xbf16>
    %31 = vector.shape_cast %30 : vector<1x1x16x32xbf16> to vector<16x32xbf16>
    %32 = arith.extf %31 : vector<16x32xbf16> to vector<16x32xf32>
    %33 = arith.addf %29, %32 : vector<16x32xf32>
    %cst_23 = arith.constant 5.000000e-01 : f32
    %34 = vector.broadcast %cst_23 : f32 to vector<16x32xf32>
    %35 = arith.mulf %34, %33 : vector<16x32xf32>
    %36 = arith.truncf %35 : vector<16x32xf32> to vector<16x32xbf16>
    %c0_24 = arith.constant 0 : index
    %c0_25 = arith.constant 0 : index
    %c0_26 = arith.constant 0 : index
    %37 = vector.load %arg7[%c0_24, %c0_25, %c0_26] : memref<2x32x32xbf16, #tpu.memory_space<vmem>>, vector<1x32x32xbf16>
    %38 = vector.shape_cast %37 : vector<1x32x32xbf16> to vector<32x32xbf16>
    %cst_27 = arith.constant dense<0.000000e+00> : vector<16x32xf32>
    %39 = tpu.matmul %36, %38, %cst_27 {dimension_numbers = #tpu.dot_dimension_numbers<[1], [0], [0], [1], [0, 0, 1, 1], [], []>} : vector<16x32xbf16>, vector<32x32xbf16>, vector<16x32xf32> -> vector<16x32xf32>
    %40 = arith.addf %21, %39 : vector<16x32xf32>
    %c1_28 = arith.constant 1 : index
    %c0_29 = arith.constant 0 : index
    %41 = vector.load %arg6[%c1_28, %c0_29] : memref<2x32xf32, #tpu.memory_space<vmem>>, vector<1x32xf32>
    %c0_30 = arith.constant 0 : index
    %c1_31 = arith.constant 1 : index
    %c0_32 = arith.constant 0 : index
    %c0_33 = arith.constant 0 : index
    %42 = vector.load %arg4[%c0_30, %c1_31, %c0_32, %c0_33] : memref<1x2x16x32xbf16, #tpu.memory_space<vmem>>, vector<1x1x16x32xbf16>
    %43 = vector.shape_cast %42 : vector<1x1x16x32xbf16> to vector<16x32xbf16>
    %44 = arith.extf %43 : vector<16x32xbf16> to vector<16x32xf32>
    %45 = vector.broadcast %19 : vector<16x1xf32> to vector<16x32xf32>
    %46 = arith.mulf %44, %45 : vector<16x32xf32>
    %47 = vector.broadcast %41 : vector<1x32xf32> to vector<16x32xf32>
    %48 = arith.mulf %46, %47 : vector<16x32xf32>
    %c0_34 = arith.constant 0 : index
    %c1_35 = arith.constant 1 : index
    %c0_36 = arith.constant 0 : index
    %c0_37 = arith.constant 0 : index
    %49 = vector.load %arg5[%c0_34, %c1_35, %c0_36, %c0_37] : memref<1x2x16x32xbf16, #tpu.memory_space<vmem>>, vector<1x1x16x32xbf16>
    %50 = vector.shape_cast %49 : vector<1x1x16x32xbf16> to vector<16x32xbf16>
    %51 = arith.extf %50 : vector<16x32xbf16> to vector<16x32xf32>
    %52 = arith.addf %48, %51 : vector<16x32xf32>
    %cst_38 = arith.constant 5.000000e-01 : f32
    %53 = vector.broadcast %cst_38 : f32 to vector<16x32xf32>
    %54 = arith.mulf %53, %52 : vector<16x32xf32>
    %55 = arith.truncf %54 : vector<16x32xf32> to vector<16x32xbf16>
    %c1_39 = arith.constant 1 : index
    %c0_40 = arith.constant 0 : index
    %c0_41 = arith.constant 0 : index
    %56 = vector.load %arg7[%c1_39, %c0_40, %c0_41] : memref<2x32x32xbf16, #tpu.memory_space<vmem>>, vector<1x32x32xbf16>
    %57 = vector.shape_cast %56 : vector<1x32x32xbf16> to vector<32x32xbf16>
    %cst_42 = arith.constant dense<0.000000e+00> : vector<16x32xf32>
    %58 = tpu.matmul %55, %57, %cst_42 {dimension_numbers = #tpu.dot_dimension_numbers<[1], [0], [0], [1], [0, 0, 1, 1], [], []>} : vector<16x32xbf16>, vector<32x32xbf16>, vector<16x32xf32> -> vector<16x32xf32>
    %59 = arith.addf %40, %58 : vector<16x32xf32>
    %c0_43 = arith.constant 0 : index
    %c0_44 = arith.constant 0 : index
    %c0_45 = arith.constant 0 : index
    %60 = vector.load %arg8[%c0_43, %c0_44, %c0_45] : memref<1x16x32xf32, #tpu.memory_space<vmem>>, vector<1x16x32xf32>
    %61 = vector.shape_cast %60 : vector<1x16x32xf32> to vector<16x32xf32>
    %62 = vector.shape_cast %59 : vector<16x32xf32> to vector<1x16x32xf32>
    tpu.vector_store %arg8[%c0_43, %c0_44, %c0_45], %62 {strides = array<i32>} : memref<1x16x32xf32, #tpu.memory_space<vmem>>, vector<1x16x32xf32>,
    return
  }
  func.func @transform_0(%arg0: i32, %arg1: i32, %arg2: i32) -> (i32, i32, i32) {
    %c0_i32 = arith.constant 0 : i32
    return %arg0, %arg1, %arg2 : i32, i32, i32
  }
  func.func @transform_1(%arg0: i32, %arg1: i32, %arg2: i32) -> (i32, i32, i32, i32) {
    %c0_i32 = arith.constant 0 : i32
    %c0_i32_0 = arith.constant 0 : i32
    %c0_i32_1 = arith.constant 0 : i32
    return %arg0, %c0_i32, %arg1, %c0_i32_0 : i32, i32, i32, i32
  }
  func.func @transform_2(%arg0: i32, %arg1: i32, %arg2: i32) -> (i32, i32, i32, i32) {
    %c0_i32 = arith.constant 0 : i32
    %c0_i32_0 = arith.constant 0 : i32
    %c0_i32_1 = arith.constant 0 : i32
    return %arg0, %c0_i32, %arg1, %c0_i32_0 : i32, i32, i32, i32
  }
  func.func @transform_3(%arg0: i32, %arg1: i32, %arg2: i32) -> (i32, i32) {
    %c0_i32 = arith.constant 0 : i32
    %c0_i32_0 = arith.constant 0 : i32
    %c0_i32_1 = arith.constant 0 : i32
    return %c0_i32, %c0_i32_0 : i32, i32
  }
  func.func @transform_4(%arg0: i32, %arg1: i32, %arg2: i32) -> (i32, i32, i32) {
    %c0_i32 = arith.constant 0 : i32
    %c0_i32_0 = arith.constant 0 : i32
    %c0_i32_1 = arith.constant 0 : i32
    return %c0_i32, %c0_i32_0, %arg2 : i32, i32, i32
  }
  func.func @transform_5(%arg0: i32, %arg1: i32, %arg2: i32) -> (i32, i32, i32) {
    %c0_i32 = arith.constant 0 : i32
    return %arg0, %arg1, %arg2 : i32, i32, i32
  }
}

module attributes {stable_mosaic.version = 11 : i64} {
  func.func @_dual_attn_kernel(%arg0: i32, %arg1: i32, %arg2: i32, %arg3: memref<1x1x4x16x32xbf16, #tpu.memory_space<vmem>>, %arg4: memref<1x1x2x16x32xbf16, #tpu.memory_space<vmem>>, %arg5: memref<1x1x16x32xbf16, #tpu.memory_space<vmem>>, %arg6: memref<1x1x16x32xbf16, #tpu.memory_space<vmem>>) attributes {dimension_semantics = [#tpu.dimension_semantics<parallel>, #tpu.dimension_semantics<parallel>, #tpu.dimension_semantics<parallel>], iteration_bounds = array<i64: 2, 2, 1>, scalar_prefetch = 0 : i64, scratch_operands = 0 : i64, tpu.core_type = #tpu.core_type<tc>, window_params = [{transform_indices = @transform_0, window_bounds = array<i64: 1, 1, 4, 16, 32>}, {transform_indices = @transform_1, window_bounds = array<i64: 1, 1, 2, 16, 32>}, {transform_indices = @transform_2, window_bounds = array<i64: 1, 1, 16, 32>}, {transform_indices = @transform_3, window_bounds = array<i64: 1, 1, 16, 32>}]} {
    %c0 = arith.constant 0 : index
    %c0_0 = arith.constant 0 : index
    %c0_1 = arith.constant 0 : index
    %c0_2 = arith.constant 0 : index
    %c0_3 = arith.constant 0 : index
    %0 = vector.load %arg3[%c0, %c0_0, %c0_1, %c0_2, %c0_3] : memref<1x1x4x16x32xbf16, #tpu.memory_space<vmem>>, vector<1x1x1x16x32xbf16>
    %1 = vector.shape_cast %0 : vector<1x1x1x16x32xbf16> to vector<16x32xbf16>
    %c0_4 = arith.constant 0 : index
    %c0_5 = arith.constant 0 : index
    %c1 = arith.constant 1 : index
    %c0_6 = arith.constant 0 : index
    %c0_7 = arith.constant 0 : index
    %2 = vector.load %arg3[%c0_4, %c0_5, %c1, %c0_6, %c0_7] : memref<1x1x4x16x32xbf16, #tpu.memory_space<vmem>>, vector<1x1x1x16x32xbf16>
    %3 = vector.shape_cast %2 : vector<1x1x1x16x32xbf16> to vector<16x32xbf16>
    %c0_8 = arith.constant 0 : index
    %c0_9 = arith.constant 0 : index
    %c2 = arith.constant 2 : index
    %c0_10 = arith.constant 0 : index
    %c0_11 = arith.constant 0 : index
    %4 = vector.load %arg3[%c0_8, %c0_9, %c2, %c0_10, %c0_11] : memref<1x1x4x16x32xbf16, #tpu.memory_space<vmem>>, vector<1x1x1x16x32xbf16>
    %5 = vector.shape_cast %4 : vector<1x1x1x16x32xbf16> to vector<16x32xbf16>
    %c0_12 = arith.constant 0 : index
    %c0_13 = arith.constant 0 : index
    %c3 = arith.constant 3 : index
    %c0_14 = arith.constant 0 : index
    %c0_15 = arith.constant 0 : index
    %6 = vector.load %arg3[%c0_12, %c0_13, %c3, %c0_14, %c0_15] : memref<1x1x4x16x32xbf16, #tpu.memory_space<vmem>>, vector<1x1x1x16x32xbf16>
    %7 = vector.shape_cast %6 : vector<1x1x1x16x32xbf16> to vector<16x32xbf16>
    %c0_16 = arith.constant 0 : index
    %c0_17 = arith.constant 0 : index
    %c0_18 = arith.constant 0 : index
    %c0_19 = arith.constant 0 : index
    %c0_20 = arith.constant 0 : index
    %8 = vector.load %arg4[%c0_16, %c0_17, %c0_18, %c0_19, %c0_20] : memref<1x1x2x16x32xbf16, #tpu.memory_space<vmem>>, vector<1x1x1x16x32xbf16>
    %9 = vector.shape_cast %8 : vector<1x1x1x16x32xbf16> to vector<16x32xbf16>
    %c0_21 = arith.constant 0 : index
    %c0_22 = arith.constant 0 : index
    %c1_23 = arith.constant 1 : index
    %c0_24 = arith.constant 0 : index
    %c0_25 = arith.constant 0 : index
    %10 = vector.load %arg4[%c0_21, %c0_22, %c1_23, %c0_24, %c0_25] : memref<1x1x2x16x32xbf16, #tpu.memory_space<vmem>>, vector<1x1x1x16x32xbf16>
    %11 = vector.shape_cast %10 : vector<1x1x1x16x32xbf16> to vector<16x32xbf16>
    %c16_i32 = arith.constant 16 : i32
    %12 = arith.muli %arg2, %c16_i32 : i32
    %13 = tpu.iota {dimensions = array<i32: 0>} : vector<16x16xi32>
    %14 = vector.broadcast %12 : i32 to vector<16x16xi32>
    %15 = arith.addi %14, %13 : vector<16x16xi32>
    %16 = tpu.iota {dimensions = array<i32: 1>} : vector<16x16xi32>
    %17 = arith.cmpi sle, %16, %15 : vector<16x16xi32>
    %cst = arith.constant dense<0.000000e+00> : vector<16x16xf32>
    %18 = tpu.matmul %9, %1, %cst {dimension_numbers = #tpu.dot_dimension_numbers<[1], [1], [0], [0], [0, 0, 1, 0], [], []>} : vector<16x32xbf16>, vector<16x32xbf16>, vector<16x16xf32> -> vector<16x16xf32>
    %cst_26 = arith.constant 0.176776692 : f32
    %19 = vector.broadcast %cst_26 : f32 to vector<16x16xf32>
    %20 = arith.mulf %18, %19 : vector<16x16xf32>
    %cst_27 = arith.constant -1.000000e+30 : f32
    %21 = vector.broadcast %cst_27 : f32 to vector<16x16xf32>
    %22 = arith.select %17, %20, %21 : vector<16x16xi1>, vector<16x16xf32>
    %cst_28 = arith.constant dense<0xFF800000> : vector<16xf32>
    %23 = vector.multi_reduction <maximumf>, %22, %cst_28 [1] : vector<16x16xf32> to vector<16xf32>
    %24 = vector.shape_cast %23 : vector<16xf32> to vector<16x1xf32>
    %25 = vector.broadcast %24 : vector<16x1xf32> to vector<16x16xf32>
    %26 = arith.subf %22, %25 : vector<16x16xf32>
    %27 = math.exp %26 : vector<16x16xf32>
    %cst_29 = arith.constant dense<0.000000e+00> : vector<16xf32>
    %28 = vector.multi_reduction <add>, %27, %cst_29 [1] : vector<16x16xf32> to vector<16xf32>
    %29 = vector.shape_cast %28 : vector<16xf32> to vector<16x1xf32>
    %30 = arith.truncf %27 : vector<16x16xf32> to vector<16x16xbf16>
    %cst_30 = arith.constant dense<0.000000e+00> : vector<16x32xf32>
    %31 = tpu.matmul %30, %3, %cst_30 {dimension_numbers = #tpu.dot_dimension_numbers<[1], [0], [0], [1], [0, 0, 1, 1], [], []>} : vector<16x16xbf16>, vector<16x32xbf16>, vector<16x32xf32> -> vector<16x32xf32>
    %32 = vector.broadcast %29 : vector<16x1xf32> to vector<16x32xf32>
    %33 = arith.divf %31, %32 : vector<16x32xf32>
    %34 = arith.truncf %33 : vector<16x32xf32> to vector<16x32xbf16>
    %c0_31 = arith.constant 0 : index
    %c0_32 = arith.constant 0 : index
    %c0_33 = arith.constant 0 : index
    %c0_34 = arith.constant 0 : index
    %35 = vector.load %arg5[%c0_31, %c0_32, %c0_33, %c0_34] : memref<1x1x16x32xbf16, #tpu.memory_space<vmem>>, vector<1x1x16x32xbf16>
    %36 = vector.shape_cast %35 : vector<1x1x16x32xbf16> to vector<16x32xbf16>
    %37 = vector.shape_cast %34 : vector<16x32xbf16> to vector<1x1x16x32xbf16>
    tpu.vector_store %arg5[%c0_31, %c0_32, %c0_33, %c0_34], %37 {strides = array<i32>} : memref<1x1x16x32xbf16, #tpu.memory_space<vmem>>, vector<1x1x16x32xbf16>,
    %cst_35 = arith.constant dense<0.000000e+00> : vector<16x16xf32>
    %38 = tpu.matmul %11, %5, %cst_35 {dimension_numbers = #tpu.dot_dimension_numbers<[1], [1], [0], [0], [0, 0, 1, 0], [], []>} : vector<16x32xbf16>, vector<16x32xbf16>, vector<16x16xf32> -> vector<16x16xf32>
    %cst_36 = arith.constant 6.250000e-02 : f32
    %39 = vector.broadcast %cst_36 : f32 to vector<16x16xf32>
    %40 = arith.mulf %38, %39 : vector<16x16xf32>
    %cst_37 = arith.constant 0.000000e+00 : f32
    %41 = vector.broadcast %cst_37 : f32 to vector<16x16xf32>
    %42 = arith.select %17, %40, %41 : vector<16x16xi1>, vector<16x16xf32>
    %43 = arith.truncf %42 : vector<16x16xf32> to vector<16x16xbf16>
    %cst_38 = arith.constant dense<0.000000e+00> : vector<16x32xf32>
    %44 = tpu.matmul %43, %7, %cst_38 {dimension_numbers = #tpu.dot_dimension_numbers<[1], [0], [0], [1], [0, 0, 1, 1], [], []>} : vector<16x16xbf16>, vector<16x32xbf16>, vector<16x32xf32> -> vector<16x32xf32>
    %45 = arith.truncf %44 : vector<16x32xf32> to vector<16x32xbf16>
    %c0_39 = arith.constant 0 : index
    %c0_40 = arith.constant 0 : index
    %c0_41 = arith.constant 0 : index
    %c0_42 = arith.constant 0 : index
    %46 = vector.load %arg6[%c0_39, %c0_40, %c0_41, %c0_42] : memref<1x1x16x32xbf16, #tpu.memory_space<vmem>>, vector<1x1x16x32xbf16>
    %47 = vector.shape_cast %46 : vector<1x1x16x32xbf16> to vector<16x32xbf16>
    %48 = vector.shape_cast %45 : vector<16x32xbf16> to vector<1x1x16x32xbf16>
    tpu.vector_store %arg6[%c0_39, %c0_40, %c0_41, %c0_42], %48 {strides = array<i32>} : memref<1x1x16x32xbf16, #tpu.memory_space<vmem>>, vector<1x1x16x32xbf16>,
    return
  }
  func.func @transform_0(%arg0: i32, %arg1: i32, %arg2: i32) -> (i32, i32, i32, i32, i32) {
    %c0_i32 = arith.constant 0 : i32
    %c0_i32_0 = arith.constant 0 : i32
    %c0_i32_1 = arith.constant 0 : i32
    %c0_i32_2 = arith.constant 0 : i32
    return %arg0, %arg1, %c0_i32, %c0_i32_0, %c0_i32_1 : i32, i32, i32, i32, i32
  }
  func.func @transform_1(%arg0: i32, %arg1: i32, %arg2: i32) -> (i32, i32, i32, i32, i32) {
    %c0_i32 = arith.constant 0 : i32
    %c0_i32_0 = arith.constant 0 : i32
    %c0_i32_1 = arith.constant 0 : i32
    return %arg0, %arg1, %c0_i32, %arg2, %c0_i32_0 : i32, i32, i32, i32, i32
  }
  func.func @transform_2(%arg0: i32, %arg1: i32, %arg2: i32) -> (i32, i32, i32, i32) {
    %c0_i32 = arith.constant 0 : i32
    %c0_i32_0 = arith.constant 0 : i32
    return %arg0, %arg1, %arg2, %c0_i32 : i32, i32, i32, i32
  }
  func.func @transform_3(%arg0: i32, %arg1: i32, %arg2: i32) -> (i32, i32, i32, i32) {
    %c0_i32 = arith.constant 0 : i32
    %c0_i32_0 = arith.constant 0 : i32
    return %arg0, %arg1, %arg2, %c0_i32 : i32, i32, i32, i32
  }
}

module attributes {stable_mosaic.version = 11 : i64} {
  func.func @_rmsnorm_mlp_kernel(%arg0: i32, %arg1: i32, %arg2: memref<32x32xf32, #tpu.memory_space<vmem>>, %arg3: memref<32x128xbf16, #tpu.memory_space<vmem>>, %arg4: memref<128x32xbf16, #tpu.memory_space<vmem>>, %arg5: memref<32x32xf32, #tpu.memory_space<vmem>>, %arg6: memref<32x32xbf16, #tpu.memory_space<vmem>>, %arg7: memref<32x32xf32, #tpu.memory_space<vmem>>) attributes {dimension_semantics = [#tpu.dimension_semantics<parallel>, #tpu.dimension_semantics<arbitrary>], iteration_bounds = array<i64: 1, 1>, scalar_prefetch = 0 : i64, scratch_operands = 2 : i64, tpu.core_type = #tpu.core_type<tc>, window_params = [{transform_indices = @transform_0, window_bounds = array<i64: 32, 32>}, {transform_indices = @transform_1, window_bounds = array<i64: 32, 128>}, {transform_indices = @transform_2, window_bounds = array<i64: 128, 32>}, {transform_indices = @transform_3, window_bounds = array<i64: 32, 32>}]} {
    %c0_i32 = arith.constant 0 : i32
    %0 = arith.cmpi eq, %arg1, %c0_i32 : i32
    %1 = arith.extui %0 : i1 to i32
    %c0_i32_0 = arith.constant 0 : i32
    %2 = arith.cmpi ne, %1, %c0_i32_0 : i32
    scf.if %2 {
      %c0_14 = arith.constant 0 : index
      %c0_15 = arith.constant 0 : index
      %18 = vector.load %arg2[%c0_14, %c0_15] : memref<32x32xf32, #tpu.memory_space<vmem>>, vector<32x32xf32>
      %19 = arith.mulf %18, %18 : vector<32x32xf32>
      %cst_16 = arith.constant dense<0.000000e+00> : vector<32xf32>
      %20 = vector.multi_reduction <add>, %19, %cst_16 [1] : vector<32x32xf32> to vector<32xf32>
      %21 = vector.shape_cast %20 : vector<32xf32> to vector<32x1xf32>
      %cst_17 = arith.constant 3.200000e+01 : f32
      %22 = vector.broadcast %cst_17 : f32 to vector<32x1xf32>
      %23 = arith.divf %21, %22 : vector<32x1xf32>
      %cst_18 = arith.constant 1.000000e+00 : f32
      %24 = vector.broadcast %cst_18 : f32 to vector<32x32xf32>
      %25 = arith.mulf %24, %18 : vector<32x32xf32>
      %cst_19 = arith.constant 1.1920929E-7 : f32
      %26 = vector.broadcast %cst_19 : f32 to vector<32x1xf32>
      %27 = arith.addf %23, %26 : vector<32x1xf32>
      %28 = math.rsqrt %27 : vector<32x1xf32>
      %29 = vector.broadcast %28 : vector<32x1xf32> to vector<32x32xf32>
      %30 = arith.mulf %25, %29 : vector<32x32xf32>
      %31 = arith.truncf %30 : vector<32x32xf32> to vector<32x32xbf16>
      %c0_20 = arith.constant 0 : index
      %c0_21 = arith.constant 0 : index
      %32 = vector.load %arg6[%c0_20, %c0_21] : memref<32x32xbf16, #tpu.memory_space<vmem>>, vector<32x32xbf16>
      tpu.vector_store %arg6[%c0_20, %c0_21], %31 {strides = array<i32>} : memref<32x32xbf16, #tpu.memory_space<vmem>>, vector<32x32xbf16>,
      %cst_22 = arith.constant 0.000000e+00 : f32
      %33 = vector.broadcast %cst_22 : f32 to vector<32x32xf32>
      %c0_23 = arith.constant 0 : index
      %c0_24 = arith.constant 0 : index
      %34 = vector.load %arg7[%c0_23, %c0_24] : memref<32x32xf32, #tpu.memory_space<vmem>>, vector<32x32xf32>
      tpu.vector_store %arg7[%c0_23, %c0_24], %33 {strides = array<i32>} : memref<32x32xf32, #tpu.memory_space<vmem>>, vector<32x32xf32>,
    } else {
    }
    %c0 = arith.constant 0 : index
    %c0_1 = arith.constant 0 : index
    %3 = vector.load %arg6[%c0, %c0_1] : memref<32x32xbf16, #tpu.memory_space<vmem>>, vector<32x32xbf16>
    %c0_2 = arith.constant 0 : index
    %c0_3 = arith.constant 0 : index
    %4 = vector.load %arg3[%c0_2, %c0_3] : memref<32x128xbf16, #tpu.memory_space<vmem>>, vector<32x128xbf16>
    %cst = arith.constant dense<0.000000e+00> : vector<32x128xf32>
    %5 = tpu.matmul %3, %4, %cst {dimension_numbers = #tpu.dot_dimension_numbers<[1], [0], [0], [1], [0, 0, 1, 1], [], []>} : vector<32x32xbf16>, vector<32x128xbf16>, vector<32x128xf32> -> vector<32x128xf32>
    %cst_4 = arith.constant 0.000000e+00 : f32
    %6 = vector.broadcast %cst_4 : f32 to vector<32x128xf32>
    %7 = arith.maximumf %5, %6 : vector<32x128xf32>
    %8 = arith.mulf %7, %7 : vector<32x128xf32>
    %c0_5 = arith.constant 0 : index
    %c0_6 = arith.constant 0 : index
    %9 = vector.load %arg7[%c0_5, %c0_6] : memref<32x32xf32, #tpu.memory_space<vmem>>, vector<32x32xf32>
    %10 = arith.truncf %8 : vector<32x128xf32> to vector<32x128xbf16>
    %c0_7 = arith.constant 0 : index
    %c0_8 = arith.constant 0 : index
    %11 = vector.load %arg4[%c0_7, %c0_8] : memref<128x32xbf16, #tpu.memory_space<vmem>>, vector<128x32xbf16>
    %cst_9 = arith.constant dense<0.000000e+00> : vector<32x32xf32>
    %12 = tpu.matmul %10, %11, %cst_9 {dimension_numbers = #tpu.dot_dimension_numbers<[1], [0], [0], [1], [0, 0, 1, 1], [], []>} : vector<32x128xbf16>, vector<128x32xbf16>, vector<32x32xf32> -> vector<32x32xf32>
    %13 = arith.addf %9, %12 : vector<32x32xf32>
    %c0_10 = arith.constant 0 : index
    %c0_11 = arith.constant 0 : index
    %14 = vector.load %arg7[%c0_10, %c0_11] : memref<32x32xf32, #tpu.memory_space<vmem>>, vector<32x32xf32>
    tpu.vector_store %arg7[%c0_10, %c0_11], %13 {strides = array<i32>} : memref<32x32xf32, #tpu.memory_space<vmem>>, vector<32x32xf32>,
    %c0_i32_12 = arith.constant 0 : i32
    %15 = arith.cmpi eq, %arg1, %c0_i32_12 : i32
    %16 = arith.extui %15 : i1 to i32
    %c0_i32_13 = arith.constant 0 : i32
    %17 = arith.cmpi ne, %16, %c0_i32_13 : i32
    scf.if %17 {
      %c0_14 = arith.constant 0 : index
      %c0_15 = arith.constant 0 : index
      %18 = vector.load %arg2[%c0_14, %c0_15] : memref<32x32xf32, #tpu.memory_space<vmem>>, vector<32x32xf32>
      %c0_16 = arith.constant 0 : index
      %c0_17 = arith.constant 0 : index
      %19 = vector.load %arg7[%c0_16, %c0_17] : memref<32x32xf32, #tpu.memory_space<vmem>>, vector<32x32xf32>
      %20 = arith.addf %18, %19 : vector<32x32xf32>
      %c0_18 = arith.constant 0 : index
      %c0_19 = arith.constant 0 : index
      %21 = vector.load %arg5[%c0_18, %c0_19] : memref<32x32xf32, #tpu.memory_space<vmem>>, vector<32x32xf32>
      tpu.vector_store %arg5[%c0_18, %c0_19], %20 {strides = array<i32>} : memref<32x32xf32, #tpu.memory_space<vmem>>, vector<32x32xf32>,
    } else {
    }
    return
  }
  func.func @transform_0(%arg0: i32, %arg1: i32) -> (i32, i32) {
    %c0_i32 = arith.constant 0 : i32
    %c0_i32_0 = arith.constant 0 : i32
    return %arg0, %c0_i32 : i32, i32
  }
  func.func @transform_1(%arg0: i32, %arg1: i32) -> (i32, i32) {
    %c0_i32 = arith.constant 0 : i32
    %c0_i32_0 = arith.constant 0 : i32
    return %c0_i32, %arg1 : i32, i32
  }
  func.func @transform_2(%arg0: i32, %arg1: i32) -> (i32, i32) {
    %c0_i32 = arith.constant 0 : i32
    %c0_i32_0 = arith.constant 0 : i32
    return %arg1, %c0_i32 : i32, i32
  }
  func.func @transform_3(%arg0: i32, %arg1: i32) -> (i32, i32) {
    %c0_i32 = arith.constant 0 : i32
    %c0_i32_0 = arith.constant 0 : i32
    return %arg0, %c0_i32 : i32, i32
  }
}

module attributes {stable_mosaic.version = 11 : i64} {
  func.func @_rmsnorm_matmul_cached_kernel(%arg0: i32, %arg1: i32, %arg2: memref<32x32xf32, #tpu.memory_space<vmem>>, %arg3: memref<32x384xbf16, #tpu.memory_space<vmem>>, %arg4: memref<32x384xbf16, #tpu.memory_space<vmem>>, %arg5: memref<32x32xbf16, #tpu.memory_space<vmem>>) attributes {dimension_semantics = [#tpu.dimension_semantics<parallel>, #tpu.dimension_semantics<arbitrary>], iteration_bounds = array<i64: 1, 1>, scalar_prefetch = 0 : i64, scratch_operands = 1 : i64, tpu.core_type = #tpu.core_type<tc>, window_params = [{transform_indices = @transform_0, window_bounds = array<i64: 32, 32>}, {transform_indices = @transform_1, window_bounds = array<i64: 32, 384>}, {transform_indices = @transform_2, window_bounds = array<i64: 32, 384>}]} {
    %c0_i32 = arith.constant 0 : i32
    %0 = arith.cmpi eq, %arg1, %c0_i32 : i32
    %1 = arith.extui %0 : i1 to i32
    %c0_i32_0 = arith.constant 0 : i32
    %2 = arith.cmpi ne, %1, %c0_i32_0 : i32
    scf.if %2 {
      %c0_6 = arith.constant 0 : index
      %c0_7 = arith.constant 0 : index
      %8 = vector.load %arg2[%c0_6, %c0_7] : memref<32x32xf32, #tpu.memory_space<vmem>>, vector<32x32xf32>
      %9 = arith.mulf %8, %8 : vector<32x32xf32>
      %cst_8 = arith.constant dense<0.000000e+00> : vector<32xf32>
      %10 = vector.multi_reduction <add>, %9, %cst_8 [1] : vector<32x32xf32> to vector<32xf32>
      %11 = vector.shape_cast %10 : vector<32xf32> to vector<32x1xf32>
      %cst_9 = arith.constant 3.200000e+01 : f32
      %12 = vector.broadcast %cst_9 : f32 to vector<32x1xf32>
      %13 = arith.divf %11, %12 : vector<32x1xf32>
      %cst_10 = arith.constant 0.707106769 : f32
      %14 = vector.broadcast %cst_10 : f32 to vector<32x32xf32>
      %15 = arith.mulf %14, %8 : vector<32x32xf32>
      %cst_11 = arith.constant 1.1920929E-7 : f32
      %16 = vector.broadcast %cst_11 : f32 to vector<32x1xf32>
      %17 = arith.addf %13, %16 : vector<32x1xf32>
      %18 = math.rsqrt %17 : vector<32x1xf32>
      %19 = vector.broadcast %18 : vector<32x1xf32> to vector<32x32xf32>
      %20 = arith.mulf %15, %19 : vector<32x32xf32>
      %21 = arith.truncf %20 : vector<32x32xf32> to vector<32x32xbf16>
      %c0_12 = arith.constant 0 : index
      %c0_13 = arith.constant 0 : index
      %22 = vector.load %arg5[%c0_12, %c0_13] : memref<32x32xbf16, #tpu.memory_space<vmem>>, vector<32x32xbf16>
      tpu.vector_store %arg5[%c0_12, %c0_13], %21 {strides = array<i32>} : memref<32x32xbf16, #tpu.memory_space<vmem>>, vector<32x32xbf16>,
    } else {
    }
    %c0 = arith.constant 0 : index
    %c0_1 = arith.constant 0 : index
    %3 = vector.load %arg5[%c0, %c0_1] : memref<32x32xbf16, #tpu.memory_space<vmem>>, vector<32x32xbf16>
    %c0_2 = arith.constant 0 : index
    %c0_3 = arith.constant 0 : index
    %4 = vector.load %arg3[%c0_2, %c0_3] : memref<32x384xbf16, #tpu.memory_space<vmem>>, vector<32x384xbf16>
    %cst = arith.constant dense<0.000000e+00> : vector<32x384xf32>
    %5 = tpu.matmul %3, %4, %cst {dimension_numbers = #tpu.dot_dimension_numbers<[1], [0], [0], [1], [0, 0, 1, 1], [], []>} : vector<32x32xbf16>, vector<32x384xbf16>, vector<32x384xf32> -> vector<32x384xf32>
    %6 = arith.truncf %5 : vector<32x384xf32> to vector<32x384xbf16>
    %c0_4 = arith.constant 0 : index
    %c0_5 = arith.constant 0 : index
    %7 = vector.load %arg4[%c0_4, %c0_5] : memref<32x384xbf16, #tpu.memory_space<vmem>>, vector<32x384xbf16>
    tpu.vector_store %arg4[%c0_4, %c0_5], %6 {strides = array<i32>} : memref<32x384xbf16, #tpu.memory_space<vmem>>, vector<32x384xbf16>,
    return
  }
  func.func @transform_0(%arg0: i32, %arg1: i32) -> (i32, i32) {
    %c0_i32 = arith.constant 0 : i32
    %c0_i32_0 = arith.constant 0 : i32
    return %arg0, %c0_i32 : i32, i32
  }
  func.func @transform_1(%arg0: i32, %arg1: i32) -> (i32, i32) {
    %c0_i32 = arith.constant 0 : i32
    %c0_i32_0 = arith.constant 0 : i32
    return %c0_i32, %arg1 : i32, i32
  }
  func.func @transform_2(%arg0: i32, %arg1: i32) -> (i32, i32) {
    %c0_i32 = arith.constant 0 : i32
    return %arg0, %arg1 : i32, i32
  }
}

module attributes {stable_mosaic.version = 11 : i64} {
  func.func @_rmsnorm_mlp_kernel(%arg0: i32, %arg1: i32, %arg2: memref<32x32xf32, #tpu.memory_space<vmem>>, %arg3: memref<32x128xbf16, #tpu.memory_space<vmem>>, %arg4: memref<128x32xbf16, #tpu.memory_space<vmem>>, %arg5: memref<32x32xf32, #tpu.memory_space<vmem>>, %arg6: memref<32x32xbf16, #tpu.memory_space<vmem>>, %arg7: memref<32x32xf32, #tpu.memory_space<vmem>>) attributes {dimension_semantics = [#tpu.dimension_semantics<parallel>, #tpu.dimension_semantics<arbitrary>], iteration_bounds = array<i64: 1, 1>, scalar_prefetch = 0 : i64, scratch_operands = 2 : i64, tpu.core_type = #tpu.core_type<tc>, window_params = [{transform_indices = @transform_0, window_bounds = array<i64: 32, 32>}, {transform_indices = @transform_1, window_bounds = array<i64: 32, 128>}, {transform_indices = @transform_2, window_bounds = array<i64: 128, 32>}, {transform_indices = @transform_3, window_bounds = array<i64: 32, 32>}]} {
    %c0_i32 = arith.constant 0 : i32
    %0 = arith.cmpi eq, %arg1, %c0_i32 : i32
    %1 = arith.extui %0 : i1 to i32
    %c0_i32_0 = arith.constant 0 : i32
    %2 = arith.cmpi ne, %1, %c0_i32_0 : i32
    scf.if %2 {
      %c0_14 = arith.constant 0 : index
      %c0_15 = arith.constant 0 : index
      %18 = vector.load %arg2[%c0_14, %c0_15] : memref<32x32xf32, #tpu.memory_space<vmem>>, vector<32x32xf32>
      %19 = arith.mulf %18, %18 : vector<32x32xf32>
      %cst_16 = arith.constant dense<0.000000e+00> : vector<32xf32>
      %20 = vector.multi_reduction <add>, %19, %cst_16 [1] : vector<32x32xf32> to vector<32xf32>
      %21 = vector.shape_cast %20 : vector<32xf32> to vector<32x1xf32>
      %cst_17 = arith.constant 3.200000e+01 : f32
      %22 = vector.broadcast %cst_17 : f32 to vector<32x1xf32>
      %23 = arith.divf %21, %22 : vector<32x1xf32>
      %cst_18 = arith.constant 0.707106769 : f32
      %24 = vector.broadcast %cst_18 : f32 to vector<32x32xf32>
      %25 = arith.mulf %24, %18 : vector<32x32xf32>
      %cst_19 = arith.constant 1.1920929E-7 : f32
      %26 = vector.broadcast %cst_19 : f32 to vector<32x1xf32>
      %27 = arith.addf %23, %26 : vector<32x1xf32>
      %28 = math.rsqrt %27 : vector<32x1xf32>
      %29 = vector.broadcast %28 : vector<32x1xf32> to vector<32x32xf32>
      %30 = arith.mulf %25, %29 : vector<32x32xf32>
      %31 = arith.truncf %30 : vector<32x32xf32> to vector<32x32xbf16>
      %c0_20 = arith.constant 0 : index
      %c0_21 = arith.constant 0 : index
      %32 = vector.load %arg6[%c0_20, %c0_21] : memref<32x32xbf16, #tpu.memory_space<vmem>>, vector<32x32xbf16>
      tpu.vector_store %arg6[%c0_20, %c0_21], %31 {strides = array<i32>} : memref<32x32xbf16, #tpu.memory_space<vmem>>, vector<32x32xbf16>,
      %cst_22 = arith.constant 0.000000e+00 : f32
      %33 = vector.broadcast %cst_22 : f32 to vector<32x32xf32>
      %c0_23 = arith.constant 0 : index
      %c0_24 = arith.constant 0 : index
      %34 = vector.load %arg7[%c0_23, %c0_24] : memref<32x32xf32, #tpu.memory_space<vmem>>, vector<32x32xf32>
      tpu.vector_store %arg7[%c0_23, %c0_24], %33 {strides = array<i32>} : memref<32x32xf32, #tpu.memory_space<vmem>>, vector<32x32xf32>,
    } else {
    }
    %c0 = arith.constant 0 : index
    %c0_1 = arith.constant 0 : index
    %3 = vector.load %arg6[%c0, %c0_1] : memref<32x32xbf16, #tpu.memory_space<vmem>>, vector<32x32xbf16>
    %c0_2 = arith.constant 0 : index
    %c0_3 = arith.constant 0 : index
    %4 = vector.load %arg3[%c0_2, %c0_3] : memref<32x128xbf16, #tpu.memory_space<vmem>>, vector<32x128xbf16>
    %cst = arith.constant dense<0.000000e+00> : vector<32x128xf32>
    %5 = tpu.matmul %3, %4, %cst {dimension_numbers = #tpu.dot_dimension_numbers<[1], [0], [0], [1], [0, 0, 1, 1], [], []>} : vector<32x32xbf16>, vector<32x128xbf16>, vector<32x128xf32> -> vector<32x128xf32>
    %cst_4 = arith.constant 0.000000e+00 : f32
    %6 = vector.broadcast %cst_4 : f32 to vector<32x128xf32>
    %7 = arith.maximumf %5, %6 : vector<32x128xf32>
    %8 = arith.mulf %7, %7 : vector<32x128xf32>
    %c0_5 = arith.constant 0 : index
    %c0_6 = arith.constant 0 : index
    %9 = vector.load %arg7[%c0_5, %c0_6] : memref<32x32xf32, #tpu.memory_space<vmem>>, vector<32x32xf32>
    %10 = arith.truncf %8 : vector<32x128xf32> to vector<32x128xbf16>
    %c0_7 = arith.constant 0 : index
    %c0_8 = arith.constant 0 : index
    %11 = vector.load %arg4[%c0_7, %c0_8] : memref<128x32xbf16, #tpu.memory_space<vmem>>, vector<128x32xbf16>
    %cst_9 = arith.constant dense<0.000000e+00> : vector<32x32xf32>
    %12 = tpu.matmul %10, %11, %cst_9 {dimension_numbers = #tpu.dot_dimension_numbers<[1], [0], [0], [1], [0, 0, 1, 1], [], []>} : vector<32x128xbf16>, vector<128x32xbf16>, vector<32x32xf32> -> vector<32x32xf32>
    %13 = arith.addf %9, %12 : vector<32x32xf32>
    %c0_10 = arith.constant 0 : index
    %c0_11 = arith.constant 0 : index
    %14 = vector.load %arg7[%c0_10, %c0_11] : memref<32x32xf32, #tpu.memory_space<vmem>>, vector<32x32xf32>
    tpu.vector_store %arg7[%c0_10, %c0_11], %13 {strides = array<i32>} : memref<32x32xf32, #tpu.memory_space<vmem>>, vector<32x32xf32>,
    %c0_i32_12 = arith.constant 0 : i32
    %15 = arith.cmpi eq, %arg1, %c0_i32_12 : i32
    %16 = arith.extui %15 : i1 to i32
    %c0_i32_13 = arith.constant 0 : i32
    %17 = arith.cmpi ne, %16, %c0_i32_13 : i32
    scf.if %17 {
      %c0_14 = arith.constant 0 : index
      %c0_15 = arith.constant 0 : index
      %18 = vector.load %arg2[%c0_14, %c0_15] : memref<32x32xf32, #tpu.memory_space<vmem>>, vector<32x32xf32>
      %c0_16 = arith.constant 0 : index
      %c0_17 = arith.constant 0 : index
      %19 = vector.load %arg7[%c0_16, %c0_17] : memref<32x32xf32, #tpu.memory_space<vmem>>, vector<32x32xf32>
      %20 = arith.addf %18, %19 : vector<32x32xf32>
      %c0_18 = arith.constant 0 : index
      %c0_19 = arith.constant 0 : index
      %21 = vector.load %arg5[%c0_18, %c0_19] : memref<32x32xf32, #tpu.memory_space<vmem>>, vector<32x32xf32>
      tpu.vector_store %arg5[%c0_18, %c0_19], %20 {strides = array<i32>} : memref<32x32xf32, #tpu.memory_space<vmem>>, vector<32x32xf32>,
    } else {
    }
    return
  }
  func.func @transform_0(%arg0: i32, %arg1: i32) -> (i32, i32) {
    %c0_i32 = arith.constant 0 : i32
    %c0_i32_0 = arith.constant 0 : i32
    return %arg0, %c0_i32 : i32, i32
  }
  func.func @transform_1(%arg0: i32, %arg1: i32) -> (i32, i32) {
    %c0_i32 = arith.constant 0 : i32
    %c0_i32_0 = arith.constant 0 : i32
    return %c0_i32, %arg1 : i32, i32
  }
  func.func @transform_2(%arg0: i32, %arg1: i32) -> (i32, i32) {
    %c0_i32 = arith.constant 0 : i32
    %c0_i32_0 = arith.constant 0 : i32
    return %arg1, %c0_i32 : i32, i32
  }
  func.func @transform_3(%arg0: i32, %arg1: i32) -> (i32, i32) {
    %c0_i32 = arith.constant 0 : i32
    %c0_i32_0 = arith.constant 0 : i32
    return %arg0, %c0_i32 : i32, i32
  }
}

module attributes {stable_mosaic.version = 11 : i64} {
  func.func @_rmsnorm_matmul_kernel(%arg0: i32, %arg1: i32, %arg2: memref<2x32xf32, #tpu.memory_space<vmem>>, %arg3: memref<32x128xbf16, #tpu.memory_space<vmem>>, %arg4: memref<2x128xf32, #tpu.memory_space<vmem>>) attributes {dimension_semantics = [#tpu.dimension_semantics<parallel>, #tpu.dimension_semantics<parallel>], iteration_bounds = array<i64: 1, 1>, scalar_prefetch = 0 : i64, scratch_operands = 0 : i64, tpu.core_type = #tpu.core_type<tc>, window_params = [{transform_indices = @transform_0, window_bounds = array<i64: 2, 32>}, {transform_indices = @transform_1, window_bounds = array<i64: 32, 128>}, {transform_indices = @transform_2, window_bounds = array<i64: 2, 128>}]} {
    %c0 = arith.constant 0 : index
    %c0_0 = arith.constant 0 : index
    %0 = vector.load %arg2[%c0, %c0_0] : memref<2x32xf32, #tpu.memory_space<vmem>>, vector<2x32xf32>
    %1 = arith.mulf %0, %0 : vector<2x32xf32>
    %cst = arith.constant dense<0.000000e+00> : vector<2xf32>
    %2 = vector.multi_reduction <add>, %1, %cst [1] : vector<2x32xf32> to vector<2xf32>
    %3 = vector.shape_cast %2 : vector<2xf32> to vector<2x1xf32>
    %cst_1 = arith.constant 3.200000e+01 : f32
    %4 = vector.broadcast %cst_1 : f32 to vector<2x1xf32>
    %5 = arith.divf %3, %4 : vector<2x1xf32>
    %cst_2 = arith.constant 1.000000e+00 : f32
    %6 = vector.broadcast %cst_2 : f32 to vector<2x32xf32>
    %7 = arith.mulf %6, %0 : vector<2x32xf32>
    %cst_3 = arith.constant 1.1920929E-7 : f32
    %8 = vector.broadcast %cst_3 : f32 to vector<2x1xf32>
    %9 = arith.addf %5, %8 : vector<2x1xf32>
    %10 = math.rsqrt %9 : vector<2x1xf32>
    %11 = vector.broadcast %10 : vector<2x1xf32> to vector<2x32xf32>
    %12 = arith.mulf %7, %11 : vector<2x32xf32>
    %13 = arith.truncf %12 : vector<2x32xf32> to vector<2x32xbf16>
    %c0_4 = arith.constant 0 : index
    %c0_5 = arith.constant 0 : index
    %14 = vector.load %arg3[%c0_4, %c0_5] : memref<32x128xbf16, #tpu.memory_space<vmem>>, vector<32x128xbf16>
    %cst_6 = arith.constant dense<0.000000e+00> : vector<2x128xf32>
    %15 = tpu.matmul %13, %14, %cst_6 {dimension_numbers = #tpu.dot_dimension_numbers<[1], [0], [0], [1], [0, 0, 1, 1], [], []>} : vector<2x32xbf16>, vector<32x128xbf16>, vector<2x128xf32> -> vector<2x128xf32>
    %c0_7 = arith.constant 0 : index
    %c0_8 = arith.constant 0 : index
    %16 = vector.load %arg4[%c0_7, %c0_8] : memref<2x128xf32, #tpu.memory_space<vmem>>, vector<2x128xf32>
    tpu.vector_store %arg4[%c0_7, %c0_8], %15 {strides = array<i32>} : memref<2x128xf32, #tpu.memory_space<vmem>>, vector<2x128xf32>,
    return
  }
  func.func @transform_0(%arg0: i32, %arg1: i32) -> (i32, i32) {
    %c0_i32 = arith.constant 0 : i32
    %c0_i32_0 = arith.constant 0 : i32
    return %arg0, %c0_i32 : i32, i32
  }
  func.func @transform_1(%arg0: i32, %arg1: i32) -> (i32, i32) {
    %c0_i32 = arith.constant 0 : i32
    %c0_i32_0 = arith.constant 0 : i32
    return %c0_i32, %arg1 : i32, i32
  }
  func.func @transform_2(%arg0: i32, %arg1: i32) -> (i32, i32) {
    %c0_i32 = arith.constant 0 : i32
    return %arg0, %arg1 : i32, i32
  }
}

</mosaic_0001>

<llo_original>
// kernel: dragon_forward.10
$region0: #{dragon_forward.10}
  #allocation0 [shape = 'u32[]', space=smem, size = 0x4, offset = 0x4, fixed_abs, tag = 'smem constant byte address 0x4 - core index']
  #allocation1 [shape = 'u32[72,128]{1,0:T(1,128)}', space=vmem, size = 0x9000, scoped, tag = 'internal scratch']
  %s0 = inlined_call_operand.vmem [shape: f32[32,32], index: 0, kind: input, shape index: {}]
  %s1 = inlined_call_operand.vmem [shape: f32[32,32], index: 1, kind: output, shape index: {}]
  %s2 = sld [smem:[#allocation0]]
  $region14: #{dragon_forward.10} parent=0
    _
  %s4 = ssub.s32 1, %s2
  %s5 = scalar_select 0, %s4, %s2
  // Predicated region
  $region2: #{dragon_forward.10} parent=0 // pred_check
    _
  $region3: #{dragon_forward.10} parent=0 // pred_check_branch
    %7 = sbr.rel (0) target = $region5
  $region4: #{dragon_forward.10} parent=0 // pred_region
    _
  $region5: #{dragon_forward.10} parent=0 // pred_fallthru
    _
  %v8 = vld [vmem:[%s0] sm:$0xff]
  %v9 = vld [vmem:[%s0 + $0x8] sm:$0xff]
  %v10 = vld [vmem:[%s0 + $0x10] sm:$0xff]
  %v11 = vld [vmem:[%s0 + $0x18] sm:$0xff]
  %v12 = vmul.f32 %v8, %v8
  %v13 = vmul.f32 %v9, %v9
  %v14 = vmul.f32 %v10, %v10
  %v15 = vmul.f32 %v11, %v11
  %vm16 = vcmask 261120
  %v17 = vsel %vm16, %v12, 0.0
  %18 = vadd.xlane.f32.xlu0 %v17
  %v19 = vpop.xlane.xlu0 %18
  %v20 = vsel %vm16, %v13, 0.0
  %21 = vadd.xlane.f32.xlu0 %v20
  %v22 = vpop.xlane.xlu0 %21
  %v23 = vsel %vm16, %v14, 0.0
  %24 = vadd.xlane.f32.xlu0 %v23
  %v25 = vpop.xlane.xlu0 %24
  %v26 = vsel %vm16, %v15, 0.0
  %27 = vadd.xlane.f32.xlu0 %v26
  %v28 = vpop.xlane.xlu0 %27
  %v29 = vrcp.pop 32.0
  %v30 = vmul.f32 32.0, %v29
  %v31 = vsub.f32 1.0, %v30
  %v32 = vmul.f32 %v29, %v31
  %v33 = vadd.f32 %v29, %v32
  %vm34 = vweird.f32 %v29
  %v35 = vsel %vm34, %v29, %v33
  %v36 = vmul.f32 %v19, %v35
  %v37 = vmul.f32 %v22, %v35
  %v38 = vmul.f32 %v25, %v35
  %v39 = vmul.f32 %v28, %v35
  %v40 = vadd.f32 %v36, 1.1920929e-07
  %v41 = vadd.f32 %v37, 1.1920929e-07
  %v42 = vadd.f32 %v38, 1.1920929e-07
  %v43 = vadd.f32 %v39, 1.1920929e-07
  %v44 = vrsqrt.pop %v40
  %v45 = vmul.f32 %v44, %v40
  %v46 = vmul.f32 %v45, %v44
  %v47 = vmul.f32 0.5, %v46
  %v48 = vsub.f32 1.5, %v47
  %v49 = vmul.f32 %v44, %v48
  %vm50 = vweird.f32 %v40
  %vm51 = vweird.f32 %v44
  %vm52 = vmor %vm50, %vm51
  %v53 = vsel %vm52, %v44, %v49
  %v54 = vrsqrt.pop %v41
  %v55 = vmul.f32 %v54, %v41
  %v56 = vmul.f32 %v55, %v54
  %v57 = vmul.f32 0.5, %v56
  %v58 = vsub.f32 1.5, %v57
  %v59 = vmul.f32 %v54, %v58
  %vm60 = vweird.f32 %v41
  %vm61 = vweird.f32 %v54
  %vm62 = vmor %vm60, %vm61
  %v63 = vsel %vm62, %v54, %v59
  %v64 = vrsqrt.pop %v42
  %v65 = vmul.f32 %v64, %v42
  %v66 = vmul.f32 %v65, %v64
  %v67 = vmul.f32 0.5, %v66
  %v68 = vsub.f32 1.5, %v67
  %v69 = vmul.f32 %v64, %v68
  %vm70 = vweird.f32 %v42
  %vm71 = vweird.f32 %v64
  %vm72 = vmor %vm70, %vm71
  %v73 = vsel %vm72, %v64, %v69
  %v74 = vrsqrt.pop %v43
  %v75 = vmul.f32 %v74, %v43
  %v76 = vmul.f32 %v75, %v74
  %v77 = vmul.f32 0.5, %v76
  %v78 = vsub.f32 1.5, %v77
  %v79 = vmul.f32 %v74, %v78
  %vm80 = vweird.f32 %v43
  %vm81 = vweird.f32 %v74
  %vm82 = vmor %vm80, %vm81
  %v83 = vsel %vm82, %v74, %v79
  %v84 = vmul.f32 %v8, %v53
  %v85 = vmul.f32 %v9, %v63
  %v86 = vmul.f32 %v10, %v73
  %v87 = vmul.f32 %v11, %v83
  %88 = vst.msk [vmem:[%s1] sm:$0xff] %vm16, %v84
  %89 = vst.msk [vmem:[%s1 + $0x8] sm:$0xff] %vm16, %v85
  %90 = vst.msk [vmem:[%s1 + $0x10] sm:$0xff] %vm16, %v86
  %91 = vst.msk [vmem:[%s1 + $0x18] sm:$0xff] %vm16, %v87
  // Predicated region
  $region6: #{dragon_forward.10} parent=0 // pred_check
    _
  $region7: #{dragon_forward.10} parent=0 // pred_check_branch
    %93 = sbr.rel (0) target = $region9
  $region8: #{dragon_forward.10} parent=0 // pred_region
    _
  $region9: #{dragon_forward.10} parent=0 // pred_fallthru
    _
  // Predicated region
  $region10: #{dragon_forward.10} parent=0 // pred_check
    _
  $region11: #{dragon_forward.10} parent=0 // pred_check_branch
    %95 = sbr.rel (0) target = $region13
  $region12: #{dragon_forward.10} parent=0 // pred_region
    _
  $region13: #{dragon_forward.10} parent=0 // pred_fallthru
    _

// kernel: dragon_forward.11
$region0: #{dragon_forward.11}
  #allocation0 [shape = 'u32[]', space=smem, size = 0x4, offset = 0x4, fixed_abs, tag = 'smem constant byte address 0x4 - core index']
  #allocation1 [shape = 'u32[72,128]{1,0:T(1,128)}', space=vmem, size = 0x9000, scoped, tag = 'internal scratch']
  #allocation2 [shape = 'bf16[32,32]{1,0:T(8,128)(2,1)}', space=vmem, size = 0x2000, scoped, tag = 'scratch operand']
  %s0 = inlined_call_operand.vmem [shape: f32[32,32], index: 0, kind: input, shape index: {}]
  %s1 = inlined_call_operand.vmem [shape: bf16[32,384], index: 1, kind: input, shape index: {}]
  %s2 = inlined_call_operand.vmem [shape: bf16[32,384], index: 2, kind: output, shape index: {}]
  %s3 = sld [smem:[#allocation0]]
  $region22: #{dragon_forward.11} parent=0
    _
  %s5 = ssub.s32 1, %s3
  %s6 = scalar_select 0, %s5, %s3
  // Predicated region
  $region2: #{dragon_forward.11} parent=0 // pred_check
    _
  $region3: #{dragon_forward.11} parent=0 // pred_check_branch
    %8 = sbr.rel (0) target = $region5
  $region4: #{dragon_forward.11} parent=0 // pred_region
    _
  $region5: #{dragon_forward.11} parent=0 // pred_fallthru
    _
  // Predicated region
  $region6: #{dragon_forward.11} parent=0 // pred_check
    _
  $region7: #{dragon_forward.11} parent=0 // pred_check_branch
    %10 = sbr.rel (0) target = $region9
  $region8: #{dragon_forward.11} parent=0 // pred_region
    _
  $region9: #{dragon_forward.11} parent=0 // pred_fallthru
    _
  %p12 = scmp.eq.s32.totalorder 0, 0
  // Predicated region
  $region10: #{dragon_forward.11} parent=0 // pred_check
    %p13 = pneg %p12
  $region11: #{dragon_forward.11} parent=0 // pred_check_branch
    %15 = sbr.rel (%p13) target = $region13
  $region12: #{dragon_forward.11} parent=0 // pred_region
    %v16 = vld [vmem:[%s0] sm:$0xff]
    %v17 = vld [vmem:[%s0 + $0x8] sm:$0xff]
    %v18 = vld [vmem:[%s0 + $0x10] sm:$0xff]
    %v19 = vld [vmem:[%s0 + $0x18] sm:$0xff]
    %v20 = vmul.f32 %v16, %v16
    %v21 = vmul.f32 %v17, %v17
    %v22 = vmul.f32 %v18, %v18
    %v23 = vmul.f32 %v19, %v19
    %vm24 = vcmask 261120
    %v25 = vsel %vm24, %v20, 0.0
    %26 = vadd.xlane.f32.xlu0 %v25
    %v27 = vpop.xlane.xlu0 %26
    %v28 = vsel %vm24, %v21, 0.0
    %29 = vadd.xlane.f32.xlu0 %v28
    %v30 = vpop.xlane.xlu0 %29
    %v31 = vsel %vm24, %v22, 0.0
    %32 = vadd.xlane.f32.xlu0 %v31
    %v33 = vpop.xlane.xlu0 %32
    %v34 = vsel %vm24, %v23, 0.0
    %35 = vadd.xlane.f32.xlu0 %v34
    %v36 = vpop.xlane.xlu0 %35
    %v37 = vrcp.pop 32.0
    %v38 = vmul.f32 32.0, %v37
    %v39 = vsub.f32 1.0, %v38
    %v40 = vmul.f32 %v37, %v39
    %v41 = vadd.f32 %v37, %v40
    %vm42 = vweird.f32 %v37
    %v43 = vsel %vm42, %v37, %v41
    %v44 = vmul.f32 %v27, %v43
    %v45 = vmul.f32 %v30, %v43
    %v46 = vmul.f32 %v33, %v43
    %v47 = vmul.f32 %v36, %v43
    %v48 = vadd.f32 %v44, 1.1920929e-07
    %v49 = vadd.f32 %v45, 1.1920929e-07
    %v50 = vadd.f32 %v46, 1.1920929e-07
    %v51 = vadd.f32 %v47, 1.1920929e-07
    %v52 = vrsqrt.pop %v48
    %v53 = vmul.f32 %v52, %v48
    %v54 = vmul.f32 %v53, %v52
    %v55 = vmul.f32 0.5, %v54
    %v56 = vsub.f32 1.5, %v55
    %v57 = vmul.f32 %v52, %v56
    %vm58 = vweird.f32 %v48
    %vm59 = vweird.f32 %v52
    %vm60 = vmor %vm58, %vm59
    %v61 = vsel %vm60, %v52, %v57
    %v62 = vrsqrt.pop %v49
    %v63 = vmul.f32 %v62, %v49
    %v64 = vmul.f32 %v63, %v62
    %v65 = vmul.f32 0.5, %v64
    %v66 = vsub.f32 1.5, %v65
    %v67 = vmul.f32 %v62, %v66
    %vm68 = vweird.f32 %v49
    %vm69 = vweird.f32 %v62
    %vm70 = vmor %vm68, %vm69
    %v71 = vsel %vm70, %v62, %v67
    %v72 = vrsqrt.pop %v50
    %v73 = vmul.f32 %v72, %v50
    %v74 = vmul.f32 %v73, %v72
    %v75 = vmul.f32 0.5, %v74
    %v76 = vsub.f32 1.5, %v75
    %v77 = vmul.f32 %v72, %v76
    %vm78 = vweird.f32 %v50
    %vm79 = vweird.f32 %v72
    %vm80 = vmor %vm78, %vm79
    %v81 = vsel %vm80, %v72, %v77
    %v82 = vrsqrt.pop %v51
    %v83 = vmul.f32 %v82, %v51
    %v84 = vmul.f32 %v83, %v82
    %v85 = vmul.f32 0.5, %v84
    %v86 = vsub.f32 1.5, %v85
    %v87 = vmul.f32 %v82, %v86
    %vm88 = vweird.f32 %v51
    %vm89 = vweird.f32 %v82
    %vm90 = vmor %vm88, %vm89
    %v91 = vsel %vm90, %v82, %v87
    %v92 = vmul.f32 %v16, %v61
    %v93 = vmul.f32 %v17, %v71
    %v94 = vmul.f32 %v18, %v81
    %v95 = vmul.f32 %v19, %v91
    %v96 = vpack.c.bf16 %v92, %v92
    %v97 = vpack.c.bf16 %v93, %v93
    %v98 = vpack.c.bf16 %v94, %v94
    %v99 = vpack.c.bf16 %v95, %v95
    %vm100 = vcmask 257024
    %101 = vst.msk [vmem:[#allocation2] sm:$0xf] %vm100, %v96
    %102 = vst.msk [vmem:[#allocation2 + $0x4] sm:$0xf] %vm100, %v97
    %103 = vst.msk [vmem:[#allocation2 + $0x8] sm:$0xf] %vm100, %v98
    %104 = vst.msk [vmem:[#allocation2 + $0xc] sm:$0xf] %vm100, %v99
  $region13: #{dragon_forward.11} parent=0 // pred_fallthru
    _
  %v105 = vld [vmem:[#allocation2] sm:$0xf]
  %v106 = vld [vmem:[#allocation2 + $0x4] sm:$0xf]
  %v107 = vld [vmem:[#allocation2 + $0x8] sm:$0xf]
  %v108 = vld [vmem:[#allocation2 + $0xc] sm:$0xf]
  %v109 = vld [vmem:[%s1] sm:$0xff]
  %v110 = vld [vmem:[%s1 + $0x8] sm:$0xf]
  %v111 = vld [vmem:[%s1 + $0xc] sm:$0xff]
  %v112 = vld [vmem:[%s1 + $0x14] sm:$0xf]
  %v113 = vld [vmem:[%s1 + $0x18] sm:$0xff]
  %v114 = vld [vmem:[%s1 + $0x20] sm:$0xf]
  %v115 = vld [vmem:[%s1 + $0x24] sm:$0xff]
  %v116 = vld [vmem:[%s1 + $0x2c] sm:$0xf]
  %v121 = vunpack.c.l.b16 %v105
  %v122 = vunpack.c.l.b16 %v106
  %v123 = vunpack.c.l.b16 %v107
  %v124 = vunpack.c.l.b16 %v108
  %v125 = vpack.c.b16 %v122, %v121
  %v126 = vpack.c.b16 %v124, %v123
  %v135 = vunpack.c.l.b16 %v109
  %v136 = vunpack.c.h.b16 %v109
  %v137 = vunpack.c.l.b16 %v110
  %v138 = vunpack.c.l.b16 %v111
  %v139 = vunpack.c.h.b16 %v111
  %v140 = vunpack.c.l.b16 %v112
  %v141 = vunpack.c.l.b16 %v113
  %v142 = vunpack.c.h.b16 %v113
  %v143 = vunpack.c.l.b16 %v114
  %v144 = vunpack.c.l.b16 %v115
  %v145 = vunpack.c.h.b16 %v115
  %v146 = vunpack.c.l.b16 %v116
  %v147 = vpack.c.b16 %v138, %v135
  %v148 = vpack.c.b16 %v139, %v136
  %v149 = vpack.c.b16 %v140, %v137
  %v150 = vpack.c.b16 %v144, %v141
  %v151 = vpack.c.b16 %v145, %v142
  %v152 = vpack.c.b16 %v146, %v143
  %vm159 = vcmask 261120
  %v161 = vsel %vm159, %v125, 0
  %v164 = vsel %vm159, %v126, 0
  %166 = vmatpush.bf16.msra.mxu0 0
  %167 = vmatpush.bf16.msra.mxu0 0
  %168 = vmatpush.bf16.msra.mxu0 0
  %169 = vmatpush.bf16.msra.mxu0 0
  %170 = vmatpush.bf16.msra.mxu0 0
  %171 = vmatpush.bf16.msra.mxu0 0
  %172 = vmatpush.bf16.msra.mxu0 %v150
  %173 = vmatpush.bf16.msra.mxu0 %v147
  %174 = vmatmul.bf16.gmra.mxu0 %v161
  %v175 = vpop.f32.mrf.mxu0
  %v176 = vadd.f32 0.0, %v175
  %v177 = vpop.f32.mrf.mxu0
  %v178 = vadd.f32 0.0, %v177
  %179 = vmatmul.bf16.gmra.mxu0 %v164
  %v180 = vpop.f32.mrf.mxu0
  %v181 = vadd.f32 0.0, %v180
  %v182 = vpop.f32.mrf.mxu0
  %v183 = vadd.f32 0.0, %v182
  %184 = vdwg.mxu0
  %185 = vmatpush.bf16.msra.mxu0 0
  %186 = vmatpush.bf16.msra.mxu0 0
  %187 = vmatpush.bf16.msra.mxu0 0
  %188 = vmatpush.bf16.msra.mxu0 0
  %189 = vmatpush.bf16.msra.mxu0 0
  %190 = vmatpush.bf16.msra.mxu0 0
  %191 = vmatpush.bf16.msra.mxu0 %v151
  %192 = vmatpush.bf16.msra.mxu0 %v148
  %193 = vmatmul.bf16.gmra.mxu0 %v161
  %v194 = vpop.f32.mrf.mxu0
  %v195 = vadd.f32 0.0, %v194
  %v196 = vpop.f32.mrf.mxu0
  %v197 = vadd.f32 0.0, %v196
  %198 = vmatmul.bf16.gmra.mxu0 %v164
  %v199 = vpop.f32.mrf.mxu0
  %v200 = vadd.f32 0.0, %v199
  %v201 = vpop.f32.mrf.mxu0
  %v202 = vadd.f32 0.0, %v201
  %203 = vdwg.mxu0
  %204 = vmatpush.bf16.msra.mxu0 0
  %205 = vmatpush.bf16.msra.mxu0 0
  %206 = vmatpush.bf16.msra.mxu0 0
  %207 = vmatpush.bf16.msra.mxu0 0
  %208 = vmatpush.bf16.msra.mxu0 0
  %209 = vmatpush.bf16.msra.mxu0 0
  %210 = vmatpush.bf16.msra.mxu0 %v152
  %211 = vmatpush.bf16.msra.mxu0 %v149
  %212 = vmatmul.bf16.gmra.mxu0 %v161
  %v213 = vpop.f32.mrf.mxu0
  %v214 = vadd.f32 0.0, %v213
  %v215 = vpop.f32.mrf.mxu0
  %v216 = vadd.f32 0.0, %v215
  %217 = vmatmul.bf16.gmra.mxu0 %v164
  %v218 = vpop.f32.mrf.mxu0
  %v219 = vadd.f32 0.0, %v218
  %v220 = vpop.f32.mrf.mxu0
  %v221 = vadd.f32 0.0, %v220
  %222 = vdwg.mxu0
  %v223 = vpack.c.bf16 %v195, %v176
  %v224 = vpack.c.bf16 %v214, %v214
  %v225 = vpack.c.bf16 %v197, %v178
  %v226 = vpack.c.bf16 %v216, %v216
  %v227 = vpack.c.bf16 %v200, %v181
  %v228 = vpack.c.bf16 %v219, %v219
  %v229 = vpack.c.bf16 %v202, %v183
  %v230 = vpack.c.bf16 %v221, %v221
  %231 = vst [vmem:[%s2] sm:$0xff] %v223
  %232 = vst [vmem:[%s2 + $0x8] sm:$0xf] %v224
  %233 = vst [vmem:[%s2 + $0xc] sm:$0xff] %v225
  %234 = vst [vmem:[%s2 + $0x14] sm:$0xf] %v226
  %235 = vst [vmem:[%s2 + $0x18] sm:$0xff] %v227
  %236 = vst [vmem:[%s2 + $0x20] sm:$0xf] %v228
  %237 = vst [vmem:[%s2 + $0x24] sm:$0xff] %v229
  %238 = vst [vmem:[%s2 + $0x2c] sm:$0xf] %v230
  // Predicated region
  $region14: #{dragon_forward.11} parent=0 // pred_check
    _
  $region15: #{dragon_forward.11} parent=0 // pred_check_branch
    %240 = sbr.rel (0) target = $region17
  $region16: #{dragon_forward.11} parent=0 // pred_region
    _
  $region17: #{dragon_forward.11} parent=0 // pred_fallthru
    _
  // Predicated region
  $region18: #{dragon_forward.11} parent=0 // pred_check
    _
  $region19: #{dragon_forward.11} parent=0 // pred_check_branch
    %242 = sbr.rel (0) target = $region21
  $region20: #{dragon_forward.11} parent=0 // pred_region
    _
  $region21: #{dragon_forward.11} parent=0 // pred_fallthru
    _

// kernel: dragon_forward.13
$region0: #{dragon_forward.13}
  #allocation0 [shape = 'u32[]', space=smem, size = 0x4, offset = 0x4, fixed_abs, tag = 'smem constant byte address 0x4 - core index']
  #allocation1 [shape = 'u32[72,128]{1,0:T(1,128)}', space=vmem, size = 0x9000, scoped, tag = 'internal scratch']
  %s0 = inlined_call_operand.vmem [shape: f32[2,16,32], index: 0, kind: input, shape index: {}, may-alias: {0,5}]
  %s1 = inlined_call_operand.vmem [shape: bf16[2,2,16,32], index: 1, kind: input, shape index: {}]
  %s2 = inlined_call_operand.vmem [shape: bf16[2,2,16,32], index: 2, kind: input, shape index: {}]
  %s3 = inlined_call_operand.vmem [shape: f32[2,32], index: 3, kind: input, shape index: {}]
  %s4 = inlined_call_operand.vmem [shape: bf16[2,32,32], index: 4, kind: input, shape index: {}]
  %s5 = inlined_call_operand.vmem [shape: f32[2,16,32], index: 5, kind: output, shape index: {}, may-alias: {0,5}]
  %s6 = sld [smem:[#allocation0]]
  $region53: #{dragon_forward.13} parent=0
    _
  %s8 = ssub.s32 1, %s6
  %s9 = scalar_select 0, %s8, %s6
  loop: start=0, step=1, limit=4
  $region2: #{dragon_forward.13} parent=0 // loop_pre_header
    _
  $region3: #{dragon_forward.13} parent=0 // loop_header
    %s11 = sphi 0, %s15
    %p12 = scmp.ge.s32.totalorder %s11, 4
    %s18 = sphi 0, %s37
    %s19 = sphi 0, %s33
    %s20 = sphi 0, %s29
    %s21 = sphi 0, %s18
    %s22 = sphi 0, %s19
    %s23 = sphi 0, %s20
    %s24 = sphi 0, %s21
    %s25 = sphi 0, %s22
    %s26 = sphi 0, %s23
    %s44 = sphi 0, %s46
    %s47 = sphi 0, %s44
    %s48 = sphi 0, %s47
    %s64 = sphi 0, %s48
    %s72 = sphi 0, %s74
    %s75 = sphi 0, %s72
    %s76 = sphi 0, %s75
    %s92 = sphi 0, %s76
    %s100 = sphi 0, %s102
    %s103 = sphi 0, %s100
    %s104 = sphi 0, %s103
    %s120 = sphi 0, %s104
    %s124 = sphi 0, %s124
    %s126 = sphi 0, %s124
    %s127 = sphi 0, %s126
    %s141 = sphi 0, %s127
    %s147 = sphi 0, %s149
    %s150 = sphi 0, %s147
    %s151 = sphi 0, %s150
    %s167 = sphi 0, %s151
    %s177 = sphi 0, %s179
    %s180 = sphi 0, %s177
    %s181 = sphi 0, %s180
    %s197 = sphi 0, %s181
  $region4: #{dragon_forward.13} parent=0 // loop_header_branch
    %14 = sbr.rel (%p12) target = $region8
  $region5: #{dragon_forward.13} parent=0 // loop_body
    %s16 = ssub.s32 %s11, 1
    %s17 = ssub.s32 %s11, 2
    %s27 = sadd.s32 1, %s20
    %p28 = scmp.ge.s32.totalorder %s27, 1
    %s29 = scalar_select %p28, 0, %s27
    %s30 = sadd.s32 1, %s19
    %s31 = scalar_select %p28, %s30, %s19
    %p32 = scmp.ge.s32.totalorder %s31, 1
    %s33 = scalar_select %p32, 0, %s31
    %s34 = sadd.s32 1, %s18
    %s35 = scalar_select %p32, %s34, %s18
    %p36 = scmp.ge.s32.totalorder %s35, 2
    %s37 = scalar_select %p36, 0, %s35
    %s38 = ssub.s32 %s18, %s37
    %s39 = ssub.s32 %s19, %s33
    %s40 = sor.u32 %s38, %s39
    %s41 = ssub.s32 %s20, %s29
    %s42 = sor.u32 %s40, %s41
    %p43 = scmp.eq.s32.totalorder %s42, 0
    %s45 = sadd.s32 %s44, 1
    %s46 = scalar_select %p43, %s44, %s45
    %p49 = pneg %p43
    %p50 = scmp.eq.s32.totalorder %s11, 1
    %p51 = por %p49, %p50
    %p52 = scmp.ne.s32.totalorder %s44, %s47
    %p53 = scmp.eq.s32.totalorder %s11, 0
    %p54 = por %p52, %p53
    %p55 = scmp.ne.s32.totalorder %s44, %s47
    %p56 = scmp.eq.s32.totalorder %s16, 1
    %p57 = por %p55, %p56
    %p58 = scmp.ne.s32.totalorder %s47, %s48
    %p59 = scmp.eq.s32.totalorder %s16, 0
    %p60 = por %p58, %p59
    %p61 = scmp.ne.s32.totalorder %s47, %s48
    %p62 = scmp.eq.s32.totalorder %s17, 1
    %p63 = por %p61, %p62
    %p65 = scmp.ne.s32.totalorder %s48, %s64
    %p66 = scmp.eq.s32.totalorder %s17, 0
    %p67 = por %p65, %p66
    %s68 = ssub.s32 %s18, %s37
    %s69 = ssub.s32 %s19, %s33
    %s70 = sor.u32 %s68, %s69
    %p71 = scmp.eq.s32.totalorder %s70, 0
    %s73 = sadd.s32 %s72, 1
    %s74 = scalar_select %p71, %s72, %s73
    %p77 = pneg %p71
    %p78 = scmp.eq.s32.totalorder %s11, 1
    %p79 = por %p77, %p78
    %p80 = scmp.ne.s32.totalorder %s72, %s75
    %p81 = scmp.eq.s32.totalorder %s11, 0
    %p82 = por %p80, %p81
    %p83 = scmp.ne.s32.totalorder %s72, %s75
    %p84 = scmp.eq.s32.totalorder %s16, 1
    %p85 = por %p83, %p84
    %p86 = scmp.ne.s32.totalorder %s75, %s76
    %p87 = scmp.eq.s32.totalorder %s16, 0
    %p88 = por %p86, %p87
    %p89 = scmp.ne.s32.totalorder %s75, %s76
    %p90 = scmp.eq.s32.totalorder %s17, 1
    %p91 = por %p89, %p90
    %p93 = scmp.ne.s32.totalorder %s76, %s92
    %p94 = scmp.eq.s32.totalorder %s17, 0
    %p95 = por %p93, %p94
    %s96 = ssub.s32 %s18, %s37
    %s97 = ssub.s32 %s19, %s33
    %s98 = sor.u32 %s96, %s97
    %p99 = scmp.eq.s32.totalorder %s98, 0
    %s101 = sadd.s32 %s100, 1
    %s102 = scalar_select %p99, %s100, %s101
    %p105 = pneg %p99
    %p106 = scmp.eq.s32.totalorder %s11, 1
    %p107 = por %p105, %p106
    %p108 = scmp.ne.s32.totalorder %s100, %s103
    %p109 = scmp.eq.s32.totalorder %s11, 0
    %p110 = por %p108, %p109
    %p111 = scmp.ne.s32.totalorder %s100, %s103
    %p112 = scmp.eq.s32.totalorder %s16, 1
    %p113 = por %p111, %p112
    %p114 = scmp.ne.s32.totalorder %s103, %s104
    %p115 = scmp.eq.s32.totalorder %s16, 0
    %p116 = por %p114, %p115
    %p117 = scmp.ne.s32.totalorder %s103, %s104
    %p118 = scmp.eq.s32.totalorder %s17, 1
    %p119 = por %p117, %p118
    %p121 = scmp.ne.s32.totalorder %s104, %s120
    %p122 = scmp.eq.s32.totalorder %s17, 0
    %p123 = por %p121, %p122
    %s125 = sadd.s32 %s124, 1
    %p128 = scmp.eq.s32.totalorder %s11, 1
    %p129 = scmp.ne.s32.totalorder %s124, %s126
    %p130 = scmp.eq.s32.totalorder %s11, 0
    %p131 = por %p129, %p130
    %p132 = scmp.ne.s32.totalorder %s124, %s126
    %p133 = scmp.eq.s32.totalorder %s16, 1
    %p134 = por %p132, %p133
    %p135 = scmp.ne.s32.totalorder %s126, %s127
    %p136 = scmp.eq.s32.totalorder %s16, 0
    %p137 = por %p135, %p136
    %p138 = scmp.ne.s32.totalorder %s126, %s127
    %p139 = scmp.eq.s32.totalorder %s17, 1
    %p140 = por %p138, %p139
    %p142 = scmp.ne.s32.totalorder %s127, %s141
    %p143 = scmp.eq.s32.totalorder %s17, 0
    %p144 = por %p142, %p143
    %s145 = ssub.s32 %s20, %s29
    %p146 = scmp.eq.s32.totalorder %s145, 0
    %s148 = sadd.s32 %s147, 1
    %s149 = scalar_select %p146, %s147, %s148
    %p152 = pneg %p146
    %p153 = scmp.eq.s32.totalorder %s11, 1
    %p154 = por %p152, %p153
    %p155 = scmp.ne.s32.totalorder %s147, %s150
    %p156 = scmp.eq.s32.totalorder %s11, 0
    %p157 = por %p155, %p156
    %p158 = scmp.ne.s32.totalorder %s147, %s150
    %p159 = scmp.eq.s32.totalorder %s16, 1
    %p160 = por %p158, %p159
    %p161 = scmp.ne.s32.totalorder %s150, %s151
    %p162 = scmp.eq.s32.totalorder %s16, 0
    %p163 = por %p161, %p162
    %p164 = scmp.ne.s32.totalorder %s150, %s151
    %p165 = scmp.eq.s32.totalorder %s17, 1
    %p166 = por %p164, %p165
    %p168 = scmp.ne.s32.totalorder %s151, %s167
    %p169 = scmp.eq.s32.totalorder %s17, 0
    %p170 = por %p168, %p169
    %s171 = ssub.s32 %s18, %s37
    %s172 = ssub.s32 %s19, %s33
    %s173 = sor.u32 %s171, %s172
    %s174 = ssub.s32 %s20, %s29
    %s175 = sor.u32 %s173, %s174
    %p176 = scmp.eq.s32.totalorder %s175, 0
    %s178 = sadd.s32 %s177, 1
    %s179 = scalar_select %p176, %s177, %s178
    %p182 = pneg %p176
    %p183 = scmp.eq.s32.totalorder %s11, 1
    %p184 = por %p182, %p183
    %p185 = scmp.ne.s32.totalorder %s177, %s180
    %p186 = scmp.eq.s32.totalorder %s11, 0
    %p187 = por %p185, %p186
    %p188 = scmp.ne.s32.totalorder %s177, %s180
    %p189 = scmp.eq.s32.totalorder %s16, 1
    %p190 = por %p188, %p189
    %p191 = scmp.ne.s32.totalorder %s180, %s181
    %p192 = scmp.eq.s32.totalorder %s16, 0
    %p193 = por %p191, %p192
    %p194 = scmp.ne.s32.totalorder %s180, %s181
    %p195 = scmp.eq.s32.totalorder %s17, 1
    %p196 = por %p194, %p195
    %p198 = scmp.ne.s32.totalorder %s181, %s197
    %p199 = scmp.eq.s32.totalorder %s17, 0
    %p200 = por %p198, %p199
    %p201 = scmp.le.s32.totalorder 1, %s11
    %p202 = scmp.lt.s32.totalorder %s11, 3
    %p203 = pnand %p201, %p202
    %p204 = pneg %p203
    // Predicated region
    $region9: #{dragon_forward.13} parent=5 // pred_check
      _
    $region10: #{dragon_forward.13} parent=5 // pred_check_branch
      %206 = sbr.rel (%p203) target = $region12
    $region11: #{dragon_forward.13} parent=5 // pred_region
      %s207 = ssub.s32 %s11, 1
      // Predicated region
      $region13: #{dragon_forward.13} parent=11 // pred_check
        %p208 = pneg %p137
      $region14: #{dragon_forward.13} parent=11 // pred_check_branch
        %210 = sbr.rel (%p208) target = $region16
      $region15: #{dragon_forward.13} parent=11 // pred_region
        _
      $region16: #{dragon_forward.13} parent=11 // pred_fallthru
        _
      // Predicated region
      $region17: #{dragon_forward.13} parent=11 // pred_check
        %p211 = pneg %p163
      $region18: #{dragon_forward.13} parent=11 // pred_check_branch
        %213 = sbr.rel (%p211) target = $region20
      $region19: #{dragon_forward.13} parent=11 // pred_region
        %p214 = scmp.lt.s32.totalorder %s23, 0
        %s215 = scalar_select %p214, %s23, 0
        %s216 = smul.addr %s215, 4
        %s217 = scalar_lea.vmem %s4, %s216
      $region20: #{dragon_forward.13} parent=11 // pred_fallthru
        _
    $region12: #{dragon_forward.13} parent=5 // pred_fallthru
      _
    %p218 = scmp.lt.s32.totalorder %s11, 2
    // Predicated region
    $region21: #{dragon_forward.13} parent=5 // pred_check
      %p219 = pneg %p218
    $region22: #{dragon_forward.13} parent=5 // pred_check_branch
      %221 = sbr.rel (%p219) target = $region24
    $region23: #{dragon_forward.13} parent=5 // pred_region
      // Predicated region
      $region25: #{dragon_forward.13} parent=23 // pred_check
        %p222 = pneg %p54
      $region26: #{dragon_forward.13} parent=23 // pred_check_branch
        %224 = sbr.rel (%p222) target = $region28
      $region27: #{dragon_forward.13} parent=23 // pred_region
        %s225 = smul.u32 2, %s19
        %p226 = scmp.lt.s32.totalorder %s18, 1
        %s227 = scalar_select %p226, %s18, 1
        %p228 = scmp.lt.s32.totalorder %s225, 1
        %s229 = scalar_select %p228, %s225, 1
        %p230 = scmp.lt.s32.totalorder %s20, 0
        %s231 = scalar_select %p230, %s20, 0
        %s232 = sadd.s32 %s231, %s229
        %s233 = smul.addr %s227, 2
        %s234 = sadd.s32 %s232, %s233
        %s235 = smul.addr %s234, 8
        %s236 = scalar_lea.vmem %s0, %s235
        %s237 = smul.u32 2, %s19
      $region28: #{dragon_forward.13} parent=23 // pred_fallthru
        _
      // Predicated region
      $region29: #{dragon_forward.13} parent=23 // pred_check
        %p238 = pneg %p82
      $region30: #{dragon_forward.13} parent=23 // pred_check_branch
        %240 = sbr.rel (%p238) target = $region32
      $region31: #{dragon_forward.13} parent=23 // pred_region
        %s241 = smul.u32 2, %s19
        %p242 = scmp.lt.s32.totalorder %s18, 1
        %s243 = scalar_select %p242, %s18, 1
        %p244 = scmp.lt.s32.totalorder %s241, 1
        %s245 = scalar_select %p244, %s241, 1
        %s246 = smul.addr %s243, 4
        %s247 = sadd.s32 %s245, %s246
        %s248 = smul.addr %s247, 4
        %s249 = scalar_lea.vmem %s1, %s248
        %s250 = smul.u32 2, %s19
      $region32: #{dragon_forward.13} parent=23 // pred_fallthru
        _
      // Predicated region
      $region33: #{dragon_forward.13} parent=23 // pred_check
        %p251 = pneg %p110
      $region34: #{dragon_forward.13} parent=23 // pred_check_branch
        %253 = sbr.rel (%p251) target = $region36
      $region35: #{dragon_forward.13} parent=23 // pred_region
        %s254 = smul.u32 2, %s19
        %p255 = scmp.lt.s32.totalorder %s18, 1
        %s256 = scalar_select %p255, %s18, 1
        %p257 = scmp.lt.s32.totalorder %s254, 1
        %s258 = scalar_select %p257, %s254, 1
        %s259 = smul.addr %s256, 4
        %s260 = sadd.s32 %s258, %s259
        %s261 = smul.addr %s260, 4
        %s262 = scalar_lea.vmem %s2, %s261
        %s263 = smul.u32 2, %s19
      $region36: #{dragon_forward.13} parent=23 // pred_fallthru
        _
    $region24: #{dragon_forward.13} parent=5 // pred_fallthru
      _
    %p264 = scmp.le.s32.totalorder 1, %s11
    %p265 = scmp.lt.s32.totalorder %s11, 3
    %p266 = pnand %p264, %p265
    %p267 = pneg %p266
    // Predicated region
    $region37: #{dragon_forward.13} parent=5 // pred_check
      _
    $region38: #{dragon_forward.13} parent=5 // pred_check_branch
      %269 = sbr.rel (%p266) target = $region40
    $region39: #{dragon_forward.13} parent=5 // pred_region
      %s270 = ssub.s32 %s11, 1
      %s271 = smul.u32 2, %s22
      %p272 = scmp.lt.s32.totalorder %s21, 1
      %s273 = scalar_select %p272, %s21, 1
      %p274 = scmp.lt.s32.totalorder %s271, 1
      %s275 = scalar_select %p274, %s271, 1
      %p276 = scmp.lt.s32.totalorder %s23, 0
      %s277 = scalar_select %p276, %s23, 0
      %s278 = sadd.s32 %s277, %s275
      %s279 = smul.addr %s273, 2
      %s280 = sadd.s32 %s278, %s279
      %s281 = smul.addr %s280, 8
      %s282 = scalar_lea.vmem %s0, %s281
      %p283 = pneg %p60
      %p284 = pneg %p57
      %s285 = smul.u32 2, %s22
      %p286 = scmp.lt.s32.totalorder %s21, 1
      %s287 = scalar_select %p286, %s21, 1
      %p288 = scmp.lt.s32.totalorder %s285, 1
      %s289 = scalar_select %p288, %s285, 1
      %s290 = smul.addr %s287, 4
      %s291 = sadd.s32 %s289, %s290
      %s292 = smul.addr %s291, 4
      %s293 = scalar_lea.vmem %s1, %s292
      %p294 = pneg %p88
      %p295 = pneg %p85
      %s296 = smul.u32 2, %s22
      %p297 = scmp.lt.s32.totalorder %s21, 1
      %s298 = scalar_select %p297, %s21, 1
      %p299 = scmp.lt.s32.totalorder %s296, 1
      %s300 = scalar_select %p299, %s296, 1
      %s301 = smul.addr %s298, 4
      %s302 = sadd.s32 %s300, %s301
      %s303 = smul.addr %s302, 4
      %s304 = scalar_lea.vmem %s2, %s303
      %p305 = pneg %p116
      %p306 = pneg %p113
      %p307 = pneg %p137
      %p308 = pneg %p134
      %p309 = scmp.lt.s32.totalorder %s23, 0
      %s310 = scalar_select %p309, %s23, 0
      %s311 = smul.addr %s310, 4
      %s312 = scalar_lea.vmem %s4, %s311
      %p313 = pneg %p163
      %p314 = pneg %p160
      %p315 = pneg %p193
      %p316 = pneg %p190
      %s317 = smul.u32 2, %s22
      %p318 = scmp.lt.s32.totalorder %s21, 1
      %s319 = scalar_select %p318, %s21, 1
      %p320 = scmp.lt.s32.totalorder %s317, 1
      %s321 = scalar_select %p320, %s317, 1
      %p322 = scmp.lt.s32.totalorder %s23, 0
      %s323 = scalar_select %p322, %s23, 0
      %s324 = sadd.s32 %s323, %s321
      %s325 = smul.addr %s319, 2
      %s326 = sadd.s32 %s324, %s325
      %s327 = smul.addr %s326, 8
      %s328 = scalar_lea.vmem %s5, %s327
      %s329 = smul.u32 2, %s22
      %p330 = scmp.lt.s32.totalorder %s21, 1
      %s331 = scalar_select %p330, %s21, 1
      %p332 = scmp.lt.s32.totalorder %s329, 1
      %s333 = scalar_select %p332, %s329, 1
      %p334 = scmp.lt.s32.totalorder %s23, 0
      %s335 = scalar_select %p334, %s23, 0
      %s336 = sadd.s32 %s335, %s333
      %s337 = smul.addr %s331, 2
      %s338 = sadd.s32 %s336, %s337
      %s339 = smul.addr %s338, 8
      %s340 = scalar_lea.vmem %s0, %s339
      %s341 = smul.u32 2, %s22
      %s342 = smul.u32 2, %s22
      %p343 = scmp.lt.s32.totalorder %s21, 1
      %s344 = scalar_select %p343, %s21, 1
      %p345 = scmp.lt.s32.totalorder %s342, 1
      %s346 = scalar_select %p345, %s342, 1
      %s347 = smul.addr %s344, 4
      %s348 = sadd.s32 %s346, %s347
      %s349 = smul.addr %s348, 4
      %s350 = scalar_lea.vmem %s1, %s349
      %s351 = smul.u32 2, %s22
      %s352 = smul.u32 2, %s22
      %p353 = scmp.lt.s32.totalorder %s21, 1
      %s354 = scalar_select %p353, %s21, 1
      %p355 = scmp.lt.s32.totalorder %s352, 1
      %s356 = scalar_select %p355, %s352, 1
      %s357 = smul.addr %s354, 4
      %s358 = sadd.s32 %s356, %s357
      %s359 = smul.addr %s358, 4
      %s360 = scalar_lea.vmem %s2, %s359
      %s361 = smul.u32 2, %s22
      %p362 = scmp.lt.s32.totalorder %s23, 0
      %s363 = scalar_select %p362, %s23, 0
      %s364 = smul.addr %s363, 4
      %s365 = scalar_lea.vmem %s4, %s364
      %s366 = smul.u32 2, %s22
      %p367 = scmp.lt.s32.totalorder %s21, 1
      %s368 = scalar_select %p367, %s21, 1
      %p369 = scmp.lt.s32.totalorder %s366, 1
      %s370 = scalar_select %p369, %s366, 1
      %p371 = scmp.lt.s32.totalorder %s23, 0
      %s372 = scalar_select %p371, %s23, 0
      %s373 = sadd.s32 %s372, %s370
      %s374 = smul.addr %s368, 2
      %s375 = sadd.s32 %s373, %s374
      %s376 = smul.addr %s375, 8
      %s377 = scalar_lea.vmem %s5, %s376
      %s378 = smul.u32 2, %s22
      %v380 = vld [vmem:[%s350] sm:$0xf]
      %v381 = vld [vmem:[%s350 + $0x4] sm:$0xf]
      %v382 = vunpack.c.l.bf16 %v380
      %v383 = vunpack.c.l.bf16 %v381
      %v384 = vmul.f32 %v382, %v382
      %v385 = vmul.f32 %v383, %v383
      %vm386 = vcmask 261120
      %v387 = vsel %vm386, %v384, 0.0
      %388 = vadd.xlane.f32.xlu0 %v387
      %v389 = vpop.xlane.xlu0 %388
      %v390 = vsel %vm386, %v385, 0.0
      %391 = vadd.xlane.f32.xlu0 %v390
      %v392 = vpop.xlane.xlu0 %391
      %v393 = vadd.f32 %v389, 0.0
      %v394 = vadd.f32 %v392, 0.0
      %s395 = scalar_lea.vmem %s350, 8
      %v396 = vld [vmem:[%s395] sm:$0xf]
      %v397 = vld [vmem:[%s395 + $0x4] sm:$0xf]
      %v398 = vunpack.c.l.bf16 %v396
      %v399 = vunpack.c.l.bf16 %v397
      %v400 = vmul.f32 %v398, %v398
      %v401 = vmul.f32 %v399, %v399
      %v402 = vsel %vm386, %v400, 0.0
      %403 = vadd.xlane.f32.xlu0 %v402
      %v404 = vpop.xlane.xlu0 %403
      %v405 = vsel %vm386, %v401, 0.0
      %406 = vadd.xlane.f32.xlu0 %v405
      %v407 = vpop.xlane.xlu0 %406
      %v408 = vadd.f32 %v393, %v404
      %v409 = vadd.f32 %v394, %v407
      %v410 = vmul.f32 %v408, 0.015625
      %v411 = vmul.f32 %v409, 0.015625
      %v412 = vadd.f32 %v410, 1.1920929e-07
      %v413 = vadd.f32 %v411, 1.1920929e-07
      %v414 = vrsqrt.pop %v412
      %v415 = vmul.f32 %v414, %v412
      %v416 = vmul.f32 %v415, %v414
      %v417 = vmul.f32 0.5, %v416
      %v418 = vsub.f32 1.5, %v417
      %v419 = vmul.f32 %v414, %v418
      %vm420 = vweird.f32 %v412
      %vm421 = vweird.f32 %v414
      %vm422 = vmor %vm420, %vm421
      %v423 = vsel %vm422, %v414, %v419
      %v424 = vrsqrt.pop %v413
      %v425 = vmul.f32 %v424, %v413
      %v426 = vmul.f32 %v425, %v424
      %v427 = vmul.f32 0.5, %v426
      %v428 = vsub.f32 1.5, %v427
      %v429 = vmul.f32 %v424, %v428
      %vm430 = vweird.f32 %v413
      %vm431 = vweird.f32 %v424
      %vm432 = vmor %vm430, %vm431
      %v433 = vsel %vm432, %v424, %v429
      %v434 = vld [vmem:[%s340] sm:$0xff]
      %v435 = vld [vmem:[%s340 + $0x8] sm:$0xff]
      %v436 = vld [vmem:[%s3] sm:$0x1]
      %v437 = vmul.f32 %v382, %v423
      %v438 = vmul.f32 %v383, %v433
      %v439 = vperm.slane %v436, 0
      %v440 = vmul.f32 %v437, %v439
      %v441 = vmul.f32 %v438, %v439
      %v442 = vld [vmem:[%s360] sm:$0xf]
      %v443 = vld [vmem:[%s360 + $0x4] sm:$0xf]
      %v444 = vunpack.c.l.bf16 %v442
      %v445 = vunpack.c.l.bf16 %v443
      %v446 = vadd.f32 %v440, %v444
      %v447 = vadd.f32 %v441, %v445
      %v448 = vmul.f32 %v446, 0.5
      %v449 = vmul.f32 %v447, 0.5
      %v450 = vpack.c.bf16 %v449, %v448
      %v451 = vld [vmem:[%s365] sm:$0xf]
      %v452 = vld [vmem:[%s365 + $0x4] sm:$0xf]
      %v453 = vld [vmem:[%s365 + $0x8] sm:$0xf]
      %v454 = vld [vmem:[%s365 + $0xc] sm:$0xf]
      %v459 = vunpack.c.l.b16 %v451
      %v460 = vunpack.c.l.b16 %v452
      %v461 = vunpack.c.l.b16 %v453
      %v462 = vunpack.c.l.b16 %v454
      %v463 = vpack.c.b16 %v460, %v459
      %v464 = vpack.c.b16 %v462, %v461
      %v468 = vsel %vm386, %v450, 0
      %470 = vmatpush.bf16.msra.mxu0 0
      %471 = vmatpush.bf16.msra.mxu0 0
      %472 = vmatpush.bf16.msra.mxu0 0
      %473 = vmatpush.bf16.msra.mxu0 0
      %474 = vmatpush.bf16.msra.mxu0 0
      %475 = vmatpush.bf16.msra.mxu0 0
      %476 = vmatpush.bf16.msra.mxu0 %v464
      %477 = vmatpush.bf16.msra.mxu0 %v463
      %478 = vmatmul.bf16.gmra.mxu0 %v468
      %v479 = vpop.f32.mrf.mxu0
      %v480 = vadd.f32 0.0, %v479
      %v481 = vpop.f32.mrf.mxu0
      %v482 = vadd.f32 0.0, %v481
      %483 = vdwg.mxu0
      %v484 = vadd.f32 %v434, %v480
      %v485 = vadd.f32 %v435, %v482
      %v486 = vld [vmem:[%s3 + $0x1] sm:$0x1]
      %v487 = vmul.f32 %v398, %v423
      %v488 = vmul.f32 %v399, %v433
      %v489 = vperm.slane %v486, 0
      %v490 = vmul.f32 %v487, %v489
      %v491 = vmul.f32 %v488, %v489
      %s492 = scalar_lea.vmem %s360, 8
      %v493 = vld [vmem:[%s492] sm:$0xf]
      %v494 = vld [vmem:[%s492 + $0x4] sm:$0xf]
      %v495 = vunpack.c.l.bf16 %v493
      %v496 = vunpack.c.l.bf16 %v494
      %v497 = vadd.f32 %v490, %v495
      %v498 = vadd.f32 %v491, %v496
      %v499 = vmul.f32 %v497, 0.5
      %v500 = vmul.f32 %v498, 0.5
      %v501 = vpack.c.bf16 %v500, %v499
      %s502 = scalar_lea.vmem %s365, 16
      %v503 = vld [vmem:[%s502] sm:$0xf]
      %v504 = vld [vmem:[%s502 + $0x4] sm:$0xf]
      %v505 = vld [vmem:[%s502 + $0x8] sm:$0xf]
      %v506 = vld [vmem:[%s502 + $0xc] sm:$0xf]
      %v511 = vunpack.c.l.b16 %v503
      %v512 = vunpack.c.l.b16 %v504
      %v513 = vunpack.c.l.b16 %v505
      %v514 = vunpack.c.l.b16 %v506
      %v515 = vpack.c.b16 %v512, %v511
      %v516 = vpack.c.b16 %v514, %v513
      %v520 = vsel %vm386, %v501, 0
      %522 = vmatpush.bf16.msra.mxu0 0
      %523 = vmatpush.bf16.msra.mxu0 0
      %524 = vmatpush.bf16.msra.mxu0 0
      %525 = vmatpush.bf16.msra.mxu0 0
      %526 = vmatpush.bf16.msra.mxu0 0
      %527 = vmatpush.bf16.msra.mxu0 0
      %528 = vmatpush.bf16.msra.mxu0 %v516
      %529 = vmatpush.bf16.msra.mxu0 %v515
      %530 = vmatmul.bf16.gmra.mxu0 %v520
      %v531 = vpop.f32.mrf.mxu0
      %v532 = vadd.f32 0.0, %v531
      %v533 = vpop.f32.mrf.mxu0
      %v534 = vadd.f32 0.0, %v533
      %535 = vdwg.mxu0
      %v536 = vadd.f32 %v484, %v532
      %v537 = vadd.f32 %v485, %v534
      %538 = vst.msk [vmem:[%s377] sm:$0xff] %vm386, %v536
      %539 = vst.msk [vmem:[%s377 + $0x8] sm:$0xff] %vm386, %v537
      %s540 = smul.u32 2, %s22
      %p541 = scmp.lt.s32.totalorder %s21, 1
      %s542 = scalar_select %p541, %s21, 1
      %p543 = scmp.lt.s32.totalorder %s540, 1
      %s544 = scalar_select %p543, %s540, 1
      %p545 = scmp.lt.s32.totalorder %s23, 0
      %s546 = scalar_select %p545, %s23, 0
      %s547 = sadd.s32 %s546, %s544
      %s548 = smul.addr %s542, 2
      %s549 = sadd.s32 %s547, %s548
      %s550 = smul.addr %s549, 8
      %s551 = scalar_lea.vmem %s5, %s550
      // Predicated region
      $region41: #{dragon_forward.13} parent=39 // pred_check
        %p552 = pneg %p190
      $region42: #{dragon_forward.13} parent=39 // pred_check_branch
        %554 = sbr.rel (%p552) target = $region44
      $region43: #{dragon_forward.13} parent=39 // pred_region
        %s555 = smul.u32 2, %s22
      $region44: #{dragon_forward.13} parent=39 // pred_fallthru
        _
    $region40: #{dragon_forward.13} parent=5 // pred_fallthru
      _
    %p556 = scmp.le.s32.totalorder 2, %s11
    // Predicated region
    $region45: #{dragon_forward.13} parent=5 // pred_check
      %p557 = pneg %p556
    $region46: #{dragon_forward.13} parent=5 // pred_check_branch
      %559 = sbr.rel (%p557) target = $region48
    $region47: #{dragon_forward.13} parent=5 // pred_region
      %s560 = ssub.s32 %s11, 2
      // Predicated region
      $region49: #{dragon_forward.13} parent=47 // pred_check
        %p561 = pneg %p196
      $region50: #{dragon_forward.13} parent=47 // pred_check_branch
        %563 = sbr.rel (%p561) target = $region52
      $region51: #{dragon_forward.13} parent=47 // pred_region
        %s564 = smul.u32 2, %s25
        %p565 = scmp.lt.s32.totalorder %s24, 1
        %s566 = scalar_select %p565, %s24, 1
        %p567 = scmp.lt.s32.totalorder %s564, 1
        %s568 = scalar_select %p567, %s564, 1
        %p569 = scmp.lt.s32.totalorder %s26, 0
        %s570 = scalar_select %p569, %s26, 0
        %s571 = sadd.s32 %s570, %s568
        %s572 = smul.addr %s566, 2
        %s573 = sadd.s32 %s571, %s572
        %s574 = smul.addr %s573, 8
        %s575 = scalar_lea.vmem %s5, %s574
      $region52: #{dragon_forward.13} parent=47 // pred_fallthru
        _
    $region48: #{dragon_forward.13} parent=5 // pred_fallthru
      _
  $region6: #{dragon_forward.13} parent=0 // loop_footer
    %s15 = sadd.s32 1, %s11
  $region7: #{dragon_forward.13} parent=0 // loop_footer_branch
    %10 = sbr.rel target = $region3
  $region8: #{dragon_forward.13} parent=0 // loop_exit
    _

// kernel: dragon_forward.12
$region0: #{dragon_forward.12}
  #allocation0 [shape = 'u32[]', space=smem, size = 0x4, offset = 0x4, fixed_abs, tag = 'smem constant byte address 0x4 - core index']
  #allocation1 [shape = 'u32[72,128]{1,0:T(1,128)}', space=vmem, size = 0x9000, scoped, tag = 'internal scratch']
  %s0 = inlined_call_operand.vmem [shape: bf16[2,2,4,16,32], index: 0, kind: input, shape index: {}]
  %s1 = inlined_call_operand.vmem [shape: bf16[2,2,2,16,32], index: 1, kind: input, shape index: {}]
  %s2 = inlined_call_operand.vmem [shape: bf16[2,2,16,32], index: 2, kind: output, shape index: {0}]
  %s3 = inlined_call_operand.vmem [shape: bf16[2,2,16,32], index: 3, kind: output, shape index: {1}]
  %4 = xla_tuple %s2, %s3
  %s5 = sld [smem:[#allocation0]]
  $region49: #{dragon_forward.12} parent=0
    _
  %s7 = ssub.s32 1, %s5
  %s8 = scalar_select 0, %s7, %s5
  loop: start=0, step=1, limit=6
  $region2: #{dragon_forward.12} parent=0 // loop_pre_header
    _
  $region3: #{dragon_forward.12} parent=0 // loop_header
    %s10 = sphi 0, %s14
    %p11 = scmp.ge.s32.totalorder %s10, 6
    %s17 = sphi 0, %s36
    %s18 = sphi 0, %s32
    %s19 = sphi 0, %s28
    %s20 = sphi 0, %s17
    %s21 = sphi 0, %s18
    %s22 = sphi 0, %s19
    %s23 = sphi 0, %s20
    %s24 = sphi 0, %s21
    %s25 = sphi 0, %s22
    %s41 = sphi 0, %s43
    %s44 = sphi 0, %s41
    %s45 = sphi 0, %s44
    %s61 = sphi 0, %s45
    %s71 = sphi 0, %s73
    %s74 = sphi 0, %s71
    %s75 = sphi 0, %s74
    %s91 = sphi 0, %s75
    %s101 = sphi 0, %s103
    %s104 = sphi 0, %s101
    %s105 = sphi 0, %s104
    %s121 = sphi 0, %s105
    %s131 = sphi 0, %s133
    %s134 = sphi 0, %s131
    %s135 = sphi 0, %s134
    %s151 = sphi 0, %s135
  $region4: #{dragon_forward.12} parent=0 // loop_header_branch
    %13 = sbr.rel (%p11) target = $region8
  $region5: #{dragon_forward.12} parent=0 // loop_body
    %s15 = ssub.s32 %s10, 1
    %s16 = ssub.s32 %s10, 2
    %s26 = sadd.s32 1, %s19
    %p27 = scmp.ge.s32.totalorder %s26, 1
    %s28 = scalar_select %p27, 0, %s26
    %s29 = sadd.s32 1, %s18
    %s30 = scalar_select %p27, %s29, %s18
    %p31 = scmp.ge.s32.totalorder %s30, 2
    %s32 = scalar_select %p31, 0, %s30
    %s33 = sadd.s32 1, %s17
    %s34 = scalar_select %p31, %s33, %s17
    %p35 = scmp.ge.s32.totalorder %s34, 2
    %s36 = scalar_select %p35, 0, %s34
    %s37 = ssub.s32 %s17, %s36
    %s38 = ssub.s32 %s18, %s32
    %s39 = sor.u32 %s37, %s38
    %p40 = scmp.eq.s32.totalorder %s39, 0
    %s42 = sadd.s32 %s41, 1
    %s43 = scalar_select %p40, %s41, %s42
    %p46 = pneg %p40
    %p47 = scmp.eq.s32.totalorder %s10, 3
    %p48 = por %p46, %p47
    %p49 = scmp.ne.s32.totalorder %s41, %s44
    %p50 = scmp.eq.s32.totalorder %s10, 0
    %p51 = por %p49, %p50
    %p52 = scmp.ne.s32.totalorder %s41, %s44
    %p53 = scmp.eq.s32.totalorder %s15, 3
    %p54 = por %p52, %p53
    %p55 = scmp.ne.s32.totalorder %s44, %s45
    %p56 = scmp.eq.s32.totalorder %s15, 0
    %p57 = por %p55, %p56
    %p58 = scmp.ne.s32.totalorder %s44, %s45
    %p59 = scmp.eq.s32.totalorder %s16, 3
    %p60 = por %p58, %p59
    %p62 = scmp.ne.s32.totalorder %s45, %s61
    %p63 = scmp.eq.s32.totalorder %s16, 0
    %p64 = por %p62, %p63
    %s65 = ssub.s32 %s17, %s36
    %s66 = ssub.s32 %s18, %s32
    %s67 = sor.u32 %s65, %s66
    %s68 = ssub.s32 %s19, %s28
    %s69 = sor.u32 %s67, %s68
    %p70 = scmp.eq.s32.totalorder %s69, 0
    %s72 = sadd.s32 %s71, 1
    %s73 = scalar_select %p70, %s71, %s72
    %p76 = pneg %p70
    %p77 = scmp.eq.s32.totalorder %s10, 3
    %p78 = por %p76, %p77
    %p79 = scmp.ne.s32.totalorder %s71, %s74
    %p80 = scmp.eq.s32.totalorder %s10, 0
    %p81 = por %p79, %p80
    %p82 = scmp.ne.s32.totalorder %s71, %s74
    %p83 = scmp.eq.s32.totalorder %s15, 3
    %p84 = por %p82, %p83
    %p85 = scmp.ne.s32.totalorder %s74, %s75
    %p86 = scmp.eq.s32.totalorder %s15, 0
    %p87 = por %p85, %p86
    %p88 = scmp.ne.s32.totalorder %s74, %s75
    %p89 = scmp.eq.s32.totalorder %s16, 3
    %p90 = por %p88, %p89
    %p92 = scmp.ne.s32.totalorder %s75, %s91
    %p93 = scmp.eq.s32.totalorder %s16, 0
    %p94 = por %p92, %p93
    %s95 = ssub.s32 %s17, %s36
    %s96 = ssub.s32 %s18, %s32
    %s97 = sor.u32 %s95, %s96
    %s98 = ssub.s32 %s19, %s28
    %s99 = sor.u32 %s97, %s98
    %p100 = scmp.eq.s32.totalorder %s99, 0
    %s102 = sadd.s32 %s101, 1
    %s103 = scalar_select %p100, %s101, %s102
    %p106 = pneg %p100
    %p107 = scmp.eq.s32.totalorder %s10, 3
    %p108 = por %p106, %p107
    %p109 = scmp.ne.s32.totalorder %s101, %s104
    %p110 = scmp.eq.s32.totalorder %s10, 0
    %p111 = por %p109, %p110
    %p112 = scmp.ne.s32.totalorder %s101, %s104
    %p113 = scmp.eq.s32.totalorder %s15, 3
    %p114 = por %p112, %p113
    %p115 = scmp.ne.s32.totalorder %s104, %s105
    %p116 = scmp.eq.s32.totalorder %s15, 0
    %p117 = por %p115, %p116
    %p118 = scmp.ne.s32.totalorder %s104, %s105
    %p119 = scmp.eq.s32.totalorder %s16, 3
    %p120 = por %p118, %p119
    %p122 = scmp.ne.s32.totalorder %s105, %s121
    %p123 = scmp.eq.s32.totalorder %s16, 0
    %p124 = por %p122, %p123
    %s125 = ssub.s32 %s17, %s36
    %s126 = ssub.s32 %s18, %s32
    %s127 = sor.u32 %s125, %s126
    %s128 = ssub.s32 %s19, %s28
    %s129 = sor.u32 %s127, %s128
    %p130 = scmp.eq.s32.totalorder %s129, 0
    %s132 = sadd.s32 %s131, 1
    %s133 = scalar_select %p130, %s131, %s132
    %p136 = pneg %p130
    %p137 = scmp.eq.s32.totalorder %s10, 3
    %p138 = por %p136, %p137
    %p139 = scmp.ne.s32.totalorder %s131, %s134
    %p140 = scmp.eq.s32.totalorder %s10, 0
    %p141 = por %p139, %p140
    %p142 = scmp.ne.s32.totalorder %s131, %s134
    %p143 = scmp.eq.s32.totalorder %s15, 3
    %p144 = por %p142, %p143
    %p145 = scmp.ne.s32.totalorder %s134, %s135
    %p146 = scmp.eq.s32.totalorder %s15, 0
    %p147 = por %p145, %p146
    %p148 = scmp.ne.s32.totalorder %s134, %s135
    %p149 = scmp.eq.s32.totalorder %s16, 3
    %p150 = por %p148, %p149
    %p152 = scmp.ne.s32.totalorder %s135, %s151
    %p153 = scmp.eq.s32.totalorder %s16, 0
    %p154 = por %p152, %p153
    %p155 = scmp.le.s32.totalorder 1, %s10
    %p156 = scmp.lt.s32.totalorder %s10, 5
    %p157 = pnand %p155, %p156
    %p158 = pneg %p157
    // Predicated region
    $region9: #{dragon_forward.12} parent=5 // pred_check
      _
    $region10: #{dragon_forward.12} parent=5 // pred_check_branch
      %160 = sbr.rel (%p157) target = $region12
    $region11: #{dragon_forward.12} parent=5 // pred_region
      %s161 = ssub.s32 %s10, 1
    $region12: #{dragon_forward.12} parent=5 // pred_fallthru
      _
    %p162 = scmp.lt.s32.totalorder %s10, 4
    // Predicated region
    $region13: #{dragon_forward.12} parent=5 // pred_check
      %p163 = pneg %p162
    $region14: #{dragon_forward.12} parent=5 // pred_check_branch
      %165 = sbr.rel (%p163) target = $region16
    $region15: #{dragon_forward.12} parent=5 // pred_region
      // Predicated region
      $region17: #{dragon_forward.12} parent=15 // pred_check
        %p166 = pneg %p51
      $region18: #{dragon_forward.12} parent=15 // pred_check_branch
        %168 = sbr.rel (%p166) target = $region20
      $region19: #{dragon_forward.12} parent=15 // pred_region
        %p169 = scmp.lt.s32.totalorder %s17, 1
        %s170 = scalar_select %p169, %s17, 1
        %p171 = scmp.lt.s32.totalorder %s18, 1
        %s172 = scalar_select %p171, %s18, 1
        %s173 = smul.addr %s172, 8
        %s174 = smul.addr %s170, 16
        %s175 = sadd.s32 %s173, %s174
        %s176 = smul.addr %s175, 4
        %s177 = scalar_lea.vmem %s0, %s176
      $region20: #{dragon_forward.12} parent=15 // pred_fallthru
        _
      // Predicated region
      $region21: #{dragon_forward.12} parent=15 // pred_check
        %p178 = pneg %p81
      $region22: #{dragon_forward.12} parent=15 // pred_check_branch
        %180 = sbr.rel (%p178) target = $region24
      $region23: #{dragon_forward.12} parent=15 // pred_region
        %s181 = smul.u32 2, %s19
        %p182 = scmp.lt.s32.totalorder %s17, 1
        %s183 = scalar_select %p182, %s17, 1
        %p184 = scmp.lt.s32.totalorder %s18, 1
        %s185 = scalar_select %p184, %s18, 1
        %p186 = scmp.lt.s32.totalorder %s181, 1
        %s187 = scalar_select %p186, %s181, 1
        %s188 = smul.addr %s185, 4
        %s189 = sadd.s32 %s187, %s188
        %s190 = smul.addr %s183, 8
        %s191 = sadd.s32 %s189, %s190
        %s192 = smul.addr %s191, 4
        %s193 = scalar_lea.vmem %s1, %s192
        %s194 = smul.u32 2, %s19
      $region24: #{dragon_forward.12} parent=15 // pred_fallthru
        _
    $region16: #{dragon_forward.12} parent=5 // pred_fallthru
      _
    %p195 = scmp.le.s32.totalorder 1, %s10
    %p196 = scmp.lt.s32.totalorder %s10, 5
    %p197 = pnand %p195, %p196
    %p198 = pneg %p197
    // Predicated region
    $region25: #{dragon_forward.12} parent=5 // pred_check
      _
    $region26: #{dragon_forward.12} parent=5 // pred_check_branch
      %200 = sbr.rel (%p197) target = $region28
    $region27: #{dragon_forward.12} parent=5 // pred_region
      %s201 = ssub.s32 %s10, 1
      %p202 = scmp.lt.s32.totalorder %s20, 1
      %s203 = scalar_select %p202, %s20, 1
      %p204 = scmp.lt.s32.totalorder %s21, 1
      %s205 = scalar_select %p204, %s21, 1
      %s206 = smul.addr %s205, 8
      %s207 = smul.addr %s203, 16
      %s208 = sadd.s32 %s206, %s207
      %s209 = smul.addr %s208, 4
      %s210 = scalar_lea.vmem %s0, %s209
      %p211 = pneg %p57
      %p212 = pneg %p54
      %s213 = smul.u32 2, %s22
      %p214 = scmp.lt.s32.totalorder %s20, 1
      %s215 = scalar_select %p214, %s20, 1
      %p216 = scmp.lt.s32.totalorder %s21, 1
      %s217 = scalar_select %p216, %s21, 1
      %p218 = scmp.lt.s32.totalorder %s213, 1
      %s219 = scalar_select %p218, %s213, 1
      %s220 = smul.addr %s217, 4
      %s221 = sadd.s32 %s219, %s220
      %s222 = smul.addr %s215, 8
      %s223 = sadd.s32 %s221, %s222
      %s224 = smul.addr %s223, 4
      %s225 = scalar_lea.vmem %s1, %s224
      %p226 = pneg %p87
      %p227 = pneg %p84
      %p228 = pneg %p117
      %p229 = pneg %p114
      %s230 = smul.u32 2, %s22
      %p231 = scmp.lt.s32.totalorder %s20, 1
      %s232 = scalar_select %p231, %s20, 1
      %p233 = scmp.lt.s32.totalorder %s21, 1
      %s234 = scalar_select %p233, %s21, 1
      %p235 = scmp.lt.s32.totalorder %s230, 1
      %s236 = scalar_select %p235, %s230, 1
      %s237 = smul.addr %s234, 2
      %s238 = sadd.s32 %s236, %s237
      %s239 = smul.addr %s232, 4
      %s240 = sadd.s32 %s238, %s239
      %s241 = smul.addr %s240, 4
      %s242 = scalar_lea.vmem %s2, %s241
      %p243 = pneg %p147
      %p244 = pneg %p144
      %s245 = smul.u32 2, %s22
      %p246 = scmp.lt.s32.totalorder %s20, 1
      %s247 = scalar_select %p246, %s20, 1
      %p248 = scmp.lt.s32.totalorder %s21, 1
      %s249 = scalar_select %p248, %s21, 1
      %p250 = scmp.lt.s32.totalorder %s245, 1
      %s251 = scalar_select %p250, %s245, 1
      %s252 = smul.addr %s249, 2
      %s253 = sadd.s32 %s251, %s252
      %s254 = smul.addr %s247, 4
      %s255 = sadd.s32 %s253, %s254
      %s256 = smul.addr %s255, 4
      %s257 = scalar_lea.vmem %s3, %s256
      %p258 = scmp.lt.s32.totalorder %s20, 1
      %s259 = scalar_select %p258, %s20, 1
      %p260 = scmp.lt.s32.totalorder %s21, 1
      %s261 = scalar_select %p260, %s21, 1
      %s262 = smul.addr %s261, 8
      %s263 = smul.addr %s259, 16
      %s264 = sadd.s32 %s262, %s263
      %s265 = smul.addr %s264, 4
      %s266 = scalar_lea.vmem %s0, %s265
      %s267 = smul.u32 2, %s22
      %p268 = scmp.lt.s32.totalorder %s20, 1
      %s269 = scalar_select %p268, %s20, 1
      %p270 = scmp.lt.s32.totalorder %s21, 1
      %s271 = scalar_select %p270, %s21, 1
      %p272 = scmp.lt.s32.totalorder %s267, 1
      %s273 = scalar_select %p272, %s267, 1
      %s274 = smul.addr %s271, 4
      %s275 = sadd.s32 %s273, %s274
      %s276 = smul.addr %s269, 8
      %s277 = sadd.s32 %s275, %s276
      %s278 = smul.addr %s277, 4
      %s279 = scalar_lea.vmem %s1, %s278
      %s280 = smul.u32 2, %s22
      %s281 = smul.u32 2, %s22
      %p282 = scmp.lt.s32.totalorder %s20, 1
      %s283 = scalar_select %p282, %s20, 1
      %p284 = scmp.lt.s32.totalorder %s21, 1
      %s285 = scalar_select %p284, %s21, 1
      %p286 = scmp.lt.s32.totalorder %s281, 1
      %s287 = scalar_select %p286, %s281, 1
      %s288 = smul.addr %s285, 2
      %s289 = sadd.s32 %s287, %s288
      %s290 = smul.addr %s283, 4
      %s291 = sadd.s32 %s289, %s290
      %s292 = smul.addr %s291, 4
      %s293 = scalar_lea.vmem %s2, %s292
      %s294 = smul.u32 2, %s22
      %s295 = smul.u32 2, %s22
      %p296 = scmp.lt.s32.totalorder %s20, 1
      %s297 = scalar_select %p296, %s20, 1
      %p298 = scmp.lt.s32.totalorder %s21, 1
      %s299 = scalar_select %p298, %s21, 1
      %p300 = scmp.lt.s32.totalorder %s295, 1
      %s301 = scalar_select %p300, %s295, 1
      %s302 = smul.addr %s299, 2
      %s303 = sadd.s32 %s301, %s302
      %s304 = smul.addr %s297, 4
      %s305 = sadd.s32 %s303, %s304
      %s306 = smul.addr %s305, 4
      %s307 = scalar_lea.vmem %s3, %s306
      %s308 = smul.u32 2, %s22
      %v310 = vld [vmem:[%s266] sm:$0xf]
      %v311 = vld [vmem:[%s266 + $0x4] sm:$0xf]
      %s312 = scalar_lea.vmem %s266, 8
      %v313 = vld [vmem:[%s312] sm:$0xf]
      %v314 = vld [vmem:[%s312 + $0x4] sm:$0xf]
      %s315 = scalar_lea.vmem %s266, 16
      %v316 = vld [vmem:[%s315] sm:$0xf]
      %v317 = vld [vmem:[%s315 + $0x4] sm:$0xf]
      %s318 = scalar_lea.vmem %s266, 24
      %v319 = vld [vmem:[%s318] sm:$0xf]
      %v320 = vld [vmem:[%s318 + $0x4] sm:$0xf]
      %v321 = vld [vmem:[%s279] sm:$0xf]
      %v322 = vld [vmem:[%s279 + $0x4] sm:$0xf]
      %s323 = scalar_lea.vmem %s279, 8
      %v324 = vld [vmem:[%s323] sm:$0xf]
      %v325 = vld [vmem:[%s323 + $0x4] sm:$0xf]
      %s326 = smul.u32 %s22, 16
      %v327 = vlaneseq
      %v328 = vshrl.u32 %v327, 7
      %v329 = vadd.s32 %v328, 8
      %v330 = vstv %s326
      %v331 = vadd.s32 %v330, %v328
      %v332 = vadd.s32 %v330, %v329
      %v333 = vlaneseq
      %v334 = vand.u32 %v333, 127
      %vm335 = vcmp.le.s32.totalorder %v334, %v331
      %vm336 = vcmp.le.s32.totalorder %v334, %v332
      %v339 = vunpack.c.l.b16 %v321
      %v340 = vunpack.c.l.b16 %v322
      %v341 = vpack.c.b16 %v340, %v339
      %v344 = vunpack.c.l.b16 %v310
      %v345 = vunpack.c.l.b16 %v311
      %v346 = vpack.c.b16 %v345, %v344
      %vm347 = vcmask 261120
      %v349 = vsel %vm347, %v341, 0
      %v352 = vsel %vm347, %v346, 0
      %354 = vmatpush.bf16.xpose.msra.mxu0 0
      %355 = vmatpush.bf16.xpose.msra.mxu0 0
      %356 = vmatpush.bf16.xpose.msra.mxu0 0
      %357 = vmatpush.bf16.xpose.msra.mxu0 0
      %358 = vmatpush.bf16.xpose.msra.mxu0 0
      %359 = vmatpush.bf16.xpose.msra.mxu0 0
      %360 = vmatpush.bf16.xpose.msra.mxu0 0
      %361 = vmatpush.bf16.xpose.msra.mxu0 %v352
      %362 = vmatmul.bf16.gmra.mxu0 %v349
      %v363 = vpop.f32.mrf.mxu0
      %v364 = vadd.f32 0.0, %v363
      %v365 = vpop.f32.mrf.mxu0
      %v366 = vadd.f32 0.0, %v365
      %367 = vdwg.mxu0
      %v368 = vmul.f32 %v364, 0.17677669
      %v369 = vmul.f32 %v366, 0.17677669
      %v370 = vsel %vm335, %v368, -1e+30
      %v371 = vsel %vm336, %v369, -1e+30
      %vm372 = vcmask 130048
      %v373 = vsel %vm372, %v370, -inf
      %374 = vmax.xlane.f32.xlu0 %v373
      %v375 = vpop.xlane.xlu0 %374
      %v376 = vsel %vm372, %v371, -inf
      %377 = vmax.xlane.f32.xlu0 %v376
      %v378 = vpop.xlane.xlu0 %377
      %v379 = vsub.f32 %v370, %v375
      %v380 = vsub.f32 %v371, %v378
      %v381 = vmul.f32 %v379, 1.442695
      %v382 = vpow.pop %v381
      %v383 = vmul.f32 %v380, 1.442695
      %v384 = vpow.pop %v383
      %v385 = vsel %vm372, %v382, 0.0
      %386 = vadd.xlane.f32.xlu0 %v385
      %v387 = vpop.xlane.xlu0 %386
      %v388 = vsel %vm372, %v384, 0.0
      %389 = vadd.xlane.f32.xlu0 %v388
      %v390 = vpop.xlane.xlu0 %389
      %v391 = vpack.c.bf16 %v384, %v382
      %v394 = vunpack.c.l.b16 %v313
      %v395 = vunpack.c.l.b16 %v314
      %v396 = vpack.c.b16 %v395, %v394
      %v399 = vsel %vm372, %v391, 0
      %401 = vmatpush.bf16.msra.mxu0 0
      %402 = vmatpush.bf16.msra.mxu0 0
      %403 = vmatpush.bf16.msra.mxu0 0
      %404 = vmatpush.bf16.msra.mxu0 0
      %405 = vmatpush.bf16.msra.mxu0 0
      %406 = vmatpush.bf16.msra.mxu0 0
      %407 = vmatpush.bf16.msra.mxu0 0
      %408 = vmatpush.bf16.msra.mxu0 %v396
      %409 = vmatmul.bf16.gmra.mxu0 %v399
      %v410 = vpop.f32.mrf.mxu0
      %v411 = vadd.f32 0.0, %v410
      %v412 = vpop.f32.mrf.mxu0
      %v413 = vadd.f32 0.0, %v412
      %414 = vdwg.mxu0
      %v415 = vrcp.pop %v387
      %v416 = vmul.f32 %v387, %v415
      %v417 = vsub.f32 1.0, %v416
      %v418 = vmul.f32 %v415, %v417
      %v419 = vadd.f32 %v415, %v418
      %vm420 = vweird.f32 %v387
      %vm421 = vweird.f32 %v415
      %vm422 = vmor %vm420, %vm421
      %v423 = vsel %vm422, %v415, %v419
      %v424 = vand.u32 2147483647, %v387
      %vm425 = vcmp.eq.f32.partialorder %v424, 8.507059e+37
      %v426 = vand.u32 %v387, 2147483648
      %v427 = vor.u32 1.1754944e-38, %v426
      %v428 = vsel %vm425, %v427, %v423
      %v429 = vmul.f32 %v411, %v428
      %v430 = vrcp.pop %v390
      %v431 = vmul.f32 %v390, %v430
      %v432 = vsub.f32 1.0, %v431
      %v433 = vmul.f32 %v430, %v432
      %v434 = vadd.f32 %v430, %v433
      %vm435 = vweird.f32 %v390
      %vm436 = vweird.f32 %v430
      %vm437 = vmor %vm435, %vm436
      %v438 = vsel %vm437, %v430, %v434
      %v439 = vand.u32 2147483647, %v390
      %vm440 = vcmp.eq.f32.partialorder %v439, 8.507059e+37
      %v441 = vand.u32 %v390, 2147483648
      %v442 = vor.u32 1.1754944e-38, %v441
      %v443 = vsel %vm440, %v442, %v438
      %v444 = vmul.f32 %v413, %v443
      %v445 = vpack.c.bf16 %v429, %v429
      %v446 = vpack.c.bf16 %v444, %v444
      %vm447 = vcmask 257024
      %448 = vst.msk [vmem:[%s293] sm:$0xf] %vm447, %v445
      %449 = vst.msk [vmem:[%s293 + $0x4] sm:$0xf] %vm447, %v446
      %v452 = vunpack.c.l.b16 %v324
      %v453 = vunpack.c.l.b16 %v325
      %v454 = vpack.c.b16 %v453, %v452
      %v457 = vunpack.c.l.b16 %v316
      %v458 = vunpack.c.l.b16 %v317
      %v459 = vpack.c.b16 %v458, %v457
      %v461 = vsel %vm347, %v454, 0
      %v464 = vsel %vm347, %v459, 0
      %466 = vmatpush.bf16.xpose.msra.mxu0 0
      %467 = vmatpush.bf16.xpose.msra.mxu0 0
      %468 = vmatpush.bf16.xpose.msra.mxu0 0
      %469 = vmatpush.bf16.xpose.msra.mxu0 0
      %470 = vmatpush.bf16.xpose.msra.mxu0 0
      %471 = vmatpush.bf16.xpose.msra.mxu0 0
      %472 = vmatpush.bf16.xpose.msra.mxu0 0
      %473 = vmatpush.bf16.xpose.msra.mxu0 %v464
      %474 = vmatmul.bf16.gmra.mxu0 %v461
      %v475 = vpop.f32.mrf.mxu0
      %v476 = vadd.f32 0.0, %v475
      %v477 = vpop.f32.mrf.mxu0
      %v478 = vadd.f32 0.0, %v477
      %479 = vdwg.mxu0
      %v480 = vmul.f32 %v476, 0.0625
      %v481 = vmul.f32 %v478, 0.0625
      %v482 = vsel %vm335, %v480, 0.0
      %v483 = vsel %vm336, %v481, 0.0
      %v484 = vpack.c.bf16 %v483, %v482
      %v487 = vunpack.c.l.b16 %v319
      %v488 = vunpack.c.l.b16 %v320
      %v489 = vpack.c.b16 %v488, %v487
      %v492 = vsel %vm372, %v484, 0
      %494 = vmatpush.bf16.msra.mxu0 0
      %495 = vmatpush.bf16.msra.mxu0 0
      %496 = vmatpush.bf16.msra.mxu0 0
      %497 = vmatpush.bf16.msra.mxu0 0
      %498 = vmatpush.bf16.msra.mxu0 0
      %499 = vmatpush.bf16.msra.mxu0 0
      %500 = vmatpush.bf16.msra.mxu0 0
      %501 = vmatpush.bf16.msra.mxu0 %v489
      %502 = vmatmul.bf16.gmra.mxu0 %v492
      %v503 = vpop.f32.mrf.mxu0
      %v504 = vadd.f32 0.0, %v503
      %v505 = vpop.f32.mrf.mxu0
      %v506 = vadd.f32 0.0, %v505
      %507 = vdwg.mxu0
      %v508 = vpack.c.bf16 %v504, %v504
      %v509 = vpack.c.bf16 %v506, %v506
      %510 = vst.msk [vmem:[%s307] sm:$0xf] %vm447, %v508
      %511 = vst.msk [vmem:[%s307 + $0x4] sm:$0xf] %vm447, %v509
      %s512 = smul.u32 2, %s22
      %p513 = scmp.lt.s32.totalorder %s20, 1
      %s514 = scalar_select %p513, %s20, 1
      %p515 = scmp.lt.s32.totalorder %s21, 1
      %s516 = scalar_select %p515, %s21, 1
      %p517 = scmp.lt.s32.totalorder %s512, 1
      %s518 = scalar_select %p517, %s512, 1
      %s519 = smul.addr %s516, 2
      %s520 = sadd.s32 %s518, %s519
      %s521 = smul.addr %s514, 4
      %s522 = sadd.s32 %s520, %s521
      %s523 = smul.addr %s522, 4
      %s524 = scalar_lea.vmem %s2, %s523
      %s525 = smul.u32 2, %s22
      %p526 = scmp.lt.s32.totalorder %s20, 1
      %s527 = scalar_select %p526, %s20, 1
      %p528 = scmp.lt.s32.totalorder %s21, 1
      %s529 = scalar_select %p528, %s21, 1
      %p530 = scmp.lt.s32.totalorder %s525, 1
      %s531 = scalar_select %p530, %s525, 1
      %s532 = smul.addr %s529, 2
      %s533 = sadd.s32 %s531, %s532
      %s534 = smul.addr %s527, 4
      %s535 = sadd.s32 %s533, %s534
      %s536 = smul.addr %s535, 4
      %s537 = scalar_lea.vmem %s3, %s536
      // Predicated region
      $region29: #{dragon_forward.12} parent=27 // pred_check
        %p538 = pneg %p114
      $region30: #{dragon_forward.12} parent=27 // pred_check_branch
        %540 = sbr.rel (%p538) target = $region32
      $region31: #{dragon_forward.12} parent=27 // pred_region
        %s541 = smul.u32 2, %s22
      $region32: #{dragon_forward.12} parent=27 // pred_fallthru
        _
      // Predicated region
      $region33: #{dragon_forward.12} parent=27 // pred_check
        %p542 = pneg %p144
      $region34: #{dragon_forward.12} parent=27 // pred_check_branch
        %544 = sbr.rel (%p542) target = $region36
      $region35: #{dragon_forward.12} parent=27 // pred_region
        %s545 = smul.u32 2, %s22
      $region36: #{dragon_forward.12} parent=27 // pred_fallthru
        _
    $region28: #{dragon_forward.12} parent=5 // pred_fallthru
      _
    %p546 = scmp.le.s32.totalorder 2, %s10
    // Predicated region
    $region37: #{dragon_forward.12} parent=5 // pred_check
      %p547 = pneg %p546
    $region38: #{dragon_forward.12} parent=5 // pred_check_branch
      %549 = sbr.rel (%p547) target = $region40
    $region39: #{dragon_forward.12} parent=5 // pred_region
      %s550 = ssub.s32 %s10, 2
      // Predicated region
      $region41: #{dragon_forward.12} parent=39 // pred_check
        %p551 = pneg %p120
      $region42: #{dragon_forward.12} parent=39 // pred_check_branch
        %553 = sbr.rel (%p551) target = $region44
      $region43: #{dragon_forward.12} parent=39 // pred_region
        %s554 = smul.u32 2, %s25
        %p555 = scmp.lt.s32.totalorder %s23, 1
        %s556 = scalar_select %p555, %s23, 1
        %p557 = scmp.lt.s32.totalorder %s24, 1
        %s558 = scalar_select %p557, %s24, 1
        %p559 = scmp.lt.s32.totalorder %s554, 1
        %s560 = scalar_select %p559, %s554, 1
        %s561 = smul.addr %s558, 2
        %s562 = sadd.s32 %s560, %s561
        %s563 = smul.addr %s556, 4
        %s564 = sadd.s32 %s562, %s563
        %s565 = smul.addr %s564, 4
        %s566 = scalar_lea.vmem %s2, %s565
      $region44: #{dragon_forward.12} parent=39 // pred_fallthru
        _
      // Predicated region
      $region45: #{dragon_forward.12} parent=39 // pred_check
        %p567 = pneg %p150
      $region46: #{dragon_forward.12} parent=39 // pred_check_branch
        %569 = sbr.rel (%p567) target = $region48
      $region47: #{dragon_forward.12} parent=39 // pred_region
        %s570 = smul.u32 2, %s25
        %p571 = scmp.lt.s32.totalorder %s23, 1
        %s572 = scalar_select %p571, %s23, 1
        %p573 = scmp.lt.s32.totalorder %s24, 1
        %s574 = scalar_select %p573, %s24, 1
        %p575 = scmp.lt.s32.totalorder %s570, 1
        %s576 = scalar_select %p575, %s570, 1
        %s577 = smul.addr %s574, 2
        %s578 = sadd.s32 %s576, %s577
        %s579 = smul.addr %s572, 4
        %s580 = sadd.s32 %s578, %s579
        %s581 = smul.addr %s580, 4
        %s582 = scalar_lea.vmem %s3, %s581
      $region48: #{dragon_forward.12} parent=39 // pred_fallthru
        _
    $region40: #{dragon_forward.12} parent=5 // pred_fallthru
      _
  $region6: #{dragon_forward.12} parent=0 // loop_footer
    %s14 = sadd.s32 1, %s10
  $region7: #{dragon_forward.12} parent=0 // loop_footer_branch
    %9 = sbr.rel target = $region3
  $region8: #{dragon_forward.12} parent=0 // loop_exit
    _

// kernel: dragon_forward.14
$region0: #{dragon_forward.14}
  #allocation0 [shape = 'u32[]', space=smem, size = 0x4, offset = 0x4, fixed_abs, tag = 'smem constant byte address 0x4 - core index']
  #allocation1 [shape = 'u32[72,128]{1,0:T(1,128)}', space=vmem, size = 0x9000, scoped, tag = 'internal scratch']
  #allocation2 [shape = 'bf16[32,32]{1,0:T(8,128)(2,1)}', space=vmem, size = 0x2000, scoped, tag = 'scratch operand']
  #allocation3 [shape = 'f32[32,32]{1,0:T(8,128)}', space=vmem, size = 0x4000, scoped, tag = 'scratch operand']
  %s0 = inlined_call_operand.vmem [shape: f32[32,32], index: 0, kind: input, shape index: {}, may-alias: {0,3}]
  %s1 = inlined_call_operand.vmem [shape: bf16[32,128], index: 1, kind: input, shape index: {}]
  %s2 = inlined_call_operand.vmem [shape: bf16[128,32], index: 2, kind: input, shape index: {}]
  %s3 = inlined_call_operand.vmem [shape: f32[32,32], index: 3, kind: output, shape index: {}, may-alias: {0,3}]
  %s4 = sld [smem:[#allocation0]]
  $region30: #{dragon_forward.14} parent=0
    _
  %s6 = ssub.s32 1, %s4
  %s7 = scalar_select 0, %s6, %s4
  // Predicated region
  $region2: #{dragon_forward.14} parent=0 // pred_check
    _
  $region3: #{dragon_forward.14} parent=0 // pred_check_branch
    %9 = sbr.rel (0) target = $region5
  $region4: #{dragon_forward.14} parent=0 // pred_region
    _
  $region5: #{dragon_forward.14} parent=0 // pred_fallthru
    _
  // Predicated region
  $region6: #{dragon_forward.14} parent=0 // pred_check
    _
  $region7: #{dragon_forward.14} parent=0 // pred_check_branch
    %11 = sbr.rel (0) target = $region9
  $region8: #{dragon_forward.14} parent=0 // pred_region
    _
  $region9: #{dragon_forward.14} parent=0 // pred_fallthru
    _
  // Predicated region
  $region10: #{dragon_forward.14} parent=0 // pred_check
    _
  $region11: #{dragon_forward.14} parent=0 // pred_check_branch
    %13 = sbr.rel (0) target = $region13
  $region12: #{dragon_forward.14} parent=0 // pred_region
    _
  $region13: #{dragon_forward.14} parent=0 // pred_fallthru
    _
  %p15 = scmp.eq.s32.totalorder 0, 0
  // Predicated region
  $region14: #{dragon_forward.14} parent=0 // pred_check
    %p16 = pneg %p15
  $region15: #{dragon_forward.14} parent=0 // pred_check_branch
    %18 = sbr.rel (%p16) target = $region17
  $region16: #{dragon_forward.14} parent=0 // pred_region
    %v19 = vld [vmem:[%s0] sm:$0xff]
    %v20 = vld [vmem:[%s0 + $0x8] sm:$0xff]
    %v21 = vld [vmem:[%s0 + $0x10] sm:$0xff]
    %v22 = vld [vmem:[%s0 + $0x18] sm:$0xff]
    %v23 = vmul.f32 %v19, %v19
    %v24 = vmul.f32 %v20, %v20
    %v25 = vmul.f32 %v21, %v21
    %v26 = vmul.f32 %v22, %v22
    %vm27 = vcmask 261120
    %v28 = vsel %vm27, %v23, 0.0
    %29 = vadd.xlane.f32.xlu0 %v28
    %v30 = vpop.xlane.xlu0 %29
    %v31 = vsel %vm27, %v24, 0.0
    %32 = vadd.xlane.f32.xlu0 %v31
    %v33 = vpop.xlane.xlu0 %32
    %v34 = vsel %vm27, %v25, 0.0
    %35 = vadd.xlane.f32.xlu0 %v34
    %v36 = vpop.xlane.xlu0 %35
    %v37 = vsel %vm27, %v26, 0.0
    %38 = vadd.xlane.f32.xlu0 %v37
    %v39 = vpop.xlane.xlu0 %38
    %v40 = vrcp.pop 32.0
    %v41 = vmul.f32 32.0, %v40
    %v42 = vsub.f32 1.0, %v41
    %v43 = vmul.f32 %v40, %v42
    %v44 = vadd.f32 %v40, %v43
    %vm45 = vweird.f32 %v40
    %v46 = vsel %vm45, %v40, %v44
    %v47 = vmul.f32 %v30, %v46
    %v48 = vmul.f32 %v33, %v46
    %v49 = vmul.f32 %v36, %v46
    %v50 = vmul.f32 %v39, %v46
    %v51 = vadd.f32 %v47, 1.1920929e-07
    %v52 = vadd.f32 %v48, 1.1920929e-07
    %v53 = vadd.f32 %v49, 1.1920929e-07
    %v54 = vadd.f32 %v50, 1.1920929e-07
    %v55 = vrsqrt.pop %v51
    %v56 = vmul.f32 %v55, %v51
    %v57 = vmul.f32 %v56, %v55
    %v58 = vmul.f32 0.5, %v57
    %v59 = vsub.f32 1.5, %v58
    %v60 = vmul.f32 %v55, %v59
    %vm61 = vweird.f32 %v51
    %vm62 = vweird.f32 %v55
    %vm63 = vmor %vm61, %vm62
    %v64 = vsel %vm63, %v55, %v60
    %v65 = vrsqrt.pop %v52
    %v66 = vmul.f32 %v65, %v52
    %v67 = vmul.f32 %v66, %v65
    %v68 = vmul.f32 0.5, %v67
    %v69 = vsub.f32 1.5, %v68
    %v70 = vmul.f32 %v65, %v69
    %vm71 = vweird.f32 %v52
    %vm72 = vweird.f32 %v65
    %vm73 = vmor %vm71, %vm72
    %v74 = vsel %vm73, %v65, %v70
    %v75 = vrsqrt.pop %v53
    %v76 = vmul.f32 %v75, %v53
    %v77 = vmul.f32 %v76, %v75
    %v78 = vmul.f32 0.5, %v77
    %v79 = vsub.f32 1.5, %v78
    %v80 = vmul.f32 %v75, %v79
    %vm81 = vweird.f32 %v53
    %vm82 = vweird.f32 %v75
    %vm83 = vmor %vm81, %vm82
    %v84 = vsel %vm83, %v75, %v80
    %v85 = vrsqrt.pop %v54
    %v86 = vmul.f32 %v85, %v54
    %v87 = vmul.f32 %v86, %v85
    %v88 = vmul.f32 0.5, %v87
    %v89 = vsub.f32 1.5, %v88
    %v90 = vmul.f32 %v85, %v89
    %vm91 = vweird.f32 %v54
    %vm92 = vweird.f32 %v85
    %vm93 = vmor %vm91, %vm92
    %v94 = vsel %vm93, %v85, %v90
    %v95 = vmul.f32 %v19, %v64
    %v96 = vmul.f32 %v20, %v74
    %v97 = vmul.f32 %v21, %v84
    %v98 = vmul.f32 %v22, %v94
    %v99 = vpack.c.bf16 %v95, %v95
    %v100 = vpack.c.bf16 %v96, %v96
    %v101 = vpack.c.bf16 %v97, %v97
    %v102 = vpack.c.bf16 %v98, %v98
    %vm103 = vcmask 257024
    %104 = vst.msk [vmem:[#allocation2] sm:$0xf] %vm103, %v99
    %105 = vst.msk [vmem:[#allocation2 + $0x4] sm:$0xf] %vm103, %v100
    %106 = vst.msk [vmem:[#allocation2 + $0x8] sm:$0xf] %vm103, %v101
    %107 = vst.msk [vmem:[#allocation2 + $0xc] sm:$0xf] %vm103, %v102
    %108 = vst.msk [vmem:[#allocation3] sm:$0xff] %vm27, 0.0
    %109 = vst.msk [vmem:[#allocation3 + $0x8] sm:$0xff] %vm27, 0.0
    %110 = vst.msk [vmem:[#allocation3 + $0x10] sm:$0xff] %vm27, 0.0
    %111 = vst.msk [vmem:[#allocation3 + $0x18] sm:$0xff] %vm27, 0.0
  $region17: #{dragon_forward.14} parent=0 // pred_fallthru
    _
  %v112 = vld [vmem:[#allocation2] sm:$0xf]
  %v113 = vld [vmem:[#allocation2 + $0x4] sm:$0xf]
  %v114 = vld [vmem:[#allocation2 + $0x8] sm:$0xf]
  %v115 = vld [vmem:[#allocation2 + $0xc] sm:$0xf]
  %v116 = vld [vmem:[%s1] sm:$0xf]
  %v117 = vld [vmem:[%s1 + $0x4] sm:$0xf]
  %v118 = vld [vmem:[%s1 + $0x8] sm:$0xf]
  %v119 = vld [vmem:[%s1 + $0xc] sm:$0xf]
  %v124 = vunpack.c.l.b16 %v112
  %v125 = vunpack.c.l.b16 %v113
  %v126 = vunpack.c.l.b16 %v114
  %v127 = vunpack.c.l.b16 %v115
  %v128 = vpack.c.b16 %v125, %v124
  %v129 = vpack.c.b16 %v127, %v126
  %v134 = vunpack.c.l.b16 %v116
  %v135 = vunpack.c.l.b16 %v117
  %v136 = vunpack.c.l.b16 %v118
  %v137 = vunpack.c.l.b16 %v119
  %v138 = vpack.c.b16 %v135, %v134
  %v139 = vpack.c.b16 %v137, %v136
  %vm142 = vcmask 261120
  %v144 = vsel %vm142, %v128, 0
  %v147 = vsel %vm142, %v129, 0
  %149 = vmatpush.bf16.msra.mxu0 0
  %150 = vmatpush.bf16.msra.mxu0 0
  %151 = vmatpush.bf16.msra.mxu0 0
  %152 = vmatpush.bf16.msra.mxu0 0
  %153 = vmatpush.bf16.msra.mxu0 0
  %154 = vmatpush.bf16.msra.mxu0 0
  %155 = vmatpush.bf16.msra.mxu0 %v139
  %156 = vmatpush.bf16.msra.mxu0 %v138
  %157 = vmatmul.bf16.gmra.mxu0 %v144
  %v158 = vpop.f32.mrf.mxu0
  %v159 = vadd.f32 0.0, %v158
  %v160 = vpop.f32.mrf.mxu0
  %v161 = vadd.f32 0.0, %v160
  %162 = vmatmul.bf16.gmra.mxu0 %v147
  %v163 = vpop.f32.mrf.mxu0
  %v164 = vadd.f32 0.0, %v163
  %v165 = vpop.f32.mrf.mxu0
  %v166 = vadd.f32 0.0, %v165
  %167 = vdwg.mxu0
  %v168 = vmax.f32 %v159, 0.0
  %v169 = vmax.f32 %v161, 0.0
  %v170 = vmax.f32 %v164, 0.0
  %v171 = vmax.f32 %v166, 0.0
  %v172 = vmul.f32 %v168, %v168
  %v173 = vmul.f32 %v169, %v169
  %v174 = vmul.f32 %v170, %v170
  %v175 = vmul.f32 %v171, %v171
  %v176 = vld [vmem:[#allocation3] sm:$0xff]
  %v177 = vld [vmem:[#allocation3 + $0x8] sm:$0xff]
  %v178 = vld [vmem:[#allocation3 + $0x10] sm:$0xff]
  %v179 = vld [vmem:[#allocation3 + $0x18] sm:$0xff]
  %v180 = vpack.c.bf16 %v173, %v172
  %v181 = vpack.c.bf16 %v175, %v174
  %v182 = vld [vmem:[%s2] sm:$0xf]
  %v183 = vld [vmem:[%s2 + $0x4] sm:$0xf]
  %v184 = vld [vmem:[%s2 + $0x8] sm:$0xf]
  %v185 = vld [vmem:[%s2 + $0xc] sm:$0xf]
  %v186 = vld [vmem:[%s2 + $0x10] sm:$0xf]
  %v187 = vld [vmem:[%s2 + $0x14] sm:$0xf]
  %v188 = vld [vmem:[%s2 + $0x18] sm:$0xf]
  %v189 = vld [vmem:[%s2 + $0x1c] sm:$0xf]
  %v190 = vld [vmem:[%s2 + $0x20] sm:$0xf]
  %v191 = vld [vmem:[%s2 + $0x24] sm:$0xf]
  %v192 = vld [vmem:[%s2 + $0x28] sm:$0xf]
  %v193 = vld [vmem:[%s2 + $0x2c] sm:$0xf]
  %v194 = vld [vmem:[%s2 + $0x30] sm:$0xf]
  %v195 = vld [vmem:[%s2 + $0x34] sm:$0xf]
  %v196 = vld [vmem:[%s2 + $0x38] sm:$0xf]
  %v197 = vld [vmem:[%s2 + $0x3c] sm:$0xf]
  %v214 = vunpack.c.l.b16 %v182
  %v215 = vunpack.c.l.b16 %v183
  %v216 = vunpack.c.l.b16 %v184
  %v217 = vunpack.c.l.b16 %v185
  %v218 = vunpack.c.l.b16 %v186
  %v219 = vunpack.c.l.b16 %v187
  %v220 = vunpack.c.l.b16 %v188
  %v221 = vunpack.c.l.b16 %v189
  %v222 = vunpack.c.l.b16 %v190
  %v223 = vunpack.c.l.b16 %v191
  %v224 = vunpack.c.l.b16 %v192
  %v225 = vunpack.c.l.b16 %v193
  %v226 = vunpack.c.l.b16 %v194
  %v227 = vunpack.c.l.b16 %v195
  %v228 = vunpack.c.l.b16 %v196
  %v229 = vunpack.c.l.b16 %v197
  %v230 = vpack.c.b16 %v215, %v214
  %v231 = vpack.c.b16 %v217, %v216
  %v232 = vpack.c.b16 %v219, %v218
  %v233 = vpack.c.b16 %v221, %v220
  %v234 = vpack.c.b16 %v223, %v222
  %v235 = vpack.c.b16 %v225, %v224
  %v236 = vpack.c.b16 %v227, %v226
  %v237 = vpack.c.b16 %v229, %v228
  %246 = vmatpush.bf16.msra.mxu0 %v237
  %247 = vmatpush.bf16.msra.mxu0 %v236
  %248 = vmatpush.bf16.msra.mxu0 %v235
  %249 = vmatpush.bf16.msra.mxu0 %v234
  %250 = vmatpush.bf16.msra.mxu0 %v233
  %251 = vmatpush.bf16.msra.mxu0 %v232
  %252 = vmatpush.bf16.msra.mxu0 %v231
  %253 = vmatpush.bf16.msra.mxu0 %v230
  %254 = vmatmul.bf16.gmra.mxu0 %v180
  %v255 = vpop.f32.mrf.mxu0
  %v256 = vadd.f32 0.0, %v255
  %v257 = vpop.f32.mrf.mxu0
  %v258 = vadd.f32 0.0, %v257
  %259 = vmatmul.bf16.gmra.mxu0 %v181
  %v260 = vpop.f32.mrf.mxu0
  %v261 = vadd.f32 0.0, %v260
  %v262 = vpop.f32.mrf.mxu0
  %v263 = vadd.f32 0.0, %v262
  %264 = vdwg.mxu0
  %v265 = vadd.f32 %v176, %v256
  %v266 = vadd.f32 %v177, %v258
  %v267 = vadd.f32 %v178, %v261
  %v268 = vadd.f32 %v179, %v263
  %269 = vst.msk [vmem:[#allocation3] sm:$0xff] %vm142, %v265
  %270 = vst.msk [vmem:[#allocation3 + $0x8] sm:$0xff] %vm142, %v266
  %271 = vst.msk [vmem:[#allocation3 + $0x10] sm:$0xff] %vm142, %v267
  %272 = vst.msk [vmem:[#allocation3 + $0x18] sm:$0xff] %vm142, %v268
  // Predicated region
  $region18: #{dragon_forward.14} parent=0 // pred_check
    %p273 = pneg %p15
  $region19: #{dragon_forward.14} parent=0 // pred_check_branch
    %275 = sbr.rel (%p273) target = $region21
  $region20: #{dragon_forward.14} parent=0 // pred_region
    %v276 = vld [vmem:[%s0] sm:$0xff]
    %v277 = vld [vmem:[%s0 + $0x8] sm:$0xff]
    %v278 = vld [vmem:[%s0 + $0x10] sm:$0xff]
    %v279 = vld [vmem:[%s0 + $0x18] sm:$0xff]
    %v280 = vld [vmem:[#allocation3] sm:$0xff]
    %v281 = vld [vmem:[#allocation3 + $0x8] sm:$0xff]
    %v282 = vld [vmem:[#allocation3 + $0x10] sm:$0xff]
    %v283 = vld [vmem:[#allocation3 + $0x18] sm:$0xff]
    %v284 = vadd.f32 %v276, %v280
    %v285 = vadd.f32 %v277, %v281
    %v286 = vadd.f32 %v278, %v282
    %v287 = vadd.f32 %v279, %v283
    %288 = vst.msk [vmem:[%s3] sm:$0xff] %vm142, %v284
    %289 = vst.msk [vmem:[%s3 + $0x8] sm:$0xff] %vm142, %v285
    %290 = vst.msk [vmem:[%s3 + $0x10] sm:$0xff] %vm142, %v286
    %291 = vst.msk [vmem:[%s3 + $0x18] sm:$0xff] %vm142, %v287
  $region21: #{dragon_forward.14} parent=0 // pred_fallthru
    _
  // Predicated region
  $region22: #{dragon_forward.14} parent=0 // pred_check
    _
  $region23: #{dragon_forward.14} parent=0 // pred_check_branch
    %293 = sbr.rel (0) target = $region25
  $region24: #{dragon_forward.14} parent=0 // pred_region
    _
  $region25: #{dragon_forward.14} parent=0 // pred_fallthru
    _
  // Predicated region
  $region26: #{dragon_forward.14} parent=0 // pred_check
    _
  $region27: #{dragon_forward.14} parent=0 // pred_check_branch
    %295 = sbr.rel (0) target = $region29
  $region28: #{dragon_forward.14} parent=0 // pred_region
    _
  $region29: #{dragon_forward.14} parent=0 // pred_fallthru
    _

// kernel: dragon_forward.15
$region0: #{dragon_forward.15}
  #allocation0 [shape = 'u32[]', space=smem, size = 0x4, offset = 0x4, fixed_abs, tag = 'smem constant byte address 0x4 - core index']
  #allocation1 [shape = 'u32[72,128]{1,0:T(1,128)}', space=vmem, size = 0x9000, scoped, tag = 'internal scratch']
  #allocation2 [shape = 'bf16[32,32]{1,0:T(8,128)(2,1)}', space=vmem, size = 0x2000, scoped, tag = 'scratch operand']
  %s0 = inlined_call_operand.vmem [shape: f32[32,32], index: 0, kind: input, shape index: {}]
  %s1 = inlined_call_operand.vmem [shape: bf16[32,384], index: 1, kind: input, shape index: {}]
  %s2 = inlined_call_operand.vmem [shape: bf16[32,384], index: 2, kind: output, shape index: {}]
  %s3 = sld [smem:[#allocation0]]
  $region22: #{dragon_forward.15} parent=0
    _
  %s5 = ssub.s32 1, %s3
  %s6 = scalar_select 0, %s5, %s3
  // Predicated region
  $region2: #{dragon_forward.15} parent=0 // pred_check
    _
  $region3: #{dragon_forward.15} parent=0 // pred_check_branch
    %8 = sbr.rel (0) target = $region5
  $region4: #{dragon_forward.15} parent=0 // pred_region
    _
  $region5: #{dragon_forward.15} parent=0 // pred_fallthru
    _
  // Predicated region
  $region6: #{dragon_forward.15} parent=0 // pred_check
    _
  $region7: #{dragon_forward.15} parent=0 // pred_check_branch
    %10 = sbr.rel (0) target = $region9
  $region8: #{dragon_forward.15} parent=0 // pred_region
    _
  $region9: #{dragon_forward.15} parent=0 // pred_fallthru
    _
  %p12 = scmp.eq.s32.totalorder 0, 0
  // Predicated region
  $region10: #{dragon_forward.15} parent=0 // pred_check
    %p13 = pneg %p12
  $region11: #{dragon_forward.15} parent=0 // pred_check_branch
    %15 = sbr.rel (%p13) target = $region13
  $region12: #{dragon_forward.15} parent=0 // pred_region
    %v16 = vld [vmem:[%s0] sm:$0xff]
    %v17 = vld [vmem:[%s0 + $0x8] sm:$0xff]
    %v18 = vld [vmem:[%s0 + $0x10] sm:$0xff]
    %v19 = vld [vmem:[%s0 + $0x18] sm:$0xff]
    %v20 = vmul.f32 %v16, %v16
    %v21 = vmul.f32 %v17, %v17
    %v22 = vmul.f32 %v18, %v18
    %v23 = vmul.f32 %v19, %v19
    %vm24 = vcmask 261120
    %v25 = vsel %vm24, %v20, 0.0
    %26 = vadd.xlane.f32.xlu0 %v25
    %v27 = vpop.xlane.xlu0 %26
    %v28 = vsel %vm24, %v21, 0.0
    %29 = vadd.xlane.f32.xlu0 %v28
    %v30 = vpop.xlane.xlu0 %29
    %v31 = vsel %vm24, %v22, 0.0
    %32 = vadd.xlane.f32.xlu0 %v31
    %v33 = vpop.xlane.xlu0 %32
    %v34 = vsel %vm24, %v23, 0.0
    %35 = vadd.xlane.f32.xlu0 %v34
    %v36 = vpop.xlane.xlu0 %35
    %v37 = vrcp.pop 32.0
    %v38 = vmul.f32 32.0, %v37
    %v39 = vsub.f32 1.0, %v38
    %v40 = vmul.f32 %v37, %v39
    %v41 = vadd.f32 %v37, %v40
    %vm42 = vweird.f32 %v37
    %v43 = vsel %vm42, %v37, %v41
    %v44 = vmul.f32 %v27, %v43
    %v45 = vmul.f32 %v30, %v43
    %v46 = vmul.f32 %v33, %v43
    %v47 = vmul.f32 %v36, %v43
    %v48 = vmul.f32 %v16, 0.70710677
    %v49 = vmul.f32 %v17, 0.70710677
    %v50 = vmul.f32 %v18, 0.70710677
    %v51 = vmul.f32 %v19, 0.70710677
    %v52 = vadd.f32 %v44, 1.1920929e-07
    %v53 = vadd.f32 %v45, 1.1920929e-07
    %v54 = vadd.f32 %v46, 1.1920929e-07
    %v55 = vadd.f32 %v47, 1.1920929e-07
    %v56 = vrsqrt.pop %v52
    %v57 = vmul.f32 %v56, %v52
    %v58 = vmul.f32 %v57, %v56
    %v59 = vmul.f32 0.5, %v58
    %v60 = vsub.f32 1.5, %v59
    %v61 = vmul.f32 %v56, %v60
    %vm62 = vweird.f32 %v52
    %vm63 = vweird.f32 %v56
    %vm64 = vmor %vm62, %vm63
    %v65 = vsel %vm64, %v56, %v61
    %v66 = vrsqrt.pop %v53
    %v67 = vmul.f32 %v66, %v53
    %v68 = vmul.f32 %v67, %v66
    %v69 = vmul.f32 0.5, %v68
    %v70 = vsub.f32 1.5, %v69
    %v71 = vmul.f32 %v66, %v70
    %vm72 = vweird.f32 %v53
    %vm73 = vweird.f32 %v66
    %vm74 = vmor %vm72, %vm73
    %v75 = vsel %vm74, %v66, %v71
    %v76 = vrsqrt.pop %v54
    %v77 = vmul.f32 %v76, %v54
    %v78 = vmul.f32 %v77, %v76
    %v79 = vmul.f32 0.5, %v78
    %v80 = vsub.f32 1.5, %v79
    %v81 = vmul.f32 %v76, %v80
    %vm82 = vweird.f32 %v54
    %vm83 = vweird.f32 %v76
    %vm84 = vmor %vm82, %vm83
    %v85 = vsel %vm84, %v76, %v81
    %v86 = vrsqrt.pop %v55
    %v87 = vmul.f32 %v86, %v55
    %v88 = vmul.f32 %v87, %v86
    %v89 = vmul.f32 0.5, %v88
    %v90 = vsub.f32 1.5, %v89
    %v91 = vmul.f32 %v86, %v90
    %vm92 = vweird.f32 %v55
    %vm93 = vweird.f32 %v86
    %vm94 = vmor %vm92, %vm93
    %v95 = vsel %vm94, %v86, %v91
    %v96 = vmul.f32 %v48, %v65
    %v97 = vmul.f32 %v49, %v75
    %v98 = vmul.f32 %v50, %v85
    %v99 = vmul.f32 %v51, %v95
    %v100 = vpack.c.bf16 %v96, %v96
    %v101 = vpack.c.bf16 %v97, %v97
    %v102 = vpack.c.bf16 %v98, %v98
    %v103 = vpack.c.bf16 %v99, %v99
    %vm104 = vcmask 257024
    %105 = vst.msk [vmem:[#allocation2] sm:$0xf] %vm104, %v100
    %106 = vst.msk [vmem:[#allocation2 + $0x4] sm:$0xf] %vm104, %v101
    %107 = vst.msk [vmem:[#allocation2 + $0x8] sm:$0xf] %vm104, %v102
    %108 = vst.msk [vmem:[#allocation2 + $0xc] sm:$0xf] %vm104, %v103
  $region13: #{dragon_forward.15} parent=0 // pred_fallthru
    _
  %v109 = vld [vmem:[#allocation2] sm:$0xf]
  %v110 = vld [vmem:[#allocation2 + $0x4] sm:$0xf]
  %v111 = vld [vmem:[#allocation2 + $0x8] sm:$0xf]
  %v112 = vld [vmem:[#allocation2 + $0xc] sm:$0xf]
  %v113 = vld [vmem:[%s1] sm:$0xff]
  %v114 = vld [vmem:[%s1 + $0x8] sm:$0xf]
  %v115 = vld [vmem:[%s1 + $0xc] sm:$0xff]
  %v116 = vld [vmem:[%s1 + $0x14] sm:$0xf]
  %v117 = vld [vmem:[%s1 + $0x18] sm:$0xff]
  %v118 = vld [vmem:[%s1 + $0x20] sm:$0xf]
  %v119 = vld [vmem:[%s1 + $0x24] sm:$0xff]
  %v120 = vld [vmem:[%s1 + $0x2c] sm:$0xf]
  %v125 = vunpack.c.l.b16 %v109
  %v126 = vunpack.c.l.b16 %v110
  %v127 = vunpack.c.l.b16 %v111
  %v128 = vunpack.c.l.b16 %v112
  %v129 = vpack.c.b16 %v126, %v125
  %v130 = vpack.c.b16 %v128, %v127
  %v139 = vunpack.c.l.b16 %v113
  %v140 = vunpack.c.h.b16 %v113
  %v141 = vunpack.c.l.b16 %v114
  %v142 = vunpack.c.l.b16 %v115
  %v143 = vunpack.c.h.b16 %v115
  %v144 = vunpack.c.l.b16 %v116
  %v145 = vunpack.c.l.b16 %v117
  %v146 = vunpack.c.h.b16 %v117
  %v147 = vunpack.c.l.b16 %v118
  %v148 = vunpack.c.l.b16 %v119
  %v149 = vunpack.c.h.b16 %v119
  %v150 = vunpack.c.l.b16 %v120
  %v151 = vpack.c.b16 %v142, %v139
  %v152 = vpack.c.b16 %v143, %v140
  %v153 = vpack.c.b16 %v144, %v141
  %v154 = vpack.c.b16 %v148, %v145
  %v155 = vpack.c.b16 %v149, %v146
  %v156 = vpack.c.b16 %v150, %v147
  %vm163 = vcmask 261120
  %v165 = vsel %vm163, %v129, 0
  %v168 = vsel %vm163, %v130, 0
  %170 = vmatpush.bf16.msra.mxu0 0
  %171 = vmatpush.bf16.msra.mxu0 0
  %172 = vmatpush.bf16.msra.mxu0 0
  %173 = vmatpush.bf16.msra.mxu0 0
  %174 = vmatpush.bf16.msra.mxu0 0
  %175 = vmatpush.bf16.msra.mxu0 0
  %176 = vmatpush.bf16.msra.mxu0 %v154
  %177 = vmatpush.bf16.msra.mxu0 %v151
  %178 = vmatmul.bf16.gmra.mxu0 %v165
  %v179 = vpop.f32.mrf.mxu0
  %v180 = vadd.f32 0.0, %v179
  %v181 = vpop.f32.mrf.mxu0
  %v182 = vadd.f32 0.0, %v181
  %183 = vmatmul.bf16.gmra.mxu0 %v168
  %v184 = vpop.f32.mrf.mxu0
  %v185 = vadd.f32 0.0, %v184
  %v186 = vpop.f32.mrf.mxu0
  %v187 = vadd.f32 0.0, %v186
  %188 = vdwg.mxu0
  %189 = vmatpush.bf16.msra.mxu0 0
  %190 = vmatpush.bf16.msra.mxu0 0
  %191 = vmatpush.bf16.msra.mxu0 0
  %192 = vmatpush.bf16.msra.mxu0 0
  %193 = vmatpush.bf16.msra.mxu0 0
  %194 = vmatpush.bf16.msra.mxu0 0
  %195 = vmatpush.bf16.msra.mxu0 %v155
  %196 = vmatpush.bf16.msra.mxu0 %v152
  %197 = vmatmul.bf16.gmra.mxu0 %v165
  %v198 = vpop.f32.mrf.mxu0
  %v199 = vadd.f32 0.0, %v198
  %v200 = vpop.f32.mrf.mxu0
  %v201 = vadd.f32 0.0, %v200
  %202 = vmatmul.bf16.gmra.mxu0 %v168
  %v203 = vpop.f32.mrf.mxu0
  %v204 = vadd.f32 0.0, %v203
  %v205 = vpop.f32.mrf.mxu0
  %v206 = vadd.f32 0.0, %v205
  %207 = vdwg.mxu0
  %208 = vmatpush.bf16.msra.mxu0 0
  %209 = vmatpush.bf16.msra.mxu0 0
  %210 = vmatpush.bf16.msra.mxu0 0
  %211 = vmatpush.bf16.msra.mxu0 0
  %212 = vmatpush.bf16.msra.mxu0 0
  %213 = vmatpush.bf16.msra.mxu0 0
  %214 = vmatpush.bf16.msra.mxu0 %v156
  %215 = vmatpush.bf16.msra.mxu0 %v153
  %216 = vmatmul.bf16.gmra.mxu0 %v165
  %v217 = vpop.f32.mrf.mxu0
  %v218 = vadd.f32 0.0, %v217
  %v219 = vpop.f32.mrf.mxu0
  %v220 = vadd.f32 0.0, %v219
  %221 = vmatmul.bf16.gmra.mxu0 %v168
  %v222 = vpop.f32.mrf.mxu0
  %v223 = vadd.f32 0.0, %v222
  %v224 = vpop.f32.mrf.mxu0
  %v225 = vadd.f32 0.0, %v224
  %226 = vdwg.mxu0
  %v227 = vpack.c.bf16 %v199, %v180
  %v228 = vpack.c.bf16 %v218, %v218
  %v229 = vpack.c.bf16 %v201, %v182
  %v230 = vpack.c.bf16 %v220, %v220
  %v231 = vpack.c.bf16 %v204, %v185
  %v232 = vpack.c.bf16 %v223, %v223
  %v233 = vpack.c.bf16 %v206, %v187
  %v234 = vpack.c.bf16 %v225, %v225
  %235 = vst [vmem:[%s2] sm:$0xff] %v227
  %236 = vst [vmem:[%s2 + $0x8] sm:$0xf] %v228
  %237 = vst [vmem:[%s2 + $0xc] sm:$0xff] %v229
  %238 = vst [vmem:[%s2 + $0x14] sm:$0xf] %v230
  %239 = vst [vmem:[%s2 + $0x18] sm:$0xff] %v231
  %240 = vst [vmem:[%s2 + $0x20] sm:$0xf] %v232
  %241 = vst [vmem:[%s2 + $0x24] sm:$0xff] %v233
  %242 = vst [vmem:[%s2 + $0x2c] sm:$0xf] %v234
  // Predicated region
  $region14: #{dragon_forward.15} parent=0 // pred_check
    _
  $region15: #{dragon_forward.15} parent=0 // pred_check_branch
    %244 = sbr.rel (0) target = $region17
  $region16: #{dragon_forward.15} parent=0 // pred_region
    _
  $region17: #{dragon_forward.15} parent=0 // pred_fallthru
    _
  // Predicated region
  $region18: #{dragon_forward.15} parent=0 // pred_check
    _
  $region19: #{dragon_forward.15} parent=0 // pred_check_branch
    %246 = sbr.rel (0) target = $region21
  $region20: #{dragon_forward.15} parent=0 // pred_region
    _
  $region21: #{dragon_forward.15} parent=0 // pred_fallthru
    _

// kernel: dragon_forward.18
$region0: #{dragon_forward.18}
  #allocation0 [shape = 'u32[]', space=smem, size = 0x4, offset = 0x4, fixed_abs, tag = 'smem constant byte address 0x4 - core index']
  #allocation1 [shape = 'u32[72,128]{1,0:T(1,128)}', space=vmem, size = 0x9000, scoped, tag = 'internal scratch']
  #allocation2 [shape = 'bf16[32,32]{1,0:T(8,128)(2,1)}', space=vmem, size = 0x2000, scoped, tag = 'scratch operand']
  #allocation3 [shape = 'f32[32,32]{1,0:T(8,128)}', space=vmem, size = 0x4000, scoped, tag = 'scratch operand']
  %s0 = inlined_call_operand.vmem [shape: f32[32,32], index: 0, kind: input, shape index: {}, may-alias: {0,3}]
  %s1 = inlined_call_operand.vmem [shape: bf16[32,128], index: 1, kind: input, shape index: {}]
  %s2 = inlined_call_operand.vmem [shape: bf16[128,32], index: 2, kind: input, shape index: {}]
  %s3 = inlined_call_operand.vmem [shape: f32[32,32], index: 3, kind: output, shape index: {}, may-alias: {0,3}]
  %s4 = sld [smem:[#allocation0]]
  $region30: #{dragon_forward.18} parent=0
    _
  %s6 = ssub.s32 1, %s4
  %s7 = scalar_select 0, %s6, %s4
  // Predicated region
  $region2: #{dragon_forward.18} parent=0 // pred_check
    _
  $region3: #{dragon_forward.18} parent=0 // pred_check_branch
    %9 = sbr.rel (0) target = $region5
  $region4: #{dragon_forward.18} parent=0 // pred_region
    _
  $region5: #{dragon_forward.18} parent=0 // pred_fallthru
    _
  // Predicated region
  $region6: #{dragon_forward.18} parent=0 // pred_check
    _
  $region7: #{dragon_forward.18} parent=0 // pred_check_branch
    %11 = sbr.rel (0) target = $region9
  $region8: #{dragon_forward.18} parent=0 // pred_region
    _
  $region9: #{dragon_forward.18} parent=0 // pred_fallthru
    _
  // Predicated region
  $region10: #{dragon_forward.18} parent=0 // pred_check
    _
  $region11: #{dragon_forward.18} parent=0 // pred_check_branch
    %13 = sbr.rel (0) target = $region13
  $region12: #{dragon_forward.18} parent=0 // pred_region
    _
  $region13: #{dragon_forward.18} parent=0 // pred_fallthru
    _
  %p15 = scmp.eq.s32.totalorder 0, 0
  // Predicated region
  $region14: #{dragon_forward.18} parent=0 // pred_check
    %p16 = pneg %p15
  $region15: #{dragon_forward.18} parent=0 // pred_check_branch
    %18 = sbr.rel (%p16) target = $region17
  $region16: #{dragon_forward.18} parent=0 // pred_region
    %v19 = vld [vmem:[%s0] sm:$0xff]
    %v20 = vld [vmem:[%s0 + $0x8] sm:$0xff]
    %v21 = vld [vmem:[%s0 + $0x10] sm:$0xff]
    %v22 = vld [vmem:[%s0 + $0x18] sm:$0xff]
    %v23 = vmul.f32 %v19, %v19
    %v24 = vmul.f32 %v20, %v20
    %v25 = vmul.f32 %v21, %v21
    %v26 = vmul.f32 %v22, %v22
    %vm27 = vcmask 261120
    %v28 = vsel %vm27, %v23, 0.0
    %29 = vadd.xlane.f32.xlu0 %v28
    %v30 = vpop.xlane.xlu0 %29
    %v31 = vsel %vm27, %v24, 0.0
    %32 = vadd.xlane.f32.xlu0 %v31
    %v33 = vpop.xlane.xlu0 %32
    %v34 = vsel %vm27, %v25, 0.0
    %35 = vadd.xlane.f32.xlu0 %v34
    %v36 = vpop.xlane.xlu0 %35
    %v37 = vsel %vm27, %v26, 0.0
    %38 = vadd.xlane.f32.xlu0 %v37
    %v39 = vpop.xlane.xlu0 %38
    %v40 = vrcp.pop 32.0
    %v41 = vmul.f32 32.0, %v40
    %v42 = vsub.f32 1.0, %v41
    %v43 = vmul.f32 %v40, %v42
    %v44 = vadd.f32 %v40, %v43
    %vm45 = vweird.f32 %v40
    %v46 = vsel %vm45, %v40, %v44
    %v47 = vmul.f32 %v30, %v46
    %v48 = vmul.f32 %v33, %v46
    %v49 = vmul.f32 %v36, %v46
    %v50 = vmul.f32 %v39, %v46
    %v51 = vmul.f32 %v19, 0.70710677
    %v52 = vmul.f32 %v20, 0.70710677
    %v53 = vmul.f32 %v21, 0.70710677
    %v54 = vmul.f32 %v22, 0.70710677
    %v55 = vadd.f32 %v47, 1.1920929e-07
    %v56 = vadd.f32 %v48, 1.1920929e-07
    %v57 = vadd.f32 %v49, 1.1920929e-07
    %v58 = vadd.f32 %v50, 1.1920929e-07
    %v59 = vrsqrt.pop %v55
    %v60 = vmul.f32 %v59, %v55
    %v61 = vmul.f32 %v60, %v59
    %v62 = vmul.f32 0.5, %v61
    %v63 = vsub.f32 1.5, %v62
    %v64 = vmul.f32 %v59, %v63
    %vm65 = vweird.f32 %v55
    %vm66 = vweird.f32 %v59
    %vm67 = vmor %vm65, %vm66
    %v68 = vsel %vm67, %v59, %v64
    %v69 = vrsqrt.pop %v56
    %v70 = vmul.f32 %v69, %v56
    %v71 = vmul.f32 %v70, %v69
    %v72 = vmul.f32 0.5, %v71
    %v73 = vsub.f32 1.5, %v72
    %v74 = vmul.f32 %v69, %v73
    %vm75 = vweird.f32 %v56
    %vm76 = vweird.f32 %v69
    %vm77 = vmor %vm75, %vm76
    %v78 = vsel %vm77, %v69, %v74
    %v79 = vrsqrt.pop %v57
    %v80 = vmul.f32 %v79, %v57
    %v81 = vmul.f32 %v80, %v79
    %v82 = vmul.f32 0.5, %v81
    %v83 = vsub.f32 1.5, %v82
    %v84 = vmul.f32 %v79, %v83
    %vm85 = vweird.f32 %v57
    %vm86 = vweird.f32 %v79
    %vm87 = vmor %vm85, %vm86
    %v88 = vsel %vm87, %v79, %v84
    %v89 = vrsqrt.pop %v58
    %v90 = vmul.f32 %v89, %v58
    %v91 = vmul.f32 %v90, %v89
    %v92 = vmul.f32 0.5, %v91
    %v93 = vsub.f32 1.5, %v92
    %v94 = vmul.f32 %v89, %v93
    %vm95 = vweird.f32 %v58
    %vm96 = vweird.f32 %v89
    %vm97 = vmor %vm95, %vm96
    %v98 = vsel %vm97, %v89, %v94
    %v99 = vmul.f32 %v51, %v68
    %v100 = vmul.f32 %v52, %v78
    %v101 = vmul.f32 %v53, %v88
    %v102 = vmul.f32 %v54, %v98
    %v103 = vpack.c.bf16 %v99, %v99
    %v104 = vpack.c.bf16 %v100, %v100
    %v105 = vpack.c.bf16 %v101, %v101
    %v106 = vpack.c.bf16 %v102, %v102
    %vm107 = vcmask 257024
    %108 = vst.msk [vmem:[#allocation2] sm:$0xf] %vm107, %v103
    %109 = vst.msk [vmem:[#allocation2 + $0x4] sm:$0xf] %vm107, %v104
    %110 = vst.msk [vmem:[#allocation2 + $0x8] sm:$0xf] %vm107, %v105
    %111 = vst.msk [vmem:[#allocation2 + $0xc] sm:$0xf] %vm107, %v106
    %112 = vst.msk [vmem:[#allocation3] sm:$0xff] %vm27, 0.0
    %113 = vst.msk [vmem:[#allocation3 + $0x8] sm:$0xff] %vm27, 0.0
    %114 = vst.msk [vmem:[#allocation3 + $0x10] sm:$0xff] %vm27, 0.0
    %115 = vst.msk [vmem:[#allocation3 + $0x18] sm:$0xff] %vm27, 0.0
  $region17: #{dragon_forward.18} parent=0 // pred_fallthru
    _
  %v116 = vld [vmem:[#allocation2] sm:$0xf]
  %v117 = vld [vmem:[#allocation2 + $0x4] sm:$0xf]
  %v118 = vld [vmem:[#allocation2 + $0x8] sm:$0xf]
  %v119 = vld [vmem:[#allocation2 + $0xc] sm:$0xf]
  %v120 = vld [vmem:[%s1] sm:$0xf]
  %v121 = vld [vmem:[%s1 + $0x4] sm:$0xf]
  %v122 = vld [vmem:[%s1 + $0x8] sm:$0xf]
  %v123 = vld [vmem:[%s1 + $0xc] sm:$0xf]
  %v128 = vunpack.c.l.b16 %v116
  %v129 = vunpack.c.l.b16 %v117
  %v130 = vunpack.c.l.b16 %v118
  %v131 = vunpack.c.l.b16 %v119
  %v132 = vpack.c.b16 %v129, %v128
  %v133 = vpack.c.b16 %v131, %v130
  %v138 = vunpack.c.l.b16 %v120
  %v139 = vunpack.c.l.b16 %v121
  %v140 = vunpack.c.l.b16 %v122
  %v141 = vunpack.c.l.b16 %v123
  %v142 = vpack.c.b16 %v139, %v138
  %v143 = vpack.c.b16 %v141, %v140
  %vm146 = vcmask 261120
  %v148 = vsel %vm146, %v132, 0
  %v151 = vsel %vm146, %v133, 0
  %153 = vmatpush.bf16.msra.mxu0 0
  %154 = vmatpush.bf16.msra.mxu0 0
  %155 = vmatpush.bf16.msra.mxu0 0
  %156 = vmatpush.bf16.msra.mxu0 0
  %157 = vmatpush.bf16.msra.mxu0 0
  %158 = vmatpush.bf16.msra.mxu0 0
  %159 = vmatpush.bf16.msra.mxu0 %v143
  %160 = vmatpush.bf16.msra.mxu0 %v142
  %161 = vmatmul.bf16.gmra.mxu0 %v148
  %v162 = vpop.f32.mrf.mxu0
  %v163 = vadd.f32 0.0, %v162
  %v164 = vpop.f32.mrf.mxu0
  %v165 = vadd.f32 0.0, %v164
  %166 = vmatmul.bf16.gmra.mxu0 %v151
  %v167 = vpop.f32.mrf.mxu0
  %v168 = vadd.f32 0.0, %v167
  %v169 = vpop.f32.mrf.mxu0
  %v170 = vadd.f32 0.0, %v169
  %171 = vdwg.mxu0
  %v172 = vmax.f32 %v163, 0.0
  %v173 = vmax.f32 %v165, 0.0
  %v174 = vmax.f32 %v168, 0.0
  %v175 = vmax.f32 %v170, 0.0
  %v176 = vmul.f32 %v172, %v172
  %v177 = vmul.f32 %v173, %v173
  %v178 = vmul.f32 %v174, %v174
  %v179 = vmul.f32 %v175, %v175
  %v180 = vld [vmem:[#allocation3] sm:$0xff]
  %v181 = vld [vmem:[#allocation3 + $0x8] sm:$0xff]
  %v182 = vld [vmem:[#allocation3 + $0x10] sm:$0xff]
  %v183 = vld [vmem:[#allocation3 + $0x18] sm:$0xff]
  %v184 = vpack.c.bf16 %v177, %v176
  %v185 = vpack.c.bf16 %v179, %v178
  %v186 = vld [vmem:[%s2] sm:$0xf]
  %v187 = vld [vmem:[%s2 + $0x4] sm:$0xf]
  %v188 = vld [vmem:[%s2 + $0x8] sm:$0xf]
  %v189 = vld [vmem:[%s2 + $0xc] sm:$0xf]
  %v190 = vld [vmem:[%s2 + $0x10] sm:$0xf]
  %v191 = vld [vmem:[%s2 + $0x14] sm:$0xf]
  %v192 = vld [vmem:[%s2 + $0x18] sm:$0xf]
  %v193 = vld [vmem:[%s2 + $0x1c] sm:$0xf]
  %v194 = vld [vmem:[%s2 + $0x20] sm:$0xf]
  %v195 = vld [vmem:[%s2 + $0x24] sm:$0xf]
  %v196 = vld [vmem:[%s2 + $0x28] sm:$0xf]
  %v197 = vld [vmem:[%s2 + $0x2c] sm:$0xf]
  %v198 = vld [vmem:[%s2 + $0x30] sm:$0xf]
  %v199 = vld [vmem:[%s2 + $0x34] sm:$0xf]
  %v200 = vld [vmem:[%s2 + $0x38] sm:$0xf]
  %v201 = vld [vmem:[%s2 + $0x3c] sm:$0xf]
  %v218 = vunpack.c.l.b16 %v186
  %v219 = vunpack.c.l.b16 %v187
  %v220 = vunpack.c.l.b16 %v188
  %v221 = vunpack.c.l.b16 %v189
  %v222 = vunpack.c.l.b16 %v190
  %v223 = vunpack.c.l.b16 %v191
  %v224 = vunpack.c.l.b16 %v192
  %v225 = vunpack.c.l.b16 %v193
  %v226 = vunpack.c.l.b16 %v194
  %v227 = vunpack.c.l.b16 %v195
  %v228 = vunpack.c.l.b16 %v196
  %v229 = vunpack.c.l.b16 %v197
  %v230 = vunpack.c.l.b16 %v198
  %v231 = vunpack.c.l.b16 %v199
  %v232 = vunpack.c.l.b16 %v200
  %v233 = vunpack.c.l.b16 %v201
  %v234 = vpack.c.b16 %v219, %v218
  %v235 = vpack.c.b16 %v221, %v220
  %v236 = vpack.c.b16 %v223, %v222
  %v237 = vpack.c.b16 %v225, %v224
  %v238 = vpack.c.b16 %v227, %v226
  %v239 = vpack.c.b16 %v229, %v228
  %v240 = vpack.c.b16 %v231, %v230
  %v241 = vpack.c.b16 %v233, %v232
  %250 = vmatpush.bf16.msra.mxu0 %v241
  %251 = vmatpush.bf16.msra.mxu0 %v240
  %252 = vmatpush.bf16.msra.mxu0 %v239
  %253 = vmatpush.bf16.msra.mxu0 %v238
  %254 = vmatpush.bf16.msra.mxu0 %v237
  %255 = vmatpush.bf16.msra.mxu0 %v236
  %256 = vmatpush.bf16.msra.mxu0 %v235
  %257 = vmatpush.bf16.msra.mxu0 %v234
  %258 = vmatmul.bf16.gmra.mxu0 %v184
  %v259 = vpop.f32.mrf.mxu0
  %v260 = vadd.f32 0.0, %v259
  %v261 = vpop.f32.mrf.mxu0
  %v262 = vadd.f32 0.0, %v261
  %263 = vmatmul.bf16.gmra.mxu0 %v185
  %v264 = vpop.f32.mrf.mxu0
  %v265 = vadd.f32 0.0, %v264
  %v266 = vpop.f32.mrf.mxu0
  %v267 = vadd.f32 0.0, %v266
  %268 = vdwg.mxu0
  %v269 = vadd.f32 %v180, %v260
  %v270 = vadd.f32 %v181, %v262
  %v271 = vadd.f32 %v182, %v265
  %v272 = vadd.f32 %v183, %v267
  %273 = vst.msk [vmem:[#allocation3] sm:$0xff] %vm146, %v269
  %274 = vst.msk [vmem:[#allocation3 + $0x8] sm:$0xff] %vm146, %v270
  %275 = vst.msk [vmem:[#allocation3 + $0x10] sm:$0xff] %vm146, %v271
  %276 = vst.msk [vmem:[#allocation3 + $0x18] sm:$0xff] %vm146, %v272
  // Predicated region
  $region18: #{dragon_forward.18} parent=0 // pred_check
    %p277 = pneg %p15
  $region19: #{dragon_forward.18} parent=0 // pred_check_branch
    %279 = sbr.rel (%p277) target = $region21
  $region20: #{dragon_forward.18} parent=0 // pred_region
    %v280 = vld [vmem:[%s0] sm:$0xff]
    %v281 = vld [vmem:[%s0 + $0x8] sm:$0xff]
    %v282 = vld [vmem:[%s0 + $0x10] sm:$0xff]
    %v283 = vld [vmem:[%s0 + $0x18] sm:$0xff]
    %v284 = vld [vmem:[#allocation3] sm:$0xff]
    %v285 = vld [vmem:[#allocation3 + $0x8] sm:$0xff]
    %v286 = vld [vmem:[#allocation3 + $0x10] sm:$0xff]
    %v287 = vld [vmem:[#allocation3 + $0x18] sm:$0xff]
    %v288 = vadd.f32 %v280, %v284
    %v289 = vadd.f32 %v281, %v285
    %v290 = vadd.f32 %v282, %v286
    %v291 = vadd.f32 %v283, %v287
    %292 = vst.msk [vmem:[%s3] sm:$0xff] %vm146, %v288
    %293 = vst.msk [vmem:[%s3 + $0x8] sm:$0xff] %vm146, %v289
    %294 = vst.msk [vmem:[%s3 + $0x10] sm:$0xff] %vm146, %v290
    %295 = vst.msk [vmem:[%s3 + $0x18] sm:$0xff] %vm146, %v291
  $region21: #{dragon_forward.18} parent=0 // pred_fallthru
    _
  // Predicated region
  $region22: #{dragon_forward.18} parent=0 // pred_check
    _
  $region23: #{dragon_forward.18} parent=0 // pred_check_branch
    %297 = sbr.rel (0) target = $region25
  $region24: #{dragon_forward.18} parent=0 // pred_region
    _
  $region25: #{dragon_forward.18} parent=0 // pred_fallthru
    _
  // Predicated region
  $region26: #{dragon_forward.18} parent=0 // pred_check
    _
  $region27: #{dragon_forward.18} parent=0 // pred_check_branch
    %299 = sbr.rel (0) target = $region29
  $region28: #{dragon_forward.18} parent=0 // pred_region
    _
  $region29: #{dragon_forward.18} parent=0 // pred_fallthru
    _

// kernel: dragon_forward.19
$region0: #{dragon_forward.19}
  #allocation0 [shape = 'u32[]', space=smem, size = 0x4, offset = 0x4, fixed_abs, tag = 'smem constant byte address 0x4 - core index']
  #allocation1 [shape = 'u32[72,128]{1,0:T(1,128)}', space=vmem, size = 0x9000, scoped, tag = 'internal scratch']
  %s0 = inlined_call_operand.vmem [shape: f32[2,32], index: 0, kind: input, shape index: {}]
  %s1 = inlined_call_operand.vmem [shape: bf16[32,128], index: 1, kind: input, shape index: {}]
  %s2 = inlined_call_operand.hbm [shape: f32[2,128], index: 2, kind: output, shape index: {}]
  %s3 = sld [smem:[#allocation0]]
  $region18: #{dragon_forward.19} parent=0
    _
  %s5 = ssub.s32 1, %s3
  %s6 = scalar_select 0, %s5, %s3
  $region1: #{dragon_forward.19} parent=0
    #allocation2 [shape = 'u8[1024]{0}', space=vmem, size = 0x400, scoped, tag = 'output window, operand 0, single buffered']
    #allocation3 [shape = 's32[1]{0}', space=sflag, size = 0x4, scoped, tag = 'scoped memory for dragon_forward.19']
    %7 = vsyncpa [#allocation3], 0
    // Predicated region
    $region2: #{dragon_forward.19} parent=1 // pred_check
      _
    $region3: #{dragon_forward.19} parent=1 // pred_check_branch
      %9 = sbr.rel (0) target = $region5
    $region4: #{dragon_forward.19} parent=1 // pred_region
      _
    $region5: #{dragon_forward.19} parent=1 // pred_fallthru
      _
    // Predicated region
    $region6: #{dragon_forward.19} parent=1 // pred_check
      _
    $region7: #{dragon_forward.19} parent=1 // pred_check_branch
      %11 = sbr.rel (0) target = $region9
    $region8: #{dragon_forward.19} parent=1 // pred_region
      _
    $region9: #{dragon_forward.19} parent=1 // pred_fallthru
      _
    %v13 = vld [vmem:[%s0] sm:$0x3]
    %v14 = vmul.f32 %v13, %v13
    %vm15 = vcmask 254976
    %v16 = vsel %vm15, %v14, 0.0
    %17 = vadd.xlane.f32.xlu0 %v16
    %v18 = vpop.xlane.xlu0 %17
    %v19 = vrcp.pop 32.0
    %v20 = vmul.f32 32.0, %v19
    %v21 = vsub.f32 1.0, %v20
    %v22 = vmul.f32 %v19, %v21
    %v23 = vadd.f32 %v19, %v22
    %vm24 = vweird.f32 %v19
    %v25 = vsel %vm24, %v19, %v23
    %v26 = vmul.f32 %v18, %v25
    %v27 = vadd.f32 %v26, 1.1920929e-07
    %v28 = vrsqrt.pop %v27
    %v29 = vmul.f32 %v28, %v27
    %v30 = vmul.f32 %v29, %v28
    %v31 = vmul.f32 0.5, %v30
    %v32 = vsub.f32 1.5, %v31
    %v33 = vmul.f32 %v28, %v32
    %vm34 = vweird.f32 %v27
    %vm35 = vweird.f32 %v28
    %vm36 = vmor %vm34, %vm35
    %v37 = vsel %vm36, %v28, %v33
    %v38 = vmul.f32 %v13, %v37
    %v39 = vpack.c.bf16 %v38, %v38
    %v40 = vld [vmem:[%s1] sm:$0xf]
    %v41 = vld [vmem:[%s1 + $0x4] sm:$0xf]
    %v42 = vld [vmem:[%s1 + $0x8] sm:$0xf]
    %v43 = vld [vmem:[%s1 + $0xc] sm:$0xf]
    %v48 = vunpack.c.l.b16 %v40
    %v49 = vunpack.c.l.b16 %v41
    %v50 = vunpack.c.l.b16 %v42
    %v51 = vunpack.c.l.b16 %v43
    %v52 = vpack.c.b16 %v49, %v48
    %v53 = vpack.c.b16 %v51, %v50
    %vm56 = vcmask 261120
    %v58 = vsel %vm56, %v39, 0
    %60 = vmatpush.bf16.msra.mxu0 0
    %61 = vmatpush.bf16.msra.mxu0 0
    %62 = vmatpush.bf16.msra.mxu0 0
    %63 = vmatpush.bf16.msra.mxu0 0
    %64 = vmatpush.bf16.msra.mxu0 0
    %65 = vmatpush.bf16.msra.mxu0 0
    %66 = vmatpush.bf16.msra.mxu0 %v53
    %67 = vmatpush.bf16.msra.mxu0 %v52
    %68 = vmatmul.bf16.gmra.mxu0 %v58
    %v69 = vpop.f32.mrf.mxu0
    %v70 = vadd.f32 0.0, %v69
    %v71 = vpop.f32.mrf.mxu0
    %72 = vdwg.mxu0
    %73 = vst [vmem:[#allocation2] sm:$0x3] %v70
    // Predicated region
    $region10: #{dragon_forward.19} parent=1 // pred_check
      _
    $region11: #{dragon_forward.19} parent=1 // pred_check_branch
      %75 = sbr.rel (0) target = $region13
    $region12: #{dragon_forward.19} parent=1 // pred_region
      %77 = vsyncadd [#allocation3], 0
      %s79 = sshll.u32 [#allocation2], 4
      %s80 = int_to_ptr.vmem [resolvable:$true] %s79
      %s81 = sshll.u32 %s2, 4
      %s82 = int_to_ptr.hbm [resolvable:$true] %s81
      %84 = dma.vmem_to_hbm [thread:$0]  %s80, 32, %s82, [#allocation3]
    $region13: #{dragon_forward.19} parent=1 // pred_fallthru
      _
    // Predicated region
    $region14: #{dragon_forward.19} parent=1 // pred_check
      _
    $region15: #{dragon_forward.19} parent=1 // pred_check_branch
      %86 = sbr.rel (0) target = $region17
    $region16: #{dragon_forward.19} parent=1 // pred_region
      %88 = dma.done [#allocation3], 32
    $region17: #{dragon_forward.19} parent=1 // pred_fallthru
      _
    %89 = vsyncpa [#allocation3], 1

</llo_original>
